<compile_context>
chip_gen: v6e
topology: v6e:2x2x1
jax: 0.10.0
libtpu: 0.0.40
codegen_flags: <defaults>
</compile_context>

<pallas_src>
import jax
import jax.numpy as jnp
from jax.experimental import pallas as pl
from jax.experimental.pallas import tpu as pltpu

NUM_BLOCKS = 5                         # block_0 .. block_4
VMEM_LIMIT_BYTES = 32 * 1024 * 1024    # explicit scoped-VMEM limit (safe on all gens)
VMEM_BUDGET_BYTES = 24 * 1024 * 1024   # budget used when auto-choosing block_batch


def resnet_pointnet_kernel(net0_ref, fc0_w_ref, fc0_b_ref, fc1_w_ref, fc1_b_ref,
                           sc_w_ref, out_ref):
    Bb, T, h2 = net0_ref.shape
    h = h2 // 2
    N = Bb * T
    cdt = fc0_w_ref.dtype              # bf16 MXU operands, f32 accumulation

    # ---- block_0: ResnetBlockFC(2h -> h) on the dense (bf16) fc_pos output ----
    net0 = net0_ref[...].reshape(N, h2)                         # (N, 2h) bf16
    ax0 = jnp.maximum(net0, 0)                                  # ReLU in bf16
    h0 = jnp.dot(ax0, fc0_w_ref[0],
                 preferred_element_type=jnp.float32) + fc0_b_ref[0]
    dx = jnp.dot(jnp.maximum(h0, 0.0).astype(cdt), fc1_w_ref[0],
                 preferred_element_type=jnp.float32) + fc1_b_ref[0]
    xs = jnp.dot(net0, sc_w_ref[0],
                 preferred_element_type=jnp.float32)            # shortcut: no bias
    net = xs + dx                                               # (N, h) f32

    # ---- blocks 1..4: concat([x, pooled]) @ W == x @ W[:h] + pooled @ W[h:] ----
    for i in range(1, NUM_BLOCKS):
        net_b = net.astype(cdt)                                 # single cast per block
        ax_t = jnp.maximum(net_b, 0)                            # ReLU in bf16 (exact)
        pooled_b = jnp.max(net_b.reshape(Bb, T, h), axis=1)     # per-cloud max, (Bb, h)
        ax_p = jnp.maximum(pooled_b, 0)

        # fc_0: per-point half + per-cloud pooled half (bias folded into small term).
        # Weight halves are Ref slices -> zero-cost (h, h) views.
        h0_p = jnp.dot(ax_p, fc0_w_ref[i, h:, :],
                       preferred_element_type=jnp.float32) + fc0_b_ref[i]   # (Bb, h)
        h0 = jnp.dot(ax_t, fc0_w_ref[i, :h, :],
                     preferred_element_type=jnp.float32)                    # (N, h)
        h0 = (h0.reshape(Bb, T, h) + h0_p[:, None, :]).reshape(N, h)

        dx = jnp.dot(jnp.maximum(h0, 0.0).astype(cdt), fc1_w_ref[i],
                     preferred_element_type=jnp.float32) + fc1_b_ref[i]     # (N, h)

        # shortcut (no bias): per-point half + pooled half
        xs_p = jnp.dot(pooled_b, sc_w_ref[i, h:, :],
                       preferred_element_type=jnp.float32)                  # (Bb, h)
        xs_t = jnp.dot(net_b, sc_w_ref[i, :h, :],
                       preferred_element_type=jnp.float32)                  # (N, h)

        net = ((xs_t + dx).reshape(Bb, T, h) + xs_p[:, None, :]).reshape(N, h)

    out_ref[...] = net.reshape(Bb, T, h).astype(out_ref.dtype)


def _estimate_vmem_bytes(Bb, T, h, out_itemsize):
    """Rough per-step VMEM footprint (double-buffered IO + weights + live temps)."""
    N, h2 = Bb * T, 2 * h
    w_bytes = NUM_BLOCKS * (h2 * h + h * h + h2 * h) * 2        # bf16 weights
    b_bytes = NUM_BLOCKS * 2 * h * 4                            # f32 biases
    weights = 2 * (w_bytes + b_bytes)                           # double-buffered
    io = 2 * (N * h2 * 2) + 2 * (N * h * out_itemsize)          # net0 in + out blocks
    live = N * h2 * 2 + 6 * N * h * 4                           # bf16 input + ~6 f32 (N,h) temps
    return weights + io + live


def _tensorcores_per_chip():
    try:
        kind = jax.devices()[0].device_kind.lower()
    except Exception:
        return 1
    single_tc = any(s in kind for s in
                    ("v5e", "v5 lite", "v5lite", "v6e", "v6 lite", "v6lite"))
    return 1 if single_tc else 2


def _choose_block_batch(B, T, h, out_itemsize, budget_bytes):
    num_tc = _tensorcores_per_chip()
    # single-TC: one big step is best (overhead-bound; weights revisited anyway);
    # 2-TC: >= 4 steps so both cores get >= 2 pipelined steps each.
    min_steps = 4 if num_tc > 1 else 1
    min_steps = min(min_steps, B)
    best = 1
    for Bb in range(1, B + 1):
        if B % Bb:
            continue
        if B // Bb < min_steps:
            continue
        if _estimate_vmem_bytes(Bb, T, h, out_itemsize) <= budget_bytes:
            best = max(best, Bb)
    return best


def resnet_pointnet_forward(p, params, *, block_batch=None, out_dtype=jnp.float32):
    B, T, D = p.shape
    h2 = params["wpos"].shape[-1]
    h = h2 // 2
    assert T % 8 == 0, "T must be a multiple of 8 (sublane tiling / layout-free reshapes)"
    assert h % 128 == 0, "hidden_dim must be a multiple of 128 (lane-dense activations)"

    cdt = params["fc0_w"].dtype
    # fc_pos hoisted out of the kernel: the (·,·,3) operand would lane-pad 3->128
    # inside Pallas; here it's a tiny XLA matmul and the kernel gets a dense slab.
    net0 = (jnp.einsum("btd,dh->bth", p, params["wpos"],
                       precision=jax.lax.Precision.HIGHEST)
            + params["bpos"][None]).astype(cdt)                 # (B, T, 2h) bf16

    out_itemsize = jnp.dtype(out_dtype).itemsize
    if block_batch is None:
        block_batch = _choose_block_batch(B, T, h, out_itemsize, VMEM_BUDGET_BYTES)
    Bb = block_batch
    assert B % Bb == 0, "batch must be divisible by block_batch"

    return pl.pallas_call(
        resnet_pointnet_kernel,
        out_shape=jax.ShapeDtypeStruct((B, T, h), out_dtype),
        grid_spec=pltpu.PrefetchScalarGridSpec(
            num_scalar_prefetch=0,
            grid=(B // Bb,),
            in_specs=[
                pl.BlockSpec((Bb, T, h2), lambda b: (b, 0, 0)),             # net0
                pl.BlockSpec((NUM_BLOCKS, h2, h), lambda b: (0, 0, 0)),     # fc_0 W (stacked)
                pl.BlockSpec((NUM_BLOCKS, 1, h), lambda b: (0, 0, 0)),      # fc_0 b
                pl.BlockSpec((NUM_BLOCKS, h, h), lambda b: (0, 0, 0)),      # fc_1 W
                pl.BlockSpec((NUM_BLOCKS, 1, h), lambda b: (0, 0, 0)),      # fc_1 b
                pl.BlockSpec((NUM_BLOCKS, h2, h), lambda b: (0, 0, 0)),     # shortcut W
            ],
            out_specs=pl.BlockSpec((Bb, T, h), lambda b: (b, 0, 0)),
        ),
        compiler_params=pltpu.CompilerParams(
            dimension_semantics=("parallel",),
            vmem_limit_bytes=VMEM_LIMIT_BYTES,
        ),
    )(net0, params["fc0_w"], params["fc0_b"],
      params["fc1_w"], params["fc1_b"], params["sc_w"])


def init_params(key, dim, hidden_dim, wdtype=jnp.bfloat16):
    """Deterministic synthetic init (PyTorch-style uniform ±1/sqrt(fan_in)).
    Matmul weights in bf16 (MXU-native); biases / fc_pos stay f32."""
    h, h2 = hidden_dim, 2 * hidden_dim
    ks = jax.random.split(key, 7)

    def u(k, shape, fan_in):
        bound = 1.0 / jnp.sqrt(jnp.float32(fan_in))
        return jax.random.uniform(k, shape, jnp.float32, -bound, bound)

    return {
        "wpos":  u(ks[0], (dim, h2), dim),
        "bpos":  u(ks[1], (1, h2), dim),
        "fc0_w": u(ks[2], (NUM_BLOCKS, h2, h), h2).astype(wdtype),
        "fc0_b": u(ks[3], (NUM_BLOCKS, 1, h), h2),
        "fc1_w": u(ks[4], (NUM_BLOCKS, h, h), h).astype(wdtype),
        "fc1_b": u(ks[5], (NUM_BLOCKS, 1, h), h),
        "sc_w":  u(ks[6], (NUM_BLOCKS, h2, h), h2).astype(wdtype),
    }


def reference_forward(p, params):
    """Pure-JAX reference mirroring the PyTorch semantics with the same bf16
    matmul operands / f32 accumulation as the kernel (differences are only
    accumulation-order reassociation)."""
    cdt = params["fc0_w"].dtype
    net = jnp.einsum("btd,dh->bth", p, params["wpos"],
                     precision=jax.lax.Precision.HIGHEST) + params["bpos"][None]
    net = net.astype(cdt).astype(jnp.float32)   # match the bf16 net0 fed to the kernel
    for i in range(NUM_BLOCKS):
        ax = jax.nn.relu(net).astype(cdt)
        h0 = jnp.einsum("bti,ih->bth", ax, params["fc0_w"][i],
                        preferred_element_type=jnp.float32) + params["fc0_b"][i][None]
        dx = jnp.einsum("bti,ih->bth", jax.nn.relu(h0).astype(cdt), params["fc1_w"][i],
                        preferred_element_type=jnp.float32) + params["fc1_b"][i][None]
        xs = jnp.einsum("bti,ih->bth", net.astype(cdt), params["sc_w"][i],
                        preferred_element_type=jnp.float32)
        net = xs + dx
        if i < NUM_BLOCKS - 1:
            pooled = jnp.max(net, axis=1, keepdims=True)
            net = jnp.concatenate([net, jnp.broadcast_to(pooled, net.shape)], axis=2)
    return net


if __name__ == "__main__":
    B, T, D = 8, 128, 3        # batch, points per cloud, point dim
    HIDDEN = 128               # module default hidden_dim -> lane-dense activations

    key = jax.random.PRNGKey(0)
    k_p, k_w = jax.random.split(key)
    p = jax.random.normal(k_p, (B, T, D), jnp.float32)
    params = init_params(k_w, D, HIDDEN)

    out = jax.block_until_ready(resnet_pointnet_forward(p, params))
    ref = reference_forward(p, params)

    assert out.shape == (B, T, HIDDEN)
    assert jnp.allclose(out, ref, atol=2e-2, rtol=2e-2), "mismatch vs JAX reference"

    print("KERNEL_OK")
</pallas_src>

<mosaic_0001>
module attributes {stable_mosaic.version = 11 : i64} {
  func.func @resnet_pointnet_kernel(%arg0: i32, %arg1: memref<2x128x256xbf16, #tpu.memory_space<vmem>>, %arg2: memref<5x256x128xbf16, #tpu.memory_space<vmem>>, %arg3: memref<5x1x128xf32, #tpu.memory_space<vmem>>, %arg4: memref<5x128x128xbf16, #tpu.memory_space<vmem>>, %arg5: memref<5x1x128xf32, #tpu.memory_space<vmem>>, %arg6: memref<5x256x128xbf16, #tpu.memory_space<vmem>>, %arg7: memref<2x128x128xf32, #tpu.memory_space<vmem>>) attributes {dimension_semantics = [#tpu.dimension_semantics<parallel>], iteration_bounds = array<i64: 4>, scalar_prefetch = 0 : i64, scratch_operands = 0 : i64, tpu.core_type = #tpu.core_type<tc>, window_params = [{transform_indices = @transform_0, window_bounds = array<i64: 2, 128, 256>}, {pipeline_mode = #tpu.pipeline_mode<synchronous>, transform_indices = @transform_1, window_bounds = array<i64: 5, 256, 128>}, {pipeline_mode = #tpu.pipeline_mode<synchronous>, transform_indices = @transform_2, window_bounds = array<i64: 5, 1, 128>}, {pipeline_mode = #tpu.pipeline_mode<synchronous>, transform_indices = @transform_3, window_bounds = array<i64: 5, 128, 128>}, {pipeline_mode = #tpu.pipeline_mode<synchronous>, transform_indices = @transform_4, window_bounds = array<i64: 5, 1, 128>}, {pipeline_mode = #tpu.pipeline_mode<synchronous>, transform_indices = @transform_5, window_bounds = array<i64: 5, 256, 128>}, {transform_indices = @transform_6, window_bounds = array<i64: 2, 128, 128>}]} {
    %c0 = arith.constant 0 : index
    %c0_0 = arith.constant 0 : index
    %c0_1 = arith.constant 0 : index
    %0 = vector.load %arg1[%c0, %c0_0, %c0_1] : memref<2x128x256xbf16, #tpu.memory_space<vmem>>, vector<2x128x256xbf16>
    %1 = vector.shape_cast %0 : vector<2x128x256xbf16> to vector<256x256xbf16>
    %cst = arith.constant 0.000000e+00 : bf16
    %2 = vector.broadcast %cst : bf16 to vector<256x256xbf16>
    %3 = arith.maximumf %1, %2 : vector<256x256xbf16>
    %c0_2 = arith.constant 0 : index
    %c0_3 = arith.constant 0 : index
    %c0_4 = arith.constant 0 : index
    %4 = vector.load %arg2[%c0_2, %c0_3, %c0_4] : memref<5x256x128xbf16, #tpu.memory_space<vmem>>, vector<1x256x128xbf16>
    %5 = vector.shape_cast %4 : vector<1x256x128xbf16> to vector<256x128xbf16>
    %cst_5 = arith.constant dense<0.000000e+00> : vector<256x128xf32>
    %6 = tpu.matmul %3, %5, %cst_5 {dimension_numbers = #tpu.dot_dimension_numbers<[1], [0], [0], [1], [0, 0, 1, 1], [], []>} : vector<256x256xbf16>, vector<256x128xbf16>, vector<256x128xf32> -> vector<256x128xf32>
    %c0_6 = arith.constant 0 : index
    %c0_7 = arith.constant 0 : index
    %c0_8 = arith.constant 0 : index
    %7 = vector.load %arg3[%c0_6, %c0_7, %c0_8] : memref<5x1x128xf32, #tpu.memory_space<vmem>>, vector<1x1x128xf32>
    %8 = vector.shape_cast %7 : vector<1x1x128xf32> to vector<1x128xf32>
    %9 = vector.broadcast %8 : vector<1x128xf32> to vector<256x128xf32>
    %10 = arith.addf %6, %9 : vector<256x128xf32>
    %cst_9 = arith.constant 0.000000e+00 : f32
    %11 = vector.broadcast %cst_9 : f32 to vector<256x128xf32>
    %12 = arith.maximumf %10, %11 : vector<256x128xf32>
    %13 = arith.truncf %12 : vector<256x128xf32> to vector<256x128xbf16>
    %c0_10 = arith.constant 0 : index
    %c0_11 = arith.constant 0 : index
    %c0_12 = arith.constant 0 : index
    %14 = vector.load %arg4[%c0_10, %c0_11, %c0_12] : memref<5x128x128xbf16, #tpu.memory_space<vmem>>, vector<1x128x128xbf16>
    %15 = vector.shape_cast %14 : vector<1x128x128xbf16> to vector<128x128xbf16>
    %cst_13 = arith.constant dense<0.000000e+00> : vector<256x128xf32>
    %16 = tpu.matmul %13, %15, %cst_13 {dimension_numbers = #tpu.dot_dimension_numbers<[1], [0], [0], [1], [0, 0, 1, 1], [], []>} : vector<256x128xbf16>, vector<128x128xbf16>, vector<256x128xf32> -> vector<256x128xf32>
    %c0_14 = arith.constant 0 : index
    %c0_15 = arith.constant 0 : index
    %c0_16 = arith.constant 0 : index
    %17 = vector.load %arg5[%c0_14, %c0_15, %c0_16] : memref<5x1x128xf32, #tpu.memory_space<vmem>>, vector<1x1x128xf32>
    %18 = vector.shape_cast %17 : vector<1x1x128xf32> to vector<1x128xf32>
    %19 = vector.broadcast %18 : vector<1x128xf32> to vector<256x128xf32>
    %20 = arith.addf %16, %19 : vector<256x128xf32>
    %c0_17 = arith.constant 0 : index
    %c0_18 = arith.constant 0 : index
    %c0_19 = arith.constant 0 : index
    %21 = vector.load %arg6[%c0_17, %c0_18, %c0_19] : memref<5x256x128xbf16, #tpu.memory_space<vmem>>, vector<1x256x128xbf16>
    %22 = vector.shape_cast %21 : vector<1x256x128xbf16> to vector<256x128xbf16>
    %cst_20 = arith.constant dense<0.000000e+00> : vector<256x128xf32>
    %23 = tpu.matmul %1, %22, %cst_20 {dimension_numbers = #tpu.dot_dimension_numbers<[1], [0], [0], [1], [0, 0, 1, 1], [], []>} : vector<256x256xbf16>, vector<256x128xbf16>, vector<256x128xf32> -> vector<256x128xf32>
    %24 = arith.addf %23, %20 : vector<256x128xf32>
    %25 = arith.truncf %24 : vector<256x128xf32> to vector<256x128xbf16>
    %cst_21 = arith.constant 0.000000e+00 : bf16
    %26 = vector.broadcast %cst_21 : bf16 to vector<256x128xbf16>
    %27 = arith.maximumf %25, %26 : vector<256x128xbf16>
    %28 = vector.shape_cast %25 : vector<256x128xbf16> to vector<2x128x128xbf16>
    %cst_22 = arith.constant dense<0xFF80> : vector<2x128xbf16>
    %29 = vector.multi_reduction <maximumf>, %28, %cst_22 [1] : vector<2x128x128xbf16> to vector<2x128xbf16>
    %cst_23 = arith.constant 0.000000e+00 : bf16
    %30 = vector.broadcast %cst_23 : bf16 to vector<2x128xbf16>
    %31 = arith.maximumf %29, %30 : vector<2x128xbf16>
    %c1 = arith.constant 1 : index
    %c128 = arith.constant 128 : index
    %c0_24 = arith.constant 0 : index
    %32 = vector.load %arg2[%c1, %c128, %c0_24] : memref<5x256x128xbf16, #tpu.memory_space<vmem>>, vector<1x128x128xbf16>
    %33 = vector.shape_cast %32 : vector<1x128x128xbf16> to vector<128x128xbf16>
    %cst_25 = arith.constant dense<0.000000e+00> : vector<2x128xf32>
    %34 = tpu.matmul %31, %33, %cst_25 {dimension_numbers = #tpu.dot_dimension_numbers<[1], [0], [0], [1], [0, 0, 1, 1], [], []>} : vector<2x128xbf16>, vector<128x128xbf16>, vector<2x128xf32> -> vector<2x128xf32>
    %c1_26 = arith.constant 1 : index
    %c0_27 = arith.constant 0 : index
    %c0_28 = arith.constant 0 : index
    %35 = vector.load %arg3[%c1_26, %c0_27, %c0_28] : memref<5x1x128xf32, #tpu.memory_space<vmem>>, vector<1x1x128xf32>
    %36 = vector.shape_cast %35 : vector<1x1x128xf32> to vector<1x128xf32>
    %37 = vector.broadcast %36 : vector<1x128xf32> to vector<2x128xf32>
    %38 = arith.addf %34, %37 : vector<2x128xf32>
    %c1_29 = arith.constant 1 : index
    %c0_30 = arith.constant 0 : index
    %c0_31 = arith.constant 0 : index
    %39 = vector.load %arg2[%c1_29, %c0_30, %c0_31] : memref<5x256x128xbf16, #tpu.memory_space<vmem>>, vector<1x128x128xbf16>
    %40 = vector.shape_cast %39 : vector<1x128x128xbf16> to vector<128x128xbf16>
    %cst_32 = arith.constant dense<0.000000e+00> : vector<256x128xf32>
    %41 = tpu.matmul %27, %40, %cst_32 {dimension_numbers = #tpu.dot_dimension_numbers<[1], [0], [0], [1], [0, 0, 1, 1], [], []>} : vector<256x128xbf16>, vector<128x128xbf16>, vector<256x128xf32> -> vector<256x128xf32>
    %42 = vector.shape_cast %41 : vector<256x128xf32> to vector<2x128x128xf32>
    %43 = vector.shape_cast %38 : vector<2x128xf32> to vector<2x1x128xf32>
    %44 = vector.broadcast %43 : vector<2x1x128xf32> to vector<2x128x128xf32>
    %45 = arith.addf %42, %44 : vector<2x128x128xf32>
    %46 = vector.shape_cast %45 : vector<2x128x128xf32> to vector<256x128xf32>
    %cst_33 = arith.constant 0.000000e+00 : f32
    %47 = vector.broadcast %cst_33 : f32 to vector<256x128xf32>
    %48 = arith.maximumf %46, %47 : vector<256x128xf32>
    %49 = arith.truncf %48 : vector<256x128xf32> to vector<256x128xbf16>
    %c1_34 = arith.constant 1 : index
    %c0_35 = arith.constant 0 : index
    %c0_36 = arith.constant 0 : index
    %50 = vector.load %arg4[%c1_34, %c0_35, %c0_36] : memref<5x128x128xbf16, #tpu.memory_space<vmem>>, vector<1x128x128xbf16>
    %51 = vector.shape_cast %50 : vector<1x128x128xbf16> to vector<128x128xbf16>
    %cst_37 = arith.constant dense<0.000000e+00> : vector<256x128xf32>
    %52 = tpu.matmul %49, %51, %cst_37 {dimension_numbers = #tpu.dot_dimension_numbers<[1], [0], [0], [1], [0, 0, 1, 1], [], []>} : vector<256x128xbf16>, vector<128x128xbf16>, vector<256x128xf32> -> vector<256x128xf32>
    %c1_38 = arith.constant 1 : index
    %c0_39 = arith.constant 0 : index
    %c0_40 = arith.constant 0 : index
    %53 = vector.load %arg5[%c1_38, %c0_39, %c0_40] : memref<5x1x128xf32, #tpu.memory_space<vmem>>, vector<1x1x128xf32>
    %54 = vector.shape_cast %53 : vector<1x1x128xf32> to vector<1x128xf32>
    %55 = vector.broadcast %54 : vector<1x128xf32> to vector<256x128xf32>
    %56 = arith.addf %52, %55 : vector<256x128xf32>
    %c1_41 = arith.constant 1 : index
    %c128_42 = arith.constant 128 : index
    %c0_43 = arith.constant 0 : index
    %57 = vector.load %arg6[%c1_41, %c128_42, %c0_43] : memref<5x256x128xbf16, #tpu.memory_space<vmem>>, vector<1x128x128xbf16>
    %58 = vector.shape_cast %57 : vector<1x128x128xbf16> to vector<128x128xbf16>
    %cst_44 = arith.constant dense<0.000000e+00> : vector<2x128xf32>
    %59 = tpu.matmul %29, %58, %cst_44 {dimension_numbers = #tpu.dot_dimension_numbers<[1], [0], [0], [1], [0, 0, 1, 1], [], []>} : vector<2x128xbf16>, vector<128x128xbf16>, vector<2x128xf32> -> vector<2x128xf32>
    %c1_45 = arith.constant 1 : index
    %c0_46 = arith.constant 0 : index
    %c0_47 = arith.constant 0 : index
    %60 = vector.load %arg6[%c1_45, %c0_46, %c0_47] : memref<5x256x128xbf16, #tpu.memory_space<vmem>>, vector<1x128x128xbf16>
    %61 = vector.shape_cast %60 : vector<1x128x128xbf16> to vector<128x128xbf16>
    %cst_48 = arith.constant dense<0.000000e+00> : vector<256x128xf32>
    %62 = tpu.matmul %25, %61, %cst_48 {dimension_numbers = #tpu.dot_dimension_numbers<[1], [0], [0], [1], [0, 0, 1, 1], [], []>} : vector<256x128xbf16>, vector<128x128xbf16>, vector<256x128xf32> -> vector<256x128xf32>
    %63 = arith.addf %62, %56 : vector<256x128xf32>
    %64 = vector.shape_cast %63 : vector<256x128xf32> to vector<2x128x128xf32>
    %65 = vector.shape_cast %59 : vector<2x128xf32> to vector<2x1x128xf32>
    %66 = vector.broadcast %65 : vector<2x1x128xf32> to vector<2x128x128xf32>
    %67 = arith.addf %64, %66 : vector<2x128x128xf32>
    %68 = vector.shape_cast %67 : vector<2x128x128xf32> to vector<256x128xf32>
    %69 = arith.truncf %68 : vector<256x128xf32> to vector<256x128xbf16>
    %cst_49 = arith.constant 0.000000e+00 : bf16
    %70 = vector.broadcast %cst_49 : bf16 to vector<256x128xbf16>
    %71 = arith.maximumf %69, %70 : vector<256x128xbf16>
    %72 = vector.shape_cast %69 : vector<256x128xbf16> to vector<2x128x128xbf16>
    %cst_50 = arith.constant dense<0xFF80> : vector<2x128xbf16>
    %73 = vector.multi_reduction <maximumf>, %72, %cst_50 [1] : vector<2x128x128xbf16> to vector<2x128xbf16>
    %cst_51 = arith.constant 0.000000e+00 : bf16
    %74 = vector.broadcast %cst_51 : bf16 to vector<2x128xbf16>
    %75 = arith.maximumf %73, %74 : vector<2x128xbf16>
    %c2 = arith.constant 2 : index
    %c128_52 = arith.constant 128 : index
    %c0_53 = arith.constant 0 : index
    %76 = vector.load %arg2[%c2, %c128_52, %c0_53] : memref<5x256x128xbf16, #tpu.memory_space<vmem>>, vector<1x128x128xbf16>
    %77 = vector.shape_cast %76 : vector<1x128x128xbf16> to vector<128x128xbf16>
    %cst_54 = arith.constant dense<0.000000e+00> : vector<2x128xf32>
    %78 = tpu.matmul %75, %77, %cst_54 {dimension_numbers = #tpu.dot_dimension_numbers<[1], [0], [0], [1], [0, 0, 1, 1], [], []>} : vector<2x128xbf16>, vector<128x128xbf16>, vector<2x128xf32> -> vector<2x128xf32>
    %c2_55 = arith.constant 2 : index
    %c0_56 = arith.constant 0 : index
    %c0_57 = arith.constant 0 : index
    %79 = vector.load %arg3[%c2_55, %c0_56, %c0_57] : memref<5x1x128xf32, #tpu.memory_space<vmem>>, vector<1x1x128xf32>
    %80 = vector.shape_cast %79 : vector<1x1x128xf32> to vector<1x128xf32>
    %81 = vector.broadcast %80 : vector<1x128xf32> to vector<2x128xf32>
    %82 = arith.addf %78, %81 : vector<2x128xf32>
    %c2_58 = arith.constant 2 : index
    %c0_59 = arith.constant 0 : index
    %c0_60 = arith.constant 0 : index
    %83 = vector.load %arg2[%c2_58, %c0_59, %c0_60] : memref<5x256x128xbf16, #tpu.memory_space<vmem>>, vector<1x128x128xbf16>
    %84 = vector.shape_cast %83 : vector<1x128x128xbf16> to vector<128x128xbf16>
    %cst_61 = arith.constant dense<0.000000e+00> : vector<256x128xf32>
    %85 = tpu.matmul %71, %84, %cst_61 {dimension_numbers = #tpu.dot_dimension_numbers<[1], [0], [0], [1], [0, 0, 1, 1], [], []>} : vector<256x128xbf16>, vector<128x128xbf16>, vector<256x128xf32> -> vector<256x128xf32>
    %86 = vector.shape_cast %85 : vector<256x128xf32> to vector<2x128x128xf32>
    %87 = vector.shape_cast %82 : vector<2x128xf32> to vector<2x1x128xf32>
    %88 = vector.broadcast %87 : vector<2x1x128xf32> to vector<2x128x128xf32>
    %89 = arith.addf %86, %88 : vector<2x128x128xf32>
    %90 = vector.shape_cast %89 : vector<2x128x128xf32> to vector<256x128xf32>
    %cst_62 = arith.constant 0.000000e+00 : f32
    %91 = vector.broadcast %cst_62 : f32 to vector<256x128xf32>
    %92 = arith.maximumf %90, %91 : vector<256x128xf32>
    %93 = arith.truncf %92 : vector<256x128xf32> to vector<256x128xbf16>
    %c2_63 = arith.constant 2 : index
    %c0_64 = arith.constant 0 : index
    %c0_65 = arith.constant 0 : index
    %94 = vector.load %arg4[%c2_63, %c0_64, %c0_65] : memref<5x128x128xbf16, #tpu.memory_space<vmem>>, vector<1x128x128xbf16>
    %95 = vector.shape_cast %94 : vector<1x128x128xbf16> to vector<128x128xbf16>
    %cst_66 = arith.constant dense<0.000000e+00> : vector<256x128xf32>
    %96 = tpu.matmul %93, %95, %cst_66 {dimension_numbers = #tpu.dot_dimension_numbers<[1], [0], [0], [1], [0, 0, 1, 1], [], []>} : vector<256x128xbf16>, vector<128x128xbf16>, vector<256x128xf32> -> vector<256x128xf32>
    %c2_67 = arith.constant 2 : index
    %c0_68 = arith.constant 0 : index
    %c0_69 = arith.constant 0 : index
    %97 = vector.load %arg5[%c2_67, %c0_68, %c0_69] : memref<5x1x128xf32, #tpu.memory_space<vmem>>, vector<1x1x128xf32>
    %98 = vector.shape_cast %97 : vector<1x1x128xf32> to vector<1x128xf32>
    %99 = vector.broadcast %98 : vector<1x128xf32> to vector<256x128xf32>
    %100 = arith.addf %96, %99 : vector<256x128xf32>
    %c2_70 = arith.constant 2 : index
    %c128_71 = arith.constant 128 : index
    %c0_72 = arith.constant 0 : index
    %101 = vector.load %arg6[%c2_70, %c128_71, %c0_72] : memref<5x256x128xbf16, #tpu.memory_space<vmem>>, vector<1x128x128xbf16>
    %102 = vector.shape_cast %101 : vector<1x128x128xbf16> to vector<128x128xbf16>
    %cst_73 = arith.constant dense<0.000000e+00> : vector<2x128xf32>
    %103 = tpu.matmul %73, %102, %cst_73 {dimension_numbers = #tpu.dot_dimension_numbers<[1], [0], [0], [1], [0, 0, 1, 1], [], []>} : vector<2x128xbf16>, vector<128x128xbf16>, vector<2x128xf32> -> vector<2x128xf32>
    %c2_74 = arith.constant 2 : index
    %c0_75 = arith.constant 0 : index
    %c0_76 = arith.constant 0 : index
    %104 = vector.load %arg6[%c2_74, %c0_75, %c0_76] : memref<5x256x128xbf16, #tpu.memory_space<vmem>>, vector<1x128x128xbf16>
    %105 = vector.shape_cast %104 : vector<1x128x128xbf16> to vector<128x128xbf16>
    %cst_77 = arith.constant dense<0.000000e+00> : vector<256x128xf32>
    %106 = tpu.matmul %69, %105, %cst_77 {dimension_numbers = #tpu.dot_dimension_numbers<[1], [0], [0], [1], [0, 0, 1, 1], [], []>} : vector<256x128xbf16>, vector<128x128xbf16>, vector<256x128xf32> -> vector<256x128xf32>
    %107 = arith.addf %106, %100 : vector<256x128xf32>
    %108 = vector.shape_cast %107 : vector<256x128xf32> to vector<2x128x128xf32>
    %109 = vector.shape_cast %103 : vector<2x128xf32> to vector<2x1x128xf32>
    %110 = vector.broadcast %109 : vector<2x1x128xf32> to vector<2x128x128xf32>
    %111 = arith.addf %108, %110 : vector<2x128x128xf32>
    %112 = vector.shape_cast %111 : vector<2x128x128xf32> to vector<256x128xf32>
    %113 = arith.truncf %112 : vector<256x128xf32> to vector<256x128xbf16>
    %cst_78 = arith.constant 0.000000e+00 : bf16
    %114 = vector.broadcast %cst_78 : bf16 to vector<256x128xbf16>
    %115 = arith.maximumf %113, %114 : vector<256x128xbf16>
    %116 = vector.shape_cast %113 : vector<256x128xbf16> to vector<2x128x128xbf16>
    %cst_79 = arith.constant dense<0xFF80> : vector<2x128xbf16>
    %117 = vector.multi_reduction <maximumf>, %116, %cst_79 [1] : vector<2x128x128xbf16> to vector<2x128xbf16>
    %cst_80 = arith.constant 0.000000e+00 : bf16
    %118 = vector.broadcast %cst_80 : bf16 to vector<2x128xbf16>
    %119 = arith.maximumf %117, %118 : vector<2x128xbf16>
    %c3 = arith.constant 3 : index
    %c128_81 = arith.constant 128 : index
    %c0_82 = arith.constant 0 : index
    %120 = vector.load %arg2[%c3, %c128_81, %c0_82] : memref<5x256x128xbf16, #tpu.memory_space<vmem>>, vector<1x128x128xbf16>
    %121 = vector.shape_cast %120 : vector<1x128x128xbf16> to vector<128x128xbf16>
    %cst_83 = arith.constant dense<0.000000e+00> : vector<2x128xf32>
    %122 = tpu.matmul %119, %121, %cst_83 {dimension_numbers = #tpu.dot_dimension_numbers<[1], [0], [0], [1], [0, 0, 1, 1], [], []>} : vector<2x128xbf16>, vector<128x128xbf16>, vector<2x128xf32> -> vector<2x128xf32>
    %c3_84 = arith.constant 3 : index
    %c0_85 = arith.constant 0 : index
    %c0_86 = arith.constant 0 : index
    %123 = vector.load %arg3[%c3_84, %c0_85, %c0_86] : memref<5x1x128xf32, #tpu.memory_space<vmem>>, vector<1x1x128xf32>
    %124 = vector.shape_cast %123 : vector<1x1x128xf32> to vector<1x128xf32>
    %125 = vector.broadcast %124 : vector<1x128xf32> to vector<2x128xf32>
    %126 = arith.addf %122, %125 : vector<2x128xf32>
    %c3_87 = arith.constant 3 : index
    %c0_88 = arith.constant 0 : index
    %c0_89 = arith.constant 0 : index
    %127 = vector.load %arg2[%c3_87, %c0_88, %c0_89] : memref<5x256x128xbf16, #tpu.memory_space<vmem>>, vector<1x128x128xbf16>
    %128 = vector.shape_cast %127 : vector<1x128x128xbf16> to vector<128x128xbf16>
    %cst_90 = arith.constant dense<0.000000e+00> : vector<256x128xf32>
    %129 = tpu.matmul %115, %128, %cst_90 {dimension_numbers = #tpu.dot_dimension_numbers<[1], [0], [0], [1], [0, 0, 1, 1], [], []>} : vector<256x128xbf16>, vector<128x128xbf16>, vector<256x128xf32> -> vector<256x128xf32>
    %130 = vector.shape_cast %129 : vector<256x128xf32> to vector<2x128x128xf32>
    %131 = vector.shape_cast %126 : vector<2x128xf32> to vector<2x1x128xf32>
    %132 = vector.broadcast %131 : vector<2x1x128xf32> to vector<2x128x128xf32>
    %133 = arith.addf %130, %132 : vector<2x128x128xf32>
    %134 = vector.shape_cast %133 : vector<2x128x128xf32> to vector<256x128xf32>
    %cst_91 = arith.constant 0.000000e+00 : f32
    %135 = vector.broadcast %cst_91 : f32 to vector<256x128xf32>
    %136 = arith.maximumf %134, %135 : vector<256x128xf32>
    %137 = arith.truncf %136 : vector<256x128xf32> to vector<256x128xbf16>
    %c3_92 = arith.constant 3 : index
    %c0_93 = arith.constant 0 : index
    %c0_94 = arith.constant 0 : index
    %138 = vector.load %arg4[%c3_92, %c0_93, %c0_94] : memref<5x128x128xbf16, #tpu.memory_space<vmem>>, vector<1x128x128xbf16>
    %139 = vector.shape_cast %138 : vector<1x128x128xbf16> to vector<128x128xbf16>
    %cst_95 = arith.constant dense<0.000000e+00> : vector<256x128xf32>
    %140 = tpu.matmul %137, %139, %cst_95 {dimension_numbers = #tpu.dot_dimension_numbers<[1], [0], [0], [1], [0, 0, 1, 1], [], []>} : vector<256x128xbf16>, vector<128x128xbf16>, vector<256x128xf32> -> vector<256x128xf32>
    %c3_96 = arith.constant 3 : index
    %c0_97 = arith.constant 0 : index
    %c0_98 = arith.constant 0 : index
    %141 = vector.load %arg5[%c3_96, %c0_97, %c0_98] : memref<5x1x128xf32, #tpu.memory_space<vmem>>, vector<1x1x128xf32>
    %142 = vector.shape_cast %141 : vector<1x1x128xf32> to vector<1x128xf32>
    %143 = vector.broadcast %142 : vector<1x128xf32> to vector<256x128xf32>
    %144 = arith.addf %140, %143 : vector<256x128xf32>
    %c3_99 = arith.constant 3 : index
    %c128_100 = arith.constant 128 : index
    %c0_101 = arith.constant 0 : index
    %145 = vector.load %arg6[%c3_99, %c128_100, %c0_101] : memref<5x256x128xbf16, #tpu.memory_space<vmem>>, vector<1x128x128xbf16>
    %146 = vector.shape_cast %145 : vector<1x128x128xbf16> to vector<128x128xbf16>
    %cst_102 = arith.constant dense<0.000000e+00> : vector<2x128xf32>
    %147 = tpu.matmul %117, %146, %cst_102 {dimension_numbers = #tpu.dot_dimension_numbers<[1], [0], [0], [1], [0, 0, 1, 1], [], []>} : vector<2x128xbf16>, vector<128x128xbf16>, vector<2x128xf32> -> vector<2x128xf32>
    %c3_103 = arith.constant 3 : index
    %c0_104 = arith.constant 0 : index
    %c0_105 = arith.constant 0 : index
    %148 = vector.load %arg6[%c3_103, %c0_104, %c0_105] : memref<5x256x128xbf16, #tpu.memory_space<vmem>>, vector<1x128x128xbf16>
    %149 = vector.shape_cast %148 : vector<1x128x128xbf16> to vector<128x128xbf16>
    %cst_106 = arith.constant dense<0.000000e+00> : vector<256x128xf32>
    %150 = tpu.matmul %113, %149, %cst_106 {dimension_numbers = #tpu.dot_dimension_numbers<[1], [0], [0], [1], [0, 0, 1, 1], [], []>} : vector<256x128xbf16>, vector<128x128xbf16>, vector<256x128xf32> -> vector<256x128xf32>
    %151 = arith.addf %150, %144 : vector<256x128xf32>
    %152 = vector.shape_cast %151 : vector<256x128xf32> to vector<2x128x128xf32>
    %153 = vector.shape_cast %147 : vector<2x128xf32> to vector<2x1x128xf32>
    %154 = vector.broadcast %153 : vector<2x1x128xf32> to vector<2x128x128xf32>
    %155 = arith.addf %152, %154 : vector<2x128x128xf32>
    %156 = vector.shape_cast %155 : vector<2x128x128xf32> to vector<256x128xf32>
    %157 = arith.truncf %156 : vector<256x128xf32> to vector<256x128xbf16>
    %cst_107 = arith.constant 0.000000e+00 : bf16
    %158 = vector.broadcast %cst_107 : bf16 to vector<256x128xbf16>
    %159 = arith.maximumf %157, %158 : vector<256x128xbf16>
    %160 = vector.shape_cast %157 : vector<256x128xbf16> to vector<2x128x128xbf16>
    %cst_108 = arith.constant dense<0xFF80> : vector<2x128xbf16>
    %161 = vector.multi_reduction <maximumf>, %160, %cst_108 [1] : vector<2x128x128xbf16> to vector<2x128xbf16>
    %cst_109 = arith.constant 0.000000e+00 : bf16
    %162 = vector.broadcast %cst_109 : bf16 to vector<2x128xbf16>
    %163 = arith.maximumf %161, %162 : vector<2x128xbf16>
    %c4 = arith.constant 4 : index
    %c128_110 = arith.constant 128 : index
    %c0_111 = arith.constant 0 : index
    %164 = vector.load %arg2[%c4, %c128_110, %c0_111] : memref<5x256x128xbf16, #tpu.memory_space<vmem>>, vector<1x128x128xbf16>
    %165 = vector.shape_cast %164 : vector<1x128x128xbf16> to vector<128x128xbf16>
    %cst_112 = arith.constant dense<0.000000e+00> : vector<2x128xf32>
    %166 = tpu.matmul %163, %165, %cst_112 {dimension_numbers = #tpu.dot_dimension_numbers<[1], [0], [0], [1], [0, 0, 1, 1], [], []>} : vector<2x128xbf16>, vector<128x128xbf16>, vector<2x128xf32> -> vector<2x128xf32>
    %c4_113 = arith.constant 4 : index
    %c0_114 = arith.constant 0 : index
    %c0_115 = arith.constant 0 : index
    %167 = vector.load %arg3[%c4_113, %c0_114, %c0_115] : memref<5x1x128xf32, #tpu.memory_space<vmem>>, vector<1x1x128xf32>
    %168 = vector.shape_cast %167 : vector<1x1x128xf32> to vector<1x128xf32>
    %169 = vector.broadcast %168 : vector<1x128xf32> to vector<2x128xf32>
    %170 = arith.addf %166, %169 : vector<2x128xf32>
    %c4_116 = arith.constant 4 : index
    %c0_117 = arith.constant 0 : index
    %c0_118 = arith.constant 0 : index
    %171 = vector.load %arg2[%c4_116, %c0_117, %c0_118] : memref<5x256x128xbf16, #tpu.memory_space<vmem>>, vector<1x128x128xbf16>
    %172 = vector.shape_cast %171 : vector<1x128x128xbf16> to vector<128x128xbf16>
    %cst_119 = arith.constant dense<0.000000e+00> : vector<256x128xf32>
    %173 = tpu.matmul %159, %172, %cst_119 {dimension_numbers = #tpu.dot_dimension_numbers<[1], [0], [0], [1], [0, 0, 1, 1], [], []>} : vector<256x128xbf16>, vector<128x128xbf16>, vector<256x128xf32> -> vector<256x128xf32>
    %174 = vector.shape_cast %173 : vector<256x128xf32> to vector<2x128x128xf32>
    %175 = vector.shape_cast %170 : vector<2x128xf32> to vector<2x1x128xf32>
    %176 = vector.broadcast %175 : vector<2x1x128xf32> to vector<2x128x128xf32>
    %177 = arith.addf %174, %176 : vector<2x128x128xf32>
    %178 = vector.shape_cast %177 : vector<2x128x128xf32> to vector<256x128xf32>
    %cst_120 = arith.constant 0.000000e+00 : f32
    %179 = vector.broadcast %cst_120 : f32 to vector<256x128xf32>
    %180 = arith.maximumf %178, %179 : vector<256x128xf32>
    %181 = arith.truncf %180 : vector<256x128xf32> to vector<256x128xbf16>
    %c4_121 = arith.constant 4 : index
    %c0_122 = arith.constant 0 : index
    %c0_123 = arith.constant 0 : index
    %182 = vector.load %arg4[%c4_121, %c0_122, %c0_123] : memref<5x128x128xbf16, #tpu.memory_space<vmem>>, vector<1x128x128xbf16>
    %183 = vector.shape_cast %182 : vector<1x128x128xbf16> to vector<128x128xbf16>
    %cst_124 = arith.constant dense<0.000000e+00> : vector<256x128xf32>
    %184 = tpu.matmul %181, %183, %cst_124 {dimension_numbers = #tpu.dot_dimension_numbers<[1], [0], [0], [1], [0, 0, 1, 1], [], []>} : vector<256x128xbf16>, vector<128x128xbf16>, vector<256x128xf32> -> vector<256x128xf32>
    %c4_125 = arith.constant 4 : index
    %c0_126 = arith.constant 0 : index
    %c0_127 = arith.constant 0 : index
    %185 = vector.load %arg5[%c4_125, %c0_126, %c0_127] : memref<5x1x128xf32, #tpu.memory_space<vmem>>, vector<1x1x128xf32>
    %186 = vector.shape_cast %185 : vector<1x1x128xf32> to vector<1x128xf32>
    %187 = vector.broadcast %186 : vector<1x128xf32> to vector<256x128xf32>
    %188 = arith.addf %184, %187 : vector<256x128xf32>
    %c4_128 = arith.constant 4 : index
    %c128_129 = arith.constant 128 : index
    %c0_130 = arith.constant 0 : index
    %189 = vector.load %arg6[%c4_128, %c128_129, %c0_130] : memref<5x256x128xbf16, #tpu.memory_space<vmem>>, vector<1x128x128xbf16>
    %190 = vector.shape_cast %189 : vector<1x128x128xbf16> to vector<128x128xbf16>
    %cst_131 = arith.constant dense<0.000000e+00> : vector<2x128xf32>
    %191 = tpu.matmul %161, %190, %cst_131 {dimension_numbers = #tpu.dot_dimension_numbers<[1], [0], [0], [1], [0, 0, 1, 1], [], []>} : vector<2x128xbf16>, vector<128x128xbf16>, vector<2x128xf32> -> vector<2x128xf32>
    %c4_132 = arith.constant 4 : index
    %c0_133 = arith.constant 0 : index
    %c0_134 = arith.constant 0 : index
    %192 = vector.load %arg6[%c4_132, %c0_133, %c0_134] : memref<5x256x128xbf16, #tpu.memory_space<vmem>>, vector<1x128x128xbf16>
    %193 = vector.shape_cast %192 : vector<1x128x128xbf16> to vector<128x128xbf16>
    %cst_135 = arith.constant dense<0.000000e+00> : vector<256x128xf32>
    %194 = tpu.matmul %157, %193, %cst_135 {dimension_numbers = #tpu.dot_dimension_numbers<[1], [0], [0], [1], [0, 0, 1, 1], [], []>} : vector<256x128xbf16>, vector<128x128xbf16>, vector<256x128xf32> -> vector<256x128xf32>
    %195 = arith.addf %194, %188 : vector<256x128xf32>
    %196 = vector.shape_cast %195 : vector<256x128xf32> to vector<2x128x128xf32>
    %197 = vector.shape_cast %191 : vector<2x128xf32> to vector<2x1x128xf32>
    %198 = vector.broadcast %197 : vector<2x1x128xf32> to vector<2x128x128xf32>
    %199 = arith.addf %196, %198 : vector<2x128x128xf32>
    %200 = vector.shape_cast %199 : vector<2x128x128xf32> to vector<256x128xf32>
    %201 = vector.shape_cast %200 : vector<256x128xf32> to vector<2x128x128xf32>
    %c0_136 = arith.constant 0 : index
    %c0_137 = arith.constant 0 : index
    %c0_138 = arith.constant 0 : index
    %202 = vector.load %arg7[%c0_136, %c0_137, %c0_138] : memref<2x128x128xf32, #tpu.memory_space<vmem>>, vector<2x128x128xf32>
    tpu.vector_store %arg7[%c0_136, %c0_137, %c0_138], %201 {strides = array<i32>} : memref<2x128x128xf32, #tpu.memory_space<vmem>>, vector<2x128x128xf32>,
    return
  }
  func.func @transform_0(%arg0: i32) -> (i32, i32, i32) {
    %c0_i32 = arith.constant 0 : i32
    %c0_i32_0 = arith.constant 0 : i32
    %c0_i32_1 = arith.constant 0 : i32
    return %arg0, %c0_i32, %c0_i32_0 : i32, i32, i32
  }
  func.func @transform_1(%arg0: i32) -> (i32, i32, i32) {
    %c0_i32 = arith.constant 0 : i32
    %c0_i32_0 = arith.constant 0 : i32
    %c0_i32_1 = arith.constant 0 : i32
    %c0_i32_2 = arith.constant 0 : i32
    return %c0_i32, %c0_i32_0, %c0_i32_1 : i32, i32, i32
  }
  func.func @transform_2(%arg0: i32) -> (i32, i32, i32) {
    %c0_i32 = arith.constant 0 : i32
    %c0_i32_0 = arith.constant 0 : i32
    %c0_i32_1 = arith.constant 0 : i32
    %c0_i32_2 = arith.constant 0 : i32
    return %c0_i32, %c0_i32_0, %c0_i32_1 : i32, i32, i32
  }
  func.func @transform_3(%arg0: i32) -> (i32, i32, i32) {
    %c0_i32 = arith.constant 0 : i32
    %c0_i32_0 = arith.constant 0 : i32
    %c0_i32_1 = arith.constant 0 : i32
    %c0_i32_2 = arith.constant 0 : i32
    return %c0_i32, %c0_i32_0, %c0_i32_1 : i32, i32, i32
  }
  func.func @transform_4(%arg0: i32) -> (i32, i32, i32) {
    %c0_i32 = arith.constant 0 : i32
    %c0_i32_0 = arith.constant 0 : i32
    %c0_i32_1 = arith.constant 0 : i32
    %c0_i32_2 = arith.constant 0 : i32
    return %c0_i32, %c0_i32_0, %c0_i32_1 : i32, i32, i32
  }
  func.func @transform_5(%arg0: i32) -> (i32, i32, i32) {
    %c0_i32 = arith.constant 0 : i32
    %c0_i32_0 = arith.constant 0 : i32
    %c0_i32_1 = arith.constant 0 : i32
    %c0_i32_2 = arith.constant 0 : i32
    return %c0_i32, %c0_i32_0, %c0_i32_1 : i32, i32, i32
  }
  func.func @transform_6(%arg0: i32) -> (i32, i32, i32) {
    %c0_i32 = arith.constant 0 : i32
    %c0_i32_0 = arith.constant 0 : i32
    %c0_i32_1 = arith.constant 0 : i32
    return %arg0, %c0_i32, %c0_i32_0 : i32, i32, i32
  }
}

</mosaic_0001>

<llo_original>
// kernel: tpu_custom_call.1
$region0: #{tpu_custom_call.1}
  #allocation0 [shape = 'u32[]', space=smem, size = 0x4, offset = 0x4, fixed_abs, tag = 'smem constant byte address 0x4 - core index']
  #allocation1 [shape = 'u32[144,128]{1,0:T(1,128)}', space=vmem, size = 0x12000, scoped, tag = 'internal scratch']
  %s0 = inlined_call_operand.hbm [shape: bf16[8,128,256], index: 0, kind: input, shape index: {}]
  %s1 = inlined_call_operand.hbm [shape: bf16[5,256,128], index: 1, kind: input, shape index: {}]
  %s2 = inlined_call_operand.hbm [shape: f32[5,1,128], index: 2, kind: input, shape index: {}]
  %s3 = inlined_call_operand.hbm [shape: bf16[5,128,128], index: 3, kind: input, shape index: {}]
  %s4 = inlined_call_operand.vmem [shape: f32[5,1,128], index: 4, kind: input, shape index: {}]
  %s5 = inlined_call_operand.hbm [shape: bf16[5,256,128], index: 5, kind: input, shape index: {}]
  %s6 = inlined_call_operand.hbm [shape: f32[8,128,128], index: 6, kind: output, shape index: {}]
  %s7 = sld [smem:[#allocation0]]
  $region77: #{tpu_custom_call.1} parent=0
    _
  %s9 = ssub.s32 1, %s7
  %s10 = scalar_select 0, %s9, %s7
  $region1: #{tpu_custom_call.1} parent=0
    #allocation2 [shape = 'u8[262144]{0}', space=vmem, size = 0x40000, scoped, tag = 'input window, operand 0']
    #allocation3 [shape = 's32[2]{0}', space=sflag, size = 0x8, scoped, tag = 'scoped memory for tpu_custom_call.1']
    #allocation4 [shape = 's32[2]{0}', space=sflag, size = 0x8, scoped, tag = 'scoped memory for tpu_custom_call.1']
    #allocation5 [shape = 'u8[327680]{0}', space=vmem, size = 0x50000, scoped, tag = 'input window, operand 1, single buffered']
    #allocation6 [shape = 's32[1]{0}', space=sflag, size = 0x4, scoped, tag = 'scoped memory for tpu_custom_call.1']
    #allocation7 [shape = 'u8[2560]{0}', space=vmem, size = 0xc00, scoped, tag = 'input window, operand 2, single buffered']
    #allocation8 [shape = 'u8[163840]{0}', space=vmem, size = 0x28000, scoped, tag = 'input window, operand 3, single buffered']
    #allocation9 [shape = 's32[1]{0}', space=sflag, size = 0x4, scoped, tag = 'scoped memory for tpu_custom_call.1']
    #allocation10 [shape = 'u8[327680]{0}', space=vmem, size = 0x50000, scoped, tag = 'input window, operand 5, single buffered']
    #allocation11 [shape = 'u8[262144]{0}', space=vmem, size = 0x40000, scoped, tag = 'output window, operand 0']
    %11 = vsyncpa [#allocation3], 0
    %s12 = scalar_lea.sflag [#allocation3], 1
    %13 = vsyncpa %s12, 0
    %14 = vsyncpa [#allocation6], 0
    %15 = vsyncpa [#allocation9], 0
    %16 = vsyncpa [#allocation4], 0
    %s17 = scalar_lea.sflag [#allocation4], 1
    %18 = vsyncpa %s17, 0
    loop: start=0, step=1, limit=6
    $region2: #{tpu_custom_call.1} parent=1 // loop_pre_header
      _
    $region3: #{tpu_custom_call.1} parent=1 // loop_header
      %s20 = sphi 0, %s24
      %p21 = scmp.ge.s32.totalorder %s20, 6
      %s30 = sphi 0, %s32
      %s33 = sphi 0, %s30
      %s34 = sphi 0, %s33
      %s50 = sphi 0, %s34
      %s54 = sphi 0, %s54
      %s56 = sphi 0, %s54
      %s57 = sphi 0, %s56
      %s71 = sphi 0, %s57
      %s75 = sphi 0, %s75
      %s77 = sphi 0, %s75
      %s78 = sphi 0, %s77
      %s92 = sphi 0, %s78
      %s96 = sphi 0, %s96
      %s98 = sphi 0, %s96
      %s99 = sphi 0, %s98
      %s113 = sphi 0, %s99
      %s117 = sphi 0, %s117
      %s119 = sphi 0, %s117
      %s120 = sphi 0, %s119
      %s134 = sphi 0, %s120
      %s138 = sphi 0, %s138
      %s140 = sphi 0, %s138
      %s141 = sphi 0, %s140
      %s155 = sphi 0, %s141
      %s161 = sphi 0, %s163
      %s164 = sphi 0, %s161
      %s165 = sphi 0, %s164
      %s181 = sphi 0, %s165
    $region4: #{tpu_custom_call.1} parent=1 // loop_header_branch
      %23 = sbr.rel (%p21) target = $region8
    $region5: #{tpu_custom_call.1} parent=1 // loop_body
      %s25 = ssub.s32 %s20, 1
      %s26 = ssub.s32 %s20, 2
      %s27 = sadd.s32 %s20, 1
      %s28 = ssub.s32 %s20, %s27
      %p29 = scmp.eq.s32.totalorder %s28, 0
      %s31 = sadd.s32 %s30, 1
      %s32 = scalar_select %p29, %s30, %s31
      %p35 = pneg %p29
      %p36 = scmp.eq.s32.totalorder %s20, 3
      %p37 = por %p35, %p36
      %p38 = scmp.ne.s32.totalorder %s30, %s33
      %p39 = scmp.eq.s32.totalorder %s20, 0
      %p40 = por %p38, %p39
      %p41 = scmp.ne.s32.totalorder %s30, %s33
      %p42 = scmp.eq.s32.totalorder %s25, 3
      %p43 = por %p41, %p42
      %p44 = scmp.ne.s32.totalorder %s33, %s34
      %p45 = scmp.eq.s32.totalorder %s25, 0
      %p46 = por %p44, %p45
      %p47 = scmp.ne.s32.totalorder %s33, %s34
      %p48 = scmp.eq.s32.totalorder %s26, 3
      %p49 = por %p47, %p48
      %p51 = scmp.ne.s32.totalorder %s34, %s50
      %p52 = scmp.eq.s32.totalorder %s26, 0
      %p53 = por %p51, %p52
      %s55 = sadd.s32 %s54, 1
      %p58 = scmp.eq.s32.totalorder %s20, 3
      %p59 = scmp.ne.s32.totalorder %s54, %s56
      %p60 = scmp.eq.s32.totalorder %s20, 0
      %p61 = por %p59, %p60
      %p62 = scmp.ne.s32.totalorder %s54, %s56
      %p63 = scmp.eq.s32.totalorder %s25, 3
      %p64 = por %p62, %p63
      %p65 = scmp.ne.s32.totalorder %s56, %s57
      %p66 = scmp.eq.s32.totalorder %s25, 0
      %p67 = por %p65, %p66
      %p68 = scmp.ne.s32.totalorder %s56, %s57
      %p69 = scmp.eq.s32.totalorder %s26, 3
      %p70 = por %p68, %p69
      %p72 = scmp.ne.s32.totalorder %s57, %s71
      %p73 = scmp.eq.s32.totalorder %s26, 0
      %p74 = por %p72, %p73
      %s76 = sadd.s32 %s75, 1
      %p79 = scmp.eq.s32.totalorder %s20, 3
      %p80 = scmp.ne.s32.totalorder %s75, %s77
      %p81 = scmp.eq.s32.totalorder %s20, 0
      %p82 = por %p80, %p81
      %p83 = scmp.ne.s32.totalorder %s75, %s77
      %p84 = scmp.eq.s32.totalorder %s25, 3
      %p85 = por %p83, %p84
      %p86 = scmp.ne.s32.totalorder %s77, %s78
      %p87 = scmp.eq.s32.totalorder %s25, 0
      %p88 = por %p86, %p87
      %p89 = scmp.ne.s32.totalorder %s77, %s78
      %p90 = scmp.eq.s32.totalorder %s26, 3
      %p91 = por %p89, %p90
      %p93 = scmp.ne.s32.totalorder %s78, %s92
      %p94 = scmp.eq.s32.totalorder %s26, 0
      %p95 = por %p93, %p94
      %s97 = sadd.s32 %s96, 1
      %p100 = scmp.eq.s32.totalorder %s20, 3
      %p101 = scmp.ne.s32.totalorder %s96, %s98
      %p102 = scmp.eq.s32.totalorder %s20, 0
      %p103 = por %p101, %p102
      %p104 = scmp.ne.s32.totalorder %s96, %s98
      %p105 = scmp.eq.s32.totalorder %s25, 3
      %p106 = por %p104, %p105
      %p107 = scmp.ne.s32.totalorder %s98, %s99
      %p108 = scmp.eq.s32.totalorder %s25, 0
      %p109 = por %p107, %p108
      %p110 = scmp.ne.s32.totalorder %s98, %s99
      %p111 = scmp.eq.s32.totalorder %s26, 3
      %p112 = por %p110, %p111
      %p114 = scmp.ne.s32.totalorder %s99, %s113
      %p115 = scmp.eq.s32.totalorder %s26, 0
      %p116 = por %p114, %p115
      %s118 = sadd.s32 %s117, 1
      %p121 = scmp.eq.s32.totalorder %s20, 3
      %p122 = scmp.ne.s32.totalorder %s117, %s119
      %p123 = scmp.eq.s32.totalorder %s20, 0
      %p124 = por %p122, %p123
      %p125 = scmp.ne.s32.totalorder %s117, %s119
      %p126 = scmp.eq.s32.totalorder %s25, 3
      %p127 = por %p125, %p126
      %p128 = scmp.ne.s32.totalorder %s119, %s120
      %p129 = scmp.eq.s32.totalorder %s25, 0
      %p130 = por %p128, %p129
      %p131 = scmp.ne.s32.totalorder %s119, %s120
      %p132 = scmp.eq.s32.totalorder %s26, 3
      %p133 = por %p131, %p132
      %p135 = scmp.ne.s32.totalorder %s120, %s134
      %p136 = scmp.eq.s32.totalorder %s26, 0
      %p137 = por %p135, %p136
      %s139 = sadd.s32 %s138, 1
      %p142 = scmp.eq.s32.totalorder %s20, 3
      %p143 = scmp.ne.s32.totalorder %s138, %s140
      %p144 = scmp.eq.s32.totalorder %s20, 0
      %p145 = por %p143, %p144
      %p146 = scmp.ne.s32.totalorder %s138, %s140
      %p147 = scmp.eq.s32.totalorder %s25, 3
      %p148 = por %p146, %p147
      %p149 = scmp.ne.s32.totalorder %s140, %s141
      %p150 = scmp.eq.s32.totalorder %s25, 0
      %p151 = por %p149, %p150
      %p152 = scmp.ne.s32.totalorder %s140, %s141
      %p153 = scmp.eq.s32.totalorder %s26, 3
      %p154 = por %p152, %p153
      %p156 = scmp.ne.s32.totalorder %s141, %s155
      %p157 = scmp.eq.s32.totalorder %s26, 0
      %p158 = por %p156, %p157
      %s159 = ssub.s32 %s20, %s27
      %p160 = scmp.eq.s32.totalorder %s159, 0
      %s162 = sadd.s32 %s161, 1
      %s163 = scalar_select %p160, %s161, %s162
      %p166 = pneg %p160
      %p167 = scmp.eq.s32.totalorder %s20, 3
      %p168 = por %p166, %p167
      %p169 = scmp.ne.s32.totalorder %s161, %s164
      %p170 = scmp.eq.s32.totalorder %s20, 0
      %p171 = por %p169, %p170
      %p172 = scmp.ne.s32.totalorder %s161, %s164
      %p173 = scmp.eq.s32.totalorder %s25, 3
      %p174 = por %p172, %p173
      %p175 = scmp.ne.s32.totalorder %s164, %s165
      %p176 = scmp.eq.s32.totalorder %s25, 0
      %p177 = por %p175, %p176
      %p178 = scmp.ne.s32.totalorder %s164, %s165
      %p179 = scmp.eq.s32.totalorder %s26, 3
      %p180 = por %p178, %p179
      %p182 = scmp.ne.s32.totalorder %s165, %s181
      %p183 = scmp.eq.s32.totalorder %s26, 0
      %p184 = por %p182, %p183
      %p185 = scmp.le.s32.totalorder 1, %s20
      %p186 = scmp.lt.s32.totalorder %s20, 5
      %p187 = pnand %p185, %p186
      %p188 = pneg %p187
      // Predicated region
      $region9: #{tpu_custom_call.1} parent=5 // pred_check
        _
      $region10: #{tpu_custom_call.1} parent=5 // pred_check_branch
        %190 = sbr.rel (%p187) target = $region12
      $region11: #{tpu_custom_call.1} parent=5 // pred_region
        %s191 = ssub.s32 %s20, 1
        // Predicated region
        $region13: #{tpu_custom_call.1} parent=11 // pred_check
          %p192 = pneg %p67
        $region14: #{tpu_custom_call.1} parent=11 // pred_check_branch
          %194 = sbr.rel (%p192) target = $region16
        $region15: #{tpu_custom_call.1} parent=11 // pred_region
          %s196 = ssub.s32 10240, 10240
          %197 = vsyncadd [#allocation6], %s196
          %s198 = sshll.u32 [#allocation5], 4
          %s199 = int_to_ptr.vmem [resolvable:$true] %s198
          %204 = dma.hbm_to_vmem [thread:$0]  %s1, 10240, %s199, [#allocation6], 64, 64, 4
        $region16: #{tpu_custom_call.1} parent=11 // pred_fallthru
          _
        // Predicated region
        $region17: #{tpu_custom_call.1} parent=11 // pred_check
          %p205 = pneg %p88
        $region18: #{tpu_custom_call.1} parent=11 // pred_check_branch
          %207 = sbr.rel (%p205) target = $region20
        $region19: #{tpu_custom_call.1} parent=11 // pred_region
          %s209 = ssub.s32 80, 80
          %210 = vsyncadd [#allocation6], %s209
          %s211 = sshll.u32 [#allocation7], 4
          %s212 = int_to_ptr.vmem [resolvable:$true] %s211
          %217 = dma.hbm_to_vmem [thread:$0]  %s2, 80, %s212, [#allocation6], 16, 16, 1
        $region20: #{tpu_custom_call.1} parent=11 // pred_fallthru
          _
        // Predicated region
        $region21: #{tpu_custom_call.1} parent=11 // pred_check
          %p218 = pneg %p109
        $region22: #{tpu_custom_call.1} parent=11 // pred_check_branch
          %220 = sbr.rel (%p218) target = $region24
        $region23: #{tpu_custom_call.1} parent=11 // pred_region
          %s222 = ssub.s32 5120, 5120
          %223 = vsyncadd [#allocation9], %s222
          %s224 = sshll.u32 [#allocation8], 4
          %s225 = int_to_ptr.vmem [resolvable:$true] %s224
          %230 = dma.hbm_to_vmem [thread:$0]  %s3, 5120, %s225, [#allocation9], 64, 64, 4
        $region24: #{tpu_custom_call.1} parent=11 // pred_fallthru
          _
        // Predicated region
        $region25: #{tpu_custom_call.1} parent=11 // pred_check
          %p231 = pneg %p130
        $region26: #{tpu_custom_call.1} parent=11 // pred_check_branch
          %233 = sbr.rel (%p231) target = $region28
        $region27: #{tpu_custom_call.1} parent=11 // pred_region
          _
        $region28: #{tpu_custom_call.1} parent=11 // pred_fallthru
          _
        // Predicated region
        $region29: #{tpu_custom_call.1} parent=11 // pred_check
          %p234 = pneg %p151
        $region30: #{tpu_custom_call.1} parent=11 // pred_check_branch
          %236 = sbr.rel (%p234) target = $region32
        $region31: #{tpu_custom_call.1} parent=11 // pred_region
          %s238 = ssub.s32 10240, 10240
          %239 = vsyncadd [#allocation9], %s238
          %s240 = sshll.u32 [#allocation10], 4
          %s241 = int_to_ptr.vmem [resolvable:$true] %s240
          %246 = dma.hbm_to_vmem [thread:$0]  %s5, 10240, %s241, [#allocation9], 64, 64, 4
        $region32: #{tpu_custom_call.1} parent=11 // pred_fallthru
          _
      $region12: #{tpu_custom_call.1} parent=5 // pred_fallthru
        _
      %p247 = scmp.lt.s32.totalorder %s20, 4
      // Predicated region
      $region33: #{tpu_custom_call.1} parent=5 // pred_check
        %p248 = pneg %p247
      $region34: #{tpu_custom_call.1} parent=5 // pred_check_branch
        %250 = sbr.rel (%p248) target = $region36
      $region35: #{tpu_custom_call.1} parent=5 // pred_region
        // Predicated region
        $region37: #{tpu_custom_call.1} parent=35 // pred_check
          %p251 = pneg %p40
        $region38: #{tpu_custom_call.1} parent=35 // pred_check_branch
          %253 = sbr.rel (%p251) target = $region40
        $region39: #{tpu_custom_call.1} parent=35 // pred_region
          %s254 = sand.u32 %s30, 1
          %s255 = scalar_lea.sflag [#allocation3], %s254
          %s256 = sand.u32 %s30, 1
          %s257 = smul.addr %s256, 256
          %s258 = scalar_lea.vmem [#allocation2], %s257
          %s259 = smul.u32 2, %s20
          %s261 = ssub.s32 4096, 4096
          %262 = vsyncadd %s255, %s261
          %s263 = smul.addr %s259, 32
          %s264 = smul.addr %s263, 64
          %s265 = scalar_lea.hbm %s0, %s264
          %s266 = sshll.u32 %s258, 4
          %s267 = int_to_ptr.vmem [resolvable:$true] %s266
          %272 = dma.hbm_to_vmem [thread:$0]  %s265, 4096, %s267, %s255, 128, 128, 8
        $region40: #{tpu_custom_call.1} parent=35 // pred_fallthru
          _
      $region36: #{tpu_custom_call.1} parent=5 // pred_fallthru
        _
      %p273 = scmp.le.s32.totalorder 1, %s20
      %p274 = scmp.lt.s32.totalorder %s20, 5
      %p275 = pnand %p273, %p274
      %p276 = pneg %p275
      // Predicated region
      $region41: #{tpu_custom_call.1} parent=5 // pred_check
        _
      $region42: #{tpu_custom_call.1} parent=5 // pred_check_branch
        %278 = sbr.rel (%p275) target = $region44
      $region43: #{tpu_custom_call.1} parent=5 // pred_region
        %s279 = ssub.s32 %s20, 1
        %s280 = sand.u32 %s33, 1
        %s281 = scalar_lea.sflag [#allocation3], %s280
        %s282 = sand.u32 %s33, 1
        %s283 = smul.addr %s282, 256
        %s284 = scalar_lea.vmem [#allocation2], %s283
        // Predicated region
        $region45: #{tpu_custom_call.1} parent=43 // pred_check
          %p285 = pneg %p46
        $region46: #{tpu_custom_call.1} parent=43 // pred_check_branch
          %287 = sbr.rel (%p285) target = $region48
        $region47: #{tpu_custom_call.1} parent=43 // pred_region
          %288 = dma.done %s281, 4096
        $region48: #{tpu_custom_call.1} parent=43 // pred_fallthru
          _
        // Predicated region
        $region49: #{tpu_custom_call.1} parent=43 // pred_check
          %p289 = pneg %p67
        $region50: #{tpu_custom_call.1} parent=43 // pred_check_branch
          %291 = sbr.rel (%p289) target = $region52
        $region51: #{tpu_custom_call.1} parent=43 // pred_region
          %292 = dma.done [#allocation6], 10240
        $region52: #{tpu_custom_call.1} parent=43 // pred_fallthru
          _
        // Predicated region
        $region53: #{tpu_custom_call.1} parent=43 // pred_check
          %p293 = pneg %p88
        $region54: #{tpu_custom_call.1} parent=43 // pred_check_branch
          %295 = sbr.rel (%p293) target = $region56
        $region55: #{tpu_custom_call.1} parent=43 // pred_region
          %296 = dma.done [#allocation6], 80
        $region56: #{tpu_custom_call.1} parent=43 // pred_fallthru
          _
        // Predicated region
        $region57: #{tpu_custom_call.1} parent=43 // pred_check
          %p297 = pneg %p109
        $region58: #{tpu_custom_call.1} parent=43 // pred_check_branch
          %299 = sbr.rel (%p297) target = $region60
        $region59: #{tpu_custom_call.1} parent=43 // pred_region
          %300 = dma.done [#allocation9], 5120
        $region60: #{tpu_custom_call.1} parent=43 // pred_fallthru
          _
        // Predicated region
        $region61: #{tpu_custom_call.1} parent=43 // pred_check
          %p301 = pneg %p151
        $region62: #{tpu_custom_call.1} parent=43 // pred_check_branch
          %303 = sbr.rel (%p301) target = $region64
        $region63: #{tpu_custom_call.1} parent=43 // pred_region
          %304 = dma.done [#allocation9], 10240
        $region64: #{tpu_custom_call.1} parent=43 // pred_fallthru
          _
        %s305 = sand.u32 %s33, 1
        %s306 = scalar_lea.sflag [#allocation3], %s305
        %s307 = sand.u32 %s33, 1
        %s308 = smul.addr %s307, 256
        %s309 = scalar_lea.vmem [#allocation2], %s308
        %p310 = pneg %p46
        %p311 = pneg %p43
        %p312 = pneg %p67
        %p313 = pneg %p64
        %p314 = pneg %p88
        %p315 = pneg %p85
        %p316 = pneg %p109
        %p317 = pneg %p106
        %p318 = pneg %p130
        %p319 = pneg %p127
        %p320 = pneg %p151
        %p321 = pneg %p148
        %p322 = pneg %p177
        %p323 = pneg %p174
        %s324 = sand.u32 %s164, 1
        %s325 = scalar_lea.sflag [#allocation4], %s324
        %s326 = sand.u32 %s164, 1
        %s327 = smul.addr %s326, 256
        %s328 = scalar_lea.vmem [#allocation11], %s327
        %s329 = smul.u32 2, %s25
        %s330 = smul.u32 2, %s25
        %v332 = vld [vmem:[%s284] sm:$0xff]
        %v333 = vld [vmem:[%s284 + $0x8] sm:$0xff]
        %v334 = vld [vmem:[%s284 + $0x10] sm:$0xff]
        %v335 = vld [vmem:[%s284 + $0x18] sm:$0xff]
        %v336 = vld [vmem:[%s284 + $0x20] sm:$0xff]
        %v337 = vld [vmem:[%s284 + $0x28] sm:$0xff]
        %v338 = vld [vmem:[%s284 + $0x30] sm:$0xff]
        %v339 = vld [vmem:[%s284 + $0x38] sm:$0xff]
        %v340 = vld [vmem:[%s284 + $0x40] sm:$0xff]
        %v341 = vld [vmem:[%s284 + $0x48] sm:$0xff]
        %v342 = vld [vmem:[%s284 + $0x50] sm:$0xff]
        %v343 = vld [vmem:[%s284 + $0x58] sm:$0xff]
        %v344 = vld [vmem:[%s284 + $0x60] sm:$0xff]
        %v345 = vld [vmem:[%s284 + $0x68] sm:$0xff]
        %v346 = vld [vmem:[%s284 + $0x70] sm:$0xff]
        %v347 = vld [vmem:[%s284 + $0x78] sm:$0xff]
        %v348 = vld [vmem:[%s284 + $0x80] sm:$0xff]
        %v349 = vld [vmem:[%s284 + $0x88] sm:$0xff]
        %v350 = vld [vmem:[%s284 + $0x90] sm:$0xff]
        %v351 = vld [vmem:[%s284 + $0x98] sm:$0xff]
        %v352 = vld [vmem:[%s284 + $0xa0] sm:$0xff]
        %v353 = vld [vmem:[%s284 + $0xa8] sm:$0xff]
        %v354 = vld [vmem:[%s284 + $0xb0] sm:$0xff]
        %v355 = vld [vmem:[%s284 + $0xb8] sm:$0xff]
        %v356 = vld [vmem:[%s284 + $0xc0] sm:$0xff]
        %v357 = vld [vmem:[%s284 + $0xc8] sm:$0xff]
        %v358 = vld [vmem:[%s284 + $0xd0] sm:$0xff]
        %v359 = vld [vmem:[%s284 + $0xd8] sm:$0xff]
        %v360 = vld [vmem:[%s284 + $0xe0] sm:$0xff]
        %v361 = vld [vmem:[%s284 + $0xe8] sm:$0xff]
        %v362 = vld [vmem:[%s284 + $0xf0] sm:$0xff]
        %v363 = vld [vmem:[%s284 + $0xf8] sm:$0xff]
        %v364 = vmax.bf16 %v332, 0
        %v365 = vmax.bf16 %v333, 0
        %v366 = vmax.bf16 %v334, 0
        %v367 = vmax.bf16 %v335, 0
        %v368 = vmax.bf16 %v336, 0
        %v369 = vmax.bf16 %v337, 0
        %v370 = vmax.bf16 %v338, 0
        %v371 = vmax.bf16 %v339, 0
        %v372 = vmax.bf16 %v340, 0
        %v373 = vmax.bf16 %v341, 0
        %v374 = vmax.bf16 %v342, 0
        %v375 = vmax.bf16 %v343, 0
        %v376 = vmax.bf16 %v344, 0
        %v377 = vmax.bf16 %v345, 0
        %v378 = vmax.bf16 %v346, 0
        %v379 = vmax.bf16 %v347, 0
        %v380 = vmax.bf16 %v348, 0
        %v381 = vmax.bf16 %v349, 0
        %v382 = vmax.bf16 %v350, 0
        %v383 = vmax.bf16 %v351, 0
        %v384 = vmax.bf16 %v352, 0
        %v385 = vmax.bf16 %v353, 0
        %v386 = vmax.bf16 %v354, 0
        %v387 = vmax.bf16 %v355, 0
        %v388 = vmax.bf16 %v356, 0
        %v389 = vmax.bf16 %v357, 0
        %v390 = vmax.bf16 %v358, 0
        %v391 = vmax.bf16 %v359, 0
        %v392 = vmax.bf16 %v360, 0
        %v393 = vmax.bf16 %v361, 0
        %v394 = vmax.bf16 %v362, 0
        %v395 = vmax.bf16 %v363, 0
        %v396 = vld [vmem:[#allocation5] sm:$0xf]
        %v397 = vld [vmem:[#allocation5 + $0x4] sm:$0xf]
        %v398 = vld [vmem:[#allocation5 + $0x8] sm:$0xf]
        %v399 = vld [vmem:[#allocation5 + $0xc] sm:$0xf]
        %v400 = vld [vmem:[#allocation5 + $0x10] sm:$0xf]
        %v401 = vld [vmem:[#allocation5 + $0x14] sm:$0xf]
        %v402 = vld [vmem:[#allocation5 + $0x18] sm:$0xf]
        %v403 = vld [vmem:[#allocation5 + $0x1c] sm:$0xf]
        %v404 = vld [vmem:[#allocation5 + $0x20] sm:$0xf]
        %v405 = vld [vmem:[#allocation5 + $0x24] sm:$0xf]
        %v406 = vld [vmem:[#allocation5 + $0x28] sm:$0xf]
        %v407 = vld [vmem:[#allocation5 + $0x2c] sm:$0xf]
        %v408 = vld [vmem:[#allocation5 + $0x30] sm:$0xf]
        %v409 = vld [vmem:[#allocation5 + $0x34] sm:$0xf]
        %v410 = vld [vmem:[#allocation5 + $0x38] sm:$0xf]
        %v411 = vld [vmem:[#allocation5 + $0x3c] sm:$0xf]
        %v412 = vld [vmem:[#allocation5 + $0x40] sm:$0xf]
        %v413 = vld [vmem:[#allocation5 + $0x44] sm:$0xf]
        %v414 = vld [vmem:[#allocation5 + $0x48] sm:$0xf]
        %v415 = vld [vmem:[#allocation5 + $0x4c] sm:$0xf]
        %v416 = vld [vmem:[#allocation5 + $0x50] sm:$0xf]
        %v417 = vld [vmem:[#allocation5 + $0x54] sm:$0xf]
        %v418 = vld [vmem:[#allocation5 + $0x58] sm:$0xf]
        %v419 = vld [vmem:[#allocation5 + $0x5c] sm:$0xf]
        %v420 = vld [vmem:[#allocation5 + $0x60] sm:$0xf]
        %v421 = vld [vmem:[#allocation5 + $0x64] sm:$0xf]
        %v422 = vld [vmem:[#allocation5 + $0x68] sm:$0xf]
        %v423 = vld [vmem:[#allocation5 + $0x6c] sm:$0xf]
        %v424 = vld [vmem:[#allocation5 + $0x70] sm:$0xf]
        %v425 = vld [vmem:[#allocation5 + $0x74] sm:$0xf]
        %v426 = vld [vmem:[#allocation5 + $0x78] sm:$0xf]
        %v427 = vld [vmem:[#allocation5 + $0x7c] sm:$0xf]
        %v428 = vld [vmem:[#allocation7] sm:$0x1]
        %v430 = vlaneseq
        %v431 = vshrl.u32 %v430, 7
        %v432 = vsub.s32 0, %v431
        %v433 = vrot.slane %v428, %v432
        %v467 = vunpack.c.l.b16 %v364
        %v468 = vunpack.c.h.b16 %v364
        %v469 = vunpack.c.l.b16 %v365
        %v470 = vunpack.c.h.b16 %v365
        %v471 = vunpack.c.l.b16 %v366
        %v472 = vunpack.c.h.b16 %v366
        %v473 = vunpack.c.l.b16 %v367
        %v474 = vunpack.c.h.b16 %v367
        %v475 = vunpack.c.l.b16 %v368
        %v476 = vunpack.c.h.b16 %v368
        %v477 = vunpack.c.l.b16 %v369
        %v478 = vunpack.c.h.b16 %v369
        %v479 = vunpack.c.l.b16 %v370
        %v480 = vunpack.c.h.b16 %v370
        %v481 = vunpack.c.l.b16 %v371
        %v482 = vunpack.c.h.b16 %v371
        %v483 = vunpack.c.l.b16 %v372
        %v484 = vunpack.c.h.b16 %v372
        %v485 = vunpack.c.l.b16 %v373
        %v486 = vunpack.c.h.b16 %v373
        %v487 = vunpack.c.l.b16 %v374
        %v488 = vunpack.c.h.b16 %v374
        %v489 = vunpack.c.l.b16 %v375
        %v490 = vunpack.c.h.b16 %v375
        %v491 = vunpack.c.l.b16 %v376
        %v492 = vunpack.c.h.b16 %v376
        %v493 = vunpack.c.l.b16 %v377
        %v494 = vunpack.c.h.b16 %v377
        %v495 = vunpack.c.l.b16 %v378
        %v496 = vunpack.c.h.b16 %v378
        %v497 = vunpack.c.l.b16 %v379
        %v498 = vunpack.c.h.b16 %v379
        %v499 = vunpack.c.l.b16 %v380
        %v500 = vunpack.c.h.b16 %v380
        %v501 = vunpack.c.l.b16 %v381
        %v502 = vunpack.c.h.b16 %v381
        %v503 = vunpack.c.l.b16 %v382
        %v504 = vunpack.c.h.b16 %v382
        %v505 = vunpack.c.l.b16 %v383
        %v506 = vunpack.c.h.b16 %v383
        %v507 = vunpack.c.l.b16 %v384
        %v508 = vunpack.c.h.b16 %v384
        %v509 = vunpack.c.l.b16 %v385
        %v510 = vunpack.c.h.b16 %v385
        %v511 = vunpack.c.l.b16 %v386
        %v512 = vunpack.c.h.b16 %v386
        %v513 = vunpack.c.l.b16 %v387
        %v514 = vunpack.c.h.b16 %v387
        %v515 = vunpack.c.l.b16 %v388
        %v516 = vunpack.c.h.b16 %v388
        %v517 = vunpack.c.l.b16 %v389
        %v518 = vunpack.c.h.b16 %v389
        %v519 = vunpack.c.l.b16 %v390
        %v520 = vunpack.c.h.b16 %v390
        %v521 = vunpack.c.l.b16 %v391
        %v522 = vunpack.c.h.b16 %v391
        %v523 = vunpack.c.l.b16 %v392
        %v524 = vunpack.c.h.b16 %v392
        %v525 = vunpack.c.l.b16 %v393
        %v526 = vunpack.c.h.b16 %v393
        %v527 = vunpack.c.l.b16 %v394
        %v528 = vunpack.c.h.b16 %v394
        %v529 = vunpack.c.l.b16 %v395
        %v530 = vunpack.c.h.b16 %v395
        %v531 = vpack.c.b16 %v469, %v467
        %v532 = vpack.c.b16 %v470, %v468
        %v533 = vpack.c.b16 %v473, %v471
        %v534 = vpack.c.b16 %v474, %v472
        %v535 = vpack.c.b16 %v477, %v475
        %v536 = vpack.c.b16 %v478, %v476
        %v537 = vpack.c.b16 %v481, %v479
        %v538 = vpack.c.b16 %v482, %v480
        %v539 = vpack.c.b16 %v485, %v483
        %v540 = vpack.c.b16 %v486, %v484
        %v541 = vpack.c.b16 %v489, %v487
        %v542 = vpack.c.b16 %v490, %v488
        %v543 = vpack.c.b16 %v493, %v491
        %v544 = vpack.c.b16 %v494, %v492
        %v545 = vpack.c.b16 %v497, %v495
        %v546 = vpack.c.b16 %v498, %v496
        %v547 = vpack.c.b16 %v501, %v499
        %v548 = vpack.c.b16 %v502, %v500
        %v549 = vpack.c.b16 %v505, %v503
        %v550 = vpack.c.b16 %v506, %v504
        %v551 = vpack.c.b16 %v509, %v507
        %v552 = vpack.c.b16 %v510, %v508
        %v553 = vpack.c.b16 %v513, %v511
        %v554 = vpack.c.b16 %v514, %v512
        %v555 = vpack.c.b16 %v517, %v515
        %v556 = vpack.c.b16 %v518, %v516
        %v557 = vpack.c.b16 %v521, %v519
        %v558 = vpack.c.b16 %v522, %v520
        %v559 = vpack.c.b16 %v525, %v523
        %v560 = vpack.c.b16 %v526, %v524
        %v561 = vpack.c.b16 %v529, %v527
        %v562 = vpack.c.b16 %v530, %v528
        %v627 = vunpack.c.l.b16 %v396
        %v628 = vunpack.c.l.b16 %v397
        %v629 = vunpack.c.l.b16 %v398
        %v630 = vunpack.c.l.b16 %v399
        %v631 = vunpack.c.l.b16 %v400
        %v632 = vunpack.c.l.b16 %v401
        %v633 = vunpack.c.l.b16 %v402
        %v634 = vunpack.c.l.b16 %v403
        %v635 = vunpack.c.l.b16 %v404
        %v636 = vunpack.c.l.b16 %v405
        %v637 = vunpack.c.l.b16 %v406
        %v638 = vunpack.c.l.b16 %v407
        %v639 = vunpack.c.l.b16 %v408
        %v640 = vunpack.c.l.b16 %v409
        %v641 = vunpack.c.l.b16 %v410
        %v642 = vunpack.c.l.b16 %v411
        %v643 = vunpack.c.l.b16 %v412
        %v644 = vunpack.c.l.b16 %v413
        %v645 = vunpack.c.l.b16 %v414
        %v646 = vunpack.c.l.b16 %v415
        %v647 = vunpack.c.l.b16 %v416
        %v648 = vunpack.c.l.b16 %v417
        %v649 = vunpack.c.l.b16 %v418
        %v650 = vunpack.c.l.b16 %v419
        %v651 = vunpack.c.l.b16 %v420
        %v652 = vunpack.c.l.b16 %v421
        %v653 = vunpack.c.l.b16 %v422
        %v654 = vunpack.c.l.b16 %v423
        %v655 = vunpack.c.l.b16 %v424
        %v656 = vunpack.c.l.b16 %v425
        %v657 = vunpack.c.l.b16 %v426
        %v658 = vunpack.c.l.b16 %v427
        %v659 = vpack.c.b16 %v628, %v627
        %v660 = vpack.c.b16 %v630, %v629
        %v661 = vpack.c.b16 %v632, %v631
        %v662 = vpack.c.b16 %v634, %v633
        %v663 = vpack.c.b16 %v636, %v635
        %v664 = vpack.c.b16 %v638, %v637
        %v665 = vpack.c.b16 %v640, %v639
        %v666 = vpack.c.b16 %v642, %v641
        %v667 = vpack.c.b16 %v644, %v643
        %v668 = vpack.c.b16 %v646, %v645
        %v669 = vpack.c.b16 %v648, %v647
        %v670 = vpack.c.b16 %v650, %v649
        %v671 = vpack.c.b16 %v652, %v651
        %v672 = vpack.c.b16 %v654, %v653
        %v673 = vpack.c.b16 %v656, %v655
        %v674 = vpack.c.b16 %v658, %v657
        %691 = vmatprep.subr.bf16.mxu0 0
        %692 = vmatpush1.bf16.msra.mxu0 %v666
        %693 = vmatprep.subr.bf16.mxu0 0
        %694 = vmatpush1.bf16.msra.mxu0 %v665
        %695 = vmatprep.subr.bf16.mxu0 0
        %696 = vmatpush1.bf16.msra.mxu0 %v664
        %697 = vmatprep.subr.bf16.mxu0 0
        %698 = vmatpush1.bf16.msra.mxu0 %v663
        %699 = vmatprep.subr.bf16.mxu0 0
        %700 = vmatpush1.bf16.msra.mxu0 %v662
        %701 = vmatprep.subr.bf16.mxu0 0
        %702 = vmatpush1.bf16.msra.mxu0 %v661
        %703 = vmatprep.subr.bf16.mxu0 0
        %704 = vmatpush1.bf16.msra.mxu0 %v660
        %705 = vmatprep.subr.bf16.mxu0 0
        %706 = vmatpush1.bf16.msra.mxu0 %v659
        %707 = vmatprep.subr.bf16.mxu0 0
        %708 = vmatpush2.bf16.msra.mxu0 %v674
        %709 = vmatprep.subr.bf16.mxu0 0
        %710 = vmatpush2.bf16.msra.mxu0 %v673
        %711 = vmatprep.subr.bf16.mxu0 0
        %712 = vmatpush2.bf16.msra.mxu0 %v672
        %713 = vmatprep.subr.bf16.mxu0 0
        %714 = vmatpush2.bf16.msra.mxu0 %v671
        %715 = vmatprep.subr.bf16.mxu0 0
        %716 = vmatpush2.bf16.msra.mxu0 %v670
        %717 = vmatprep.subr.bf16.mxu0 0
        %718 = vmatpush2.bf16.msra.mxu0 %v669
        %719 = vmatprep.subr.bf16.mxu0 0
        %720 = vmatpush2.bf16.msra.mxu0 %v668
        %721 = vmatprep.subr.bf16.mxu0 0
        %722 = vmatpush2.bf16.msra.mxu0 %v667
        %723 = vmatprep.mubr.bf16.mxu0 %v532
        %724 = vmatmul.mubr.bf16.gmra.mxu0 %v531
        %v725 = vpop.f32.mrf.mxu0
        %v726 = vadd.f32 %v433, %v725
        %v727 = vpop.f32.mrf.mxu0
        %v728 = vpop.f32.mrf.mxu0
        %v729 = vadd.f32 %v433, %v728
        %v730 = vpop.f32.mrf.mxu0
        %731 = vmatprep.mubr.bf16.mxu0 %v534
        %732 = vmatmul.mubr.bf16.gmra.mxu0 %v533
        %v733 = vpop.f32.mrf.mxu0
        %v734 = vadd.f32 %v433, %v733
        %v735 = vpop.f32.mrf.mxu0
        %v736 = vpop.f32.mrf.mxu0
        %v737 = vadd.f32 %v433, %v736
        %v738 = vpop.f32.mrf.mxu0
        %739 = vmatprep.mubr.bf16.mxu0 %v536
        %740 = vmatmul.mubr.bf16.gmra.mxu0 %v535
        %v741 = vpop.f32.mrf.mxu0
        %v742 = vadd.f32 %v433, %v741
        %v743 = vpop.f32.mrf.mxu0
        %v744 = vpop.f32.mrf.mxu0
        %v745 = vadd.f32 %v433, %v744
        %v746 = vpop.f32.mrf.mxu0
        %747 = vmatprep.mubr.bf16.mxu0 %v538
        %748 = vmatmul.mubr.bf16.gmra.mxu0 %v537
        %v749 = vpop.f32.mrf.mxu0
        %v750 = vadd.f32 %v433, %v749
        %v751 = vpop.f32.mrf.mxu0
        %v752 = vpop.f32.mrf.mxu0
        %v753 = vadd.f32 %v433, %v752
        %v754 = vpop.f32.mrf.mxu0
        %755 = vmatprep.mubr.bf16.mxu0 %v540
        %756 = vmatmul.mubr.bf16.gmra.mxu0 %v539
        %v757 = vpop.f32.mrf.mxu0
        %v758 = vadd.f32 %v433, %v757
        %v759 = vpop.f32.mrf.mxu0
        %v760 = vpop.f32.mrf.mxu0
        %v761 = vadd.f32 %v433, %v760
        %v762 = vpop.f32.mrf.mxu0
        %763 = vmatprep.mubr.bf16.mxu0 %v542
        %764 = vmatmul.mubr.bf16.gmra.mxu0 %v541
        %v765 = vpop.f32.mrf.mxu0
        %v766 = vadd.f32 %v433, %v765
        %v767 = vpop.f32.mrf.mxu0
        %v768 = vpop.f32.mrf.mxu0
        %v769 = vadd.f32 %v433, %v768
        %v770 = vpop.f32.mrf.mxu0
        %771 = vmatprep.mubr.bf16.mxu0 %v544
        %772 = vmatmul.mubr.bf16.gmra.mxu0 %v543
        %v773 = vpop.f32.mrf.mxu0
        %v774 = vadd.f32 %v433, %v773
        %v775 = vpop.f32.mrf.mxu0
        %v776 = vpop.f32.mrf.mxu0
        %v777 = vadd.f32 %v433, %v776
        %v778 = vpop.f32.mrf.mxu0
        %779 = vmatprep.mubr.bf16.mxu0 %v546
        %780 = vmatmul.mubr.bf16.gmra.mxu0 %v545
        %v781 = vpop.f32.mrf.mxu0
        %v782 = vadd.f32 %v433, %v781
        %v783 = vpop.f32.mrf.mxu0
        %v784 = vpop.f32.mrf.mxu0
        %v785 = vadd.f32 %v433, %v784
        %v786 = vpop.f32.mrf.mxu0
        %787 = vmatprep.mubr.bf16.mxu0 %v548
        %788 = vmatmul.mubr.bf16.gmra.mxu0 %v547
        %v789 = vpop.f32.mrf.mxu0
        %v790 = vadd.f32 %v433, %v789
        %v791 = vpop.f32.mrf.mxu0
        %v792 = vpop.f32.mrf.mxu0
        %v793 = vadd.f32 %v433, %v792
        %v794 = vpop.f32.mrf.mxu0
        %795 = vmatprep.mubr.bf16.mxu0 %v550
        %796 = vmatmul.mubr.bf16.gmra.mxu0 %v549
        %v797 = vpop.f32.mrf.mxu0
        %v798 = vadd.f32 %v433, %v797
        %v799 = vpop.f32.mrf.mxu0
        %v800 = vpop.f32.mrf.mxu0
        %v801 = vadd.f32 %v433, %v800
        %v802 = vpop.f32.mrf.mxu0
        %803 = vmatprep.mubr.bf16.mxu0 %v552
        %804 = vmatmul.mubr.bf16.gmra.mxu0 %v551
        %v805 = vpop.f32.mrf.mxu0
        %v806 = vadd.f32 %v433, %v805
        %v807 = vpop.f32.mrf.mxu0
        %v808 = vpop.f32.mrf.mxu0
        %v809 = vadd.f32 %v433, %v808
        %v810 = vpop.f32.mrf.mxu0
        %811 = vmatprep.mubr.bf16.mxu0 %v554
        %812 = vmatmul.mubr.bf16.gmra.mxu0 %v553
        %v813 = vpop.f32.mrf.mxu0
        %v814 = vadd.f32 %v433, %v813
        %v815 = vpop.f32.mrf.mxu0
        %v816 = vpop.f32.mrf.mxu0
        %v817 = vadd.f32 %v433, %v816
        %v818 = vpop.f32.mrf.mxu0
        %819 = vmatprep.mubr.bf16.mxu0 %v556
        %820 = vmatmul.mubr.bf16.gmra.mxu0 %v555
        %v821 = vpop.f32.mrf.mxu0
        %v822 = vadd.f32 %v433, %v821
        %v823 = vpop.f32.mrf.mxu0
        %v824 = vpop.f32.mrf.mxu0
        %v825 = vadd.f32 %v433, %v824
        %v826 = vpop.f32.mrf.mxu0
        %827 = vmatprep.mubr.bf16.mxu0 %v558
        %828 = vmatmul.mubr.bf16.gmra.mxu0 %v557
        %v829 = vpop.f32.mrf.mxu0
        %v830 = vadd.f32 %v433, %v829
        %v831 = vpop.f32.mrf.mxu0
        %v832 = vpop.f32.mrf.mxu0
        %v833 = vadd.f32 %v433, %v832
        %v834 = vpop.f32.mrf.mxu0
        %835 = vmatprep.mubr.bf16.mxu0 %v560
        %836 = vmatmul.mubr.bf16.gmra.mxu0 %v559
        %v837 = vpop.f32.mrf.mxu0
        %v838 = vadd.f32 %v433, %v837
        %v839 = vpop.f32.mrf.mxu0
        %v840 = vpop.f32.mrf.mxu0
        %v841 = vadd.f32 %v433, %v840
        %v842 = vpop.f32.mrf.mxu0
        %843 = vmatprep.mubr.bf16.mxu0 %v562
        %844 = vmatmul.mubr.bf16.gmra.mxu0 %v561
        %v845 = vpop.f32.mrf.mxu0
        %v846 = vadd.f32 %v433, %v845
        %v847 = vpop.f32.mrf.mxu0
        %v848 = vpop.f32.mrf.mxu0
        %v849 = vadd.f32 %v433, %v848
        %v850 = vpop.f32.mrf.mxu0
        %851 = vdwg.mxu0
        %v852 = vmax.f32 %v726, 0.0
        %v853 = vmax.f32 %v729, 0.0
        %v854 = vmax.f32 %v734, 0.0
        %v855 = vmax.f32 %v737, 0.0
        %v856 = vmax.f32 %v742, 0.0
        %v857 = vmax.f32 %v745, 0.0
        %v858 = vmax.f32 %v750, 0.0
        %v859 = vmax.f32 %v753, 0.0
        %v860 = vmax.f32 %v758, 0.0
        %v861 = vmax.f32 %v761, 0.0
        %v862 = vmax.f32 %v766, 0.0
        %v863 = vmax.f32 %v769, 0.0
        %v864 = vmax.f32 %v774, 0.0
        %v865 = vmax.f32 %v777, 0.0
        %v866 = vmax.f32 %v782, 0.0
        %v867 = vmax.f32 %v785, 0.0
        %v868 = vmax.f32 %v790, 0.0
        %v869 = vmax.f32 %v793, 0.0
        %v870 = vmax.f32 %v798, 0.0
        %v871 = vmax.f32 %v801, 0.0
        %v872 = vmax.f32 %v806, 0.0
        %v873 = vmax.f32 %v809, 0.0
        %v874 = vmax.f32 %v814, 0.0
        %v875 = vmax.f32 %v817, 0.0
        %v876 = vmax.f32 %v822, 0.0
        %v877 = vmax.f32 %v825, 0.0
        %v878 = vmax.f32 %v830, 0.0
        %v879 = vmax.f32 %v833, 0.0
        %v880 = vmax.f32 %v838, 0.0
        %v881 = vmax.f32 %v841, 0.0
        %v882 = vmax.f32 %v846, 0.0
        %v883 = vmax.f32 %v849, 0.0
        %v884 = vpack.c.bf16 %v853, %v852
        %v885 = vpack.c.bf16 %v855, %v854
        %v886 = vpack.c.bf16 %v857, %v856
        %v887 = vpack.c.bf16 %v859, %v858
        %v888 = vpack.c.bf16 %v861, %v860
        %v889 = vpack.c.bf16 %v863, %v862
        %v890 = vpack.c.bf16 %v865, %v864
        %v891 = vpack.c.bf16 %v867, %v866
        %v892 = vpack.c.bf16 %v869, %v868
        %v893 = vpack.c.bf16 %v871, %v870
        %v894 = vpack.c.bf16 %v873, %v872
        %v895 = vpack.c.bf16 %v875, %v874
        %v896 = vpack.c.bf16 %v877, %v876
        %v897 = vpack.c.bf16 %v879, %v878
        %v898 = vpack.c.bf16 %v881, %v880
        %v899 = vpack.c.bf16 %v883, %v882
        %v900 = vld [vmem:[#allocation8] sm:$0xf]
        %v901 = vld [vmem:[#allocation8 + $0x4] sm:$0xf]
        %v902 = vld [vmem:[#allocation8 + $0x8] sm:$0xf]
        %v903 = vld [vmem:[#allocation8 + $0xc] sm:$0xf]
        %v904 = vld [vmem:[#allocation8 + $0x10] sm:$0xf]
        %v905 = vld [vmem:[#allocation8 + $0x14] sm:$0xf]
        %v906 = vld [vmem:[#allocation8 + $0x18] sm:$0xf]
        %v907 = vld [vmem:[#allocation8 + $0x1c] sm:$0xf]
        %v908 = vld [vmem:[#allocation8 + $0x20] sm:$0xf]
        %v909 = vld [vmem:[#allocation8 + $0x24] sm:$0xf]
        %v910 = vld [vmem:[#allocation8 + $0x28] sm:$0xf]
        %v911 = vld [vmem:[#allocation8 + $0x2c] sm:$0xf]
        %v912 = vld [vmem:[#allocation8 + $0x30] sm:$0xf]
        %v913 = vld [vmem:[#allocation8 + $0x34] sm:$0xf]
        %v914 = vld [vmem:[#allocation8 + $0x38] sm:$0xf]
        %v915 = vld [vmem:[#allocation8 + $0x3c] sm:$0xf]
        %v916 = vld [vmem:[%s4] sm:$0x1]
        %v918 = vlaneseq
        %v919 = vshrl.u32 %v918, 7
        %v920 = vsub.s32 0, %v919
        %v921 = vrot.slane %v916, %v920
        %v939 = vunpack.c.l.b16 %v900
        %v940 = vunpack.c.l.b16 %v901
        %v941 = vunpack.c.l.b16 %v902
        %v942 = vunpack.c.l.b16 %v903
        %v943 = vunpack.c.l.b16 %v904
        %v944 = vunpack.c.l.b16 %v905
        %v945 = vunpack.c.l.b16 %v906
        %v946 = vunpack.c.l.b16 %v907
        %v947 = vunpack.c.l.b16 %v908
        %v948 = vunpack.c.l.b16 %v909
        %v949 = vunpack.c.l.b16 %v910
        %v950 = vunpack.c.l.b16 %v911
        %v951 = vunpack.c.l.b16 %v912
        %v952 = vunpack.c.l.b16 %v913
        %v953 = vunpack.c.l.b16 %v914
        %v954 = vunpack.c.l.b16 %v915
        %v955 = vpack.c.b16 %v940, %v939
        %v956 = vpack.c.b16 %v942, %v941
        %v957 = vpack.c.b16 %v944, %v943
        %v958 = vpack.c.b16 %v946, %v945
        %v959 = vpack.c.b16 %v948, %v947
        %v960 = vpack.c.b16 %v950, %v949
        %v961 = vpack.c.b16 %v952, %v951
        %v962 = vpack.c.b16 %v954, %v953
        %971 = vmatprep.subr.bf16.mxu0 0
        %972 = vmatpush1.bf16.msra.mxu0 %v962
        %973 = vmatprep.subr.bf16.mxu0 0
        %974 = vmatpush1.bf16.msra.mxu0 %v961
        %975 = vmatprep.subr.bf16.mxu0 0
        %976 = vmatpush1.bf16.msra.mxu0 %v960
        %977 = vmatprep.subr.bf16.mxu0 0
        %978 = vmatpush1.bf16.msra.mxu0 %v959
        %979 = vmatprep.subr.bf16.mxu0 0
        %980 = vmatpush1.bf16.msra.mxu0 %v958
        %981 = vmatprep.subr.bf16.mxu0 0
        %982 = vmatpush1.bf16.msra.mxu0 %v957
        %983 = vmatprep.subr.bf16.mxu0 0
        %984 = vmatpush1.bf16.msra.mxu0 %v956
        %985 = vmatprep.subr.bf16.mxu0 0
        %986 = vmatpush1.bf16.msra.mxu0 %v955
        %987 = vmatprep.subr.bf16.mxu0 0
        %988 = vmatpush2.bf16.msra.mxu0 0
        %989 = vmatprep.subr.bf16.mxu0 0
        %990 = vmatpush2.bf16.msra.mxu0 0
        %991 = vmatprep.subr.bf16.mxu0 0
        %992 = vmatpush2.bf16.msra.mxu0 0
        %993 = vmatprep.subr.bf16.mxu0 0
        %994 = vmatpush2.bf16.msra.mxu0 0
        %995 = vmatprep.subr.bf16.mxu0 0
        %996 = vmatpush2.bf16.msra.mxu0 0
        %997 = vmatprep.subr.bf16.mxu0 0
        %998 = vmatpush2.bf16.msra.mxu0 0
        %999 = vmatprep.subr.bf16.mxu0 0
        %1000 = vmatpush2.bf16.msra.mxu0 0
        %1001 = vmatprep.subr.bf16.mxu0 0
        %1002 = vmatpush2.bf16.msra.mxu0 0
        %1003 = vmatprep.mubr.bf16.mxu0 0
        %1004 = vmatmul.mubr.bf16.gmra.mxu0 %v884
        %v1005 = vpop.f32.mrf.mxu0
        %v1006 = vadd.f32 %v921, %v1005
        %v1007 = vpop.f32.mrf.mxu0
        %v1008 = vpop.f32.mrf.mxu0
        %v1009 = vadd.f32 %v921, %v1008
        %v1010 = vpop.f32.mrf.mxu0
        %1011 = vmatprep.mubr.bf16.mxu0 0
        %1012 = vmatmul.mubr.bf16.gmra.mxu0 %v885
        %v1013 = vpop.f32.mrf.mxu0
        %v1014 = vadd.f32 %v921, %v1013
        %v1015 = vpop.f32.mrf.mxu0
        %v1016 = vpop.f32.mrf.mxu0
        %v1017 = vadd.f32 %v921, %v1016
        %v1018 = vpop.f32.mrf.mxu0
        %1019 = vmatprep.mubr.bf16.mxu0 0
        %1020 = vmatmul.mubr.bf16.gmra.mxu0 %v886
        %v1021 = vpop.f32.mrf.mxu0
        %v1022 = vadd.f32 %v921, %v1021
        %v1023 = vpop.f32.mrf.mxu0
        %v1024 = vpop.f32.mrf.mxu0
        %v1025 = vadd.f32 %v921, %v1024
        %v1026 = vpop.f32.mrf.mxu0
        %1027 = vmatprep.mubr.bf16.mxu0 0
        %1028 = vmatmul.mubr.bf16.gmra.mxu0 %v887
        %v1029 = vpop.f32.mrf.mxu0
        %v1030 = vadd.f32 %v921, %v1029
        %v1031 = vpop.f32.mrf.mxu0
        %v1032 = vpop.f32.mrf.mxu0
        %v1033 = vadd.f32 %v921, %v1032
        %v1034 = vpop.f32.mrf.mxu0
        %1035 = vmatprep.mubr.bf16.mxu0 0
        %1036 = vmatmul.mubr.bf16.gmra.mxu0 %v888
        %v1037 = vpop.f32.mrf.mxu0
        %v1038 = vadd.f32 %v921, %v1037
        %v1039 = vpop.f32.mrf.mxu0
        %v1040 = vpop.f32.mrf.mxu0
        %v1041 = vadd.f32 %v921, %v1040
        %v1042 = vpop.f32.mrf.mxu0
        %1043 = vmatprep.mubr.bf16.mxu0 0
        %1044 = vmatmul.mubr.bf16.gmra.mxu0 %v889
        %v1045 = vpop.f32.mrf.mxu0
        %v1046 = vadd.f32 %v921, %v1045
        %v1047 = vpop.f32.mrf.mxu0
        %v1048 = vpop.f32.mrf.mxu0
        %v1049 = vadd.f32 %v921, %v1048
        %v1050 = vpop.f32.mrf.mxu0
        %1051 = vmatprep.mubr.bf16.mxu0 0
        %1052 = vmatmul.mubr.bf16.gmra.mxu0 %v890
        %v1053 = vpop.f32.mrf.mxu0
        %v1054 = vadd.f32 %v921, %v1053
        %v1055 = vpop.f32.mrf.mxu0
        %v1056 = vpop.f32.mrf.mxu0
        %v1057 = vadd.f32 %v921, %v1056
        %v1058 = vpop.f32.mrf.mxu0
        %1059 = vmatprep.mubr.bf16.mxu0 0
        %1060 = vmatmul.mubr.bf16.gmra.mxu0 %v891
        %v1061 = vpop.f32.mrf.mxu0
        %v1062 = vadd.f32 %v921, %v1061
        %v1063 = vpop.f32.mrf.mxu0
        %v1064 = vpop.f32.mrf.mxu0
        %v1065 = vadd.f32 %v921, %v1064
        %v1066 = vpop.f32.mrf.mxu0
        %1067 = vmatprep.mubr.bf16.mxu0 0
        %1068 = vmatmul.mubr.bf16.gmra.mxu0 %v892
        %v1069 = vpop.f32.mrf.mxu0
        %v1070 = vadd.f32 %v921, %v1069
        %v1071 = vpop.f32.mrf.mxu0
        %v1072 = vpop.f32.mrf.mxu0
        %v1073 = vadd.f32 %v921, %v1072
        %v1074 = vpop.f32.mrf.mxu0
        %1075 = vmatprep.mubr.bf16.mxu0 0
        %1076 = vmatmul.mubr.bf16.gmra.mxu0 %v893
        %v1077 = vpop.f32.mrf.mxu0
        %v1078 = vadd.f32 %v921, %v1077
        %v1079 = vpop.f32.mrf.mxu0
        %v1080 = vpop.f32.mrf.mxu0
        %v1081 = vadd.f32 %v921, %v1080
        %v1082 = vpop.f32.mrf.mxu0
        %1083 = vmatprep.mubr.bf16.mxu0 0
        %1084 = vmatmul.mubr.bf16.gmra.mxu0 %v894
        %v1085 = vpop.f32.mrf.mxu0
        %v1086 = vadd.f32 %v921, %v1085
        %v1087 = vpop.f32.mrf.mxu0
        %v1088 = vpop.f32.mrf.mxu0
        %v1089 = vadd.f32 %v921, %v1088
        %v1090 = vpop.f32.mrf.mxu0
        %1091 = vmatprep.mubr.bf16.mxu0 0
        %1092 = vmatmul.mubr.bf16.gmra.mxu0 %v895
        %v1093 = vpop.f32.mrf.mxu0
        %v1094 = vadd.f32 %v921, %v1093
        %v1095 = vpop.f32.mrf.mxu0
        %v1096 = vpop.f32.mrf.mxu0
        %v1097 = vadd.f32 %v921, %v1096
        %v1098 = vpop.f32.mrf.mxu0
        %1099 = vmatprep.mubr.bf16.mxu0 0
        %1100 = vmatmul.mubr.bf16.gmra.mxu0 %v896
        %v1101 = vpop.f32.mrf.mxu0
        %v1102 = vadd.f32 %v921, %v1101
        %v1103 = vpop.f32.mrf.mxu0
        %v1104 = vpop.f32.mrf.mxu0
        %v1105 = vadd.f32 %v921, %v1104
        %v1106 = vpop.f32.mrf.mxu0
        %1107 = vmatprep.mubr.bf16.mxu0 0
        %1108 = vmatmul.mubr.bf16.gmra.mxu0 %v897
        %v1109 = vpop.f32.mrf.mxu0
        %v1110 = vadd.f32 %v921, %v1109
        %v1111 = vpop.f32.mrf.mxu0
        %v1112 = vpop.f32.mrf.mxu0
        %v1113 = vadd.f32 %v921, %v1112
        %v1114 = vpop.f32.mrf.mxu0
        %1115 = vmatprep.mubr.bf16.mxu0 0
        %1116 = vmatmul.mubr.bf16.gmra.mxu0 %v898
        %v1117 = vpop.f32.mrf.mxu0
        %v1118 = vadd.f32 %v921, %v1117
        %v1119 = vpop.f32.mrf.mxu0
        %v1120 = vpop.f32.mrf.mxu0
        %v1121 = vadd.f32 %v921, %v1120
        %v1122 = vpop.f32.mrf.mxu0
        %1123 = vmatprep.mubr.bf16.mxu0 0
        %1124 = vmatmul.mubr.bf16.gmra.mxu0 %v899
        %v1125 = vpop.f32.mrf.mxu0
        %v1126 = vadd.f32 %v921, %v1125
        %v1127 = vpop.f32.mrf.mxu0
        %v1128 = vpop.f32.mrf.mxu0
        %v1129 = vadd.f32 %v921, %v1128
        %v1130 = vpop.f32.mrf.mxu0
        %1131 = vdwg.mxu0
        %v1132 = vld [vmem:[#allocation10] sm:$0xf]
        %v1133 = vld [vmem:[#allocation10 + $0x4] sm:$0xf]
        %v1134 = vld [vmem:[#allocation10 + $0x8] sm:$0xf]
        %v1135 = vld [vmem:[#allocation10 + $0xc] sm:$0xf]
        %v1136 = vld [vmem:[#allocation10 + $0x10] sm:$0xf]
        %v1137 = vld [vmem:[#allocation10 + $0x14] sm:$0xf]
        %v1138 = vld [vmem:[#allocation10 + $0x18] sm:$0xf]
        %v1139 = vld [vmem:[#allocation10 + $0x1c] sm:$0xf]
        %v1140 = vld [vmem:[#allocation10 + $0x20] sm:$0xf]
        %v1141 = vld [vmem:[#allocation10 + $0x24] sm:$0xf]
        %v1142 = vld [vmem:[#allocation10 + $0x28] sm:$0xf]
        %v1143 = vld [vmem:[#allocation10 + $0x2c] sm:$0xf]
        %v1144 = vld [vmem:[#allocation10 + $0x30] sm:$0xf]
        %v1145 = vld [vmem:[#allocation10 + $0x34] sm:$0xf]
        %v1146 = vld [vmem:[#allocation10 + $0x38] sm:$0xf]
        %v1147 = vld [vmem:[#allocation10 + $0x3c] sm:$0xf]
        %v1148 = vld [vmem:[#allocation10 + $0x40] sm:$0xf]
        %v1149 = vld [vmem:[#allocation10 + $0x44] sm:$0xf]
        %v1150 = vld [vmem:[#allocation10 + $0x48] sm:$0xf]
        %v1151 = vld [vmem:[#allocation10 + $0x4c] sm:$0xf]
        %v1152 = vld [vmem:[#allocation10 + $0x50] sm:$0xf]
        %v1153 = vld [vmem:[#allocation10 + $0x54] sm:$0xf]
        %v1154 = vld [vmem:[#allocation10 + $0x58] sm:$0xf]
        %v1155 = vld [vmem:[#allocation10 + $0x5c] sm:$0xf]
        %v1156 = vld [vmem:[#allocation10 + $0x60] sm:$0xf]
        %v1157 = vld [vmem:[#allocation10 + $0x64] sm:$0xf]
        %v1158 = vld [vmem:[#allocation10 + $0x68] sm:$0xf]
        %v1159 = vld [vmem:[#allocation10 + $0x6c] sm:$0xf]
        %v1160 = vld [vmem:[#allocation10 + $0x70] sm:$0xf]
        %v1161 = vld [vmem:[#allocation10 + $0x74] sm:$0xf]
        %v1162 = vld [vmem:[#allocation10 + $0x78] sm:$0xf]
        %v1163 = vld [vmem:[#allocation10 + $0x7c] sm:$0xf]
        %v1196 = vunpack.c.l.b16 %v332
        %v1197 = vunpack.c.h.b16 %v332
        %v1198 = vunpack.c.l.b16 %v333
        %v1199 = vunpack.c.h.b16 %v333
        %v1200 = vunpack.c.l.b16 %v334
        %v1201 = vunpack.c.h.b16 %v334
        %v1202 = vunpack.c.l.b16 %v335
        %v1203 = vunpack.c.h.b16 %v335
        %v1204 = vunpack.c.l.b16 %v336
        %v1205 = vunpack.c.h.b16 %v336
        %v1206 = vunpack.c.l.b16 %v337
        %v1207 = vunpack.c.h.b16 %v337
        %v1208 = vunpack.c.l.b16 %v338
        %v1209 = vunpack.c.h.b16 %v338
        %v1210 = vunpack.c.l.b16 %v339
        %v1211 = vunpack.c.h.b16 %v339
        %v1212 = vunpack.c.l.b16 %v340
        %v1213 = vunpack.c.h.b16 %v340
        %v1214 = vunpack.c.l.b16 %v341
        %v1215 = vunpack.c.h.b16 %v341
        %v1216 = vunpack.c.l.b16 %v342
        %v1217 = vunpack.c.h.b16 %v342
        %v1218 = vunpack.c.l.b16 %v343
        %v1219 = vunpack.c.h.b16 %v343
        %v1220 = vunpack.c.l.b16 %v344
        %v1221 = vunpack.c.h.b16 %v344
        %v1222 = vunpack.c.l.b16 %v345
        %v1223 = vunpack.c.h.b16 %v345
        %v1224 = vunpack.c.l.b16 %v346
        %v1225 = vunpack.c.h.b16 %v346
        %v1226 = vunpack.c.l.b16 %v347
        %v1227 = vunpack.c.h.b16 %v347
        %v1228 = vunpack.c.l.b16 %v348
        %v1229 = vunpack.c.h.b16 %v348
        %v1230 = vunpack.c.l.b16 %v349
        %v1231 = vunpack.c.h.b16 %v349
        %v1232 = vunpack.c.l.b16 %v350
        %v1233 = vunpack.c.h.b16 %v350
        %v1234 = vunpack.c.l.b16 %v351
        %v1235 = vunpack.c.h.b16 %v351
        %v1236 = vunpack.c.l.b16 %v352
        %v1237 = vunpack.c.h.b16 %v352
        %v1238 = vunpack.c.l.b16 %v353
        %v1239 = vunpack.c.h.b16 %v353
        %v1240 = vunpack.c.l.b16 %v354
        %v1241 = vunpack.c.h.b16 %v354
        %v1242 = vunpack.c.l.b16 %v355
        %v1243 = vunpack.c.h.b16 %v355
        %v1244 = vunpack.c.l.b16 %v356
        %v1245 = vunpack.c.h.b16 %v356
        %v1246 = vunpack.c.l.b16 %v357
        %v1247 = vunpack.c.h.b16 %v357
        %v1248 = vunpack.c.l.b16 %v358
        %v1249 = vunpack.c.h.b16 %v358
        %v1250 = vunpack.c.l.b16 %v359
        %v1251 = vunpack.c.h.b16 %v359
        %v1252 = vunpack.c.l.b16 %v360
        %v1253 = vunpack.c.h.b16 %v360
        %v1254 = vunpack.c.l.b16 %v361
        %v1255 = vunpack.c.h.b16 %v361
        %v1256 = vunpack.c.l.b16 %v362
        %v1257 = vunpack.c.h.b16 %v362
        %v1258 = vunpack.c.l.b16 %v363
        %v1259 = vunpack.c.h.b16 %v363
        %v1260 = vpack.c.b16 %v1198, %v1196
        %v1261 = vpack.c.b16 %v1199, %v1197
        %v1262 = vpack.c.b16 %v1202, %v1200
        %v1263 = vpack.c.b16 %v1203, %v1201
        %v1264 = vpack.c.b16 %v1206, %v1204
        %v1265 = vpack.c.b16 %v1207, %v1205
        %v1266 = vpack.c.b16 %v1210, %v1208
        %v1267 = vpack.c.b16 %v1211, %v1209
        %v1268 = vpack.c.b16 %v1214, %v1212
        %v1269 = vpack.c.b16 %v1215, %v1213
        %v1270 = vpack.c.b16 %v1218, %v1216
        %v1271 = vpack.c.b16 %v1219, %v1217
        %v1272 = vpack.c.b16 %v1222, %v1220
        %v1273 = vpack.c.b16 %v1223, %v1221
        %v1274 = vpack.c.b16 %v1226, %v1224
        %v1275 = vpack.c.b16 %v1227, %v1225
        %v1276 = vpack.c.b16 %v1230, %v1228
        %v1277 = vpack.c.b16 %v1231, %v1229
        %v1278 = vpack.c.b16 %v1234, %v1232
        %v1279 = vpack.c.b16 %v1235, %v1233
        %v1280 = vpack.c.b16 %v1238, %v1236
        %v1281 = vpack.c.b16 %v1239, %v1237
        %v1282 = vpack.c.b16 %v1242, %v1240
        %v1283 = vpack.c.b16 %v1243, %v1241
        %v1284 = vpack.c.b16 %v1246, %v1244
        %v1285 = vpack.c.b16 %v1247, %v1245
        %v1286 = vpack.c.b16 %v1250, %v1248
        %v1287 = vpack.c.b16 %v1251, %v1249
        %v1288 = vpack.c.b16 %v1254, %v1252
        %v1289 = vpack.c.b16 %v1255, %v1253
        %v1290 = vpack.c.b16 %v1258, %v1256
        %v1291 = vpack.c.b16 %v1259, %v1257
        %v1356 = vunpack.c.l.b16 %v1132
        %v1357 = vunpack.c.l.b16 %v1133
        %v1358 = vunpack.c.l.b16 %v1134
        %v1359 = vunpack.c.l.b16 %v1135
        %v1360 = vunpack.c.l.b16 %v1136
        %v1361 = vunpack.c.l.b16 %v1137
        %v1362 = vunpack.c.l.b16 %v1138
        %v1363 = vunpack.c.l.b16 %v1139
        %v1364 = vunpack.c.l.b16 %v1140
        %v1365 = vunpack.c.l.b16 %v1141
        %v1366 = vunpack.c.l.b16 %v1142
        %v1367 = vunpack.c.l.b16 %v1143
        %v1368 = vunpack.c.l.b16 %v1144
        %v1369 = vunpack.c.l.b16 %v1145
        %v1370 = vunpack.c.l.b16 %v1146
        %v1371 = vunpack.c.l.b16 %v1147
        %v1372 = vunpack.c.l.b16 %v1148
        %v1373 = vunpack.c.l.b16 %v1149
        %v1374 = vunpack.c.l.b16 %v1150
        %v1375 = vunpack.c.l.b16 %v1151
        %v1376 = vunpack.c.l.b16 %v1152
        %v1377 = vunpack.c.l.b16 %v1153
        %v1378 = vunpack.c.l.b16 %v1154
        %v1379 = vunpack.c.l.b16 %v1155
        %v1380 = vunpack.c.l.b16 %v1156
        %v1381 = vunpack.c.l.b16 %v1157
        %v1382 = vunpack.c.l.b16 %v1158
        %v1383 = vunpack.c.l.b16 %v1159
        %v1384 = vunpack.c.l.b16 %v1160
        %v1385 = vunpack.c.l.b16 %v1161
        %v1386 = vunpack.c.l.b16 %v1162
        %v1387 = vunpack.c.l.b16 %v1163
        %v1388 = vpack.c.b16 %v1357, %v1356
        %v1389 = vpack.c.b16 %v1359, %v1358
        %v1390 = vpack.c.b16 %v1361, %v1360
        %v1391 = vpack.c.b16 %v1363, %v1362
        %v1392 = vpack.c.b16 %v1365, %v1364
        %v1393 = vpack.c.b16 %v1367, %v1366
        %v1394 = vpack.c.b16 %v1369, %v1368
        %v1395 = vpack.c.b16 %v1371, %v1370
        %v1396 = vpack.c.b16 %v1373, %v1372
        %v1397 = vpack.c.b16 %v1375, %v1374
        %v1398 = vpack.c.b16 %v1377, %v1376
        %v1399 = vpack.c.b16 %v1379, %v1378
        %v1400 = vpack.c.b16 %v1381, %v1380
        %v1401 = vpack.c.b16 %v1383, %v1382
        %v1402 = vpack.c.b16 %v1385, %v1384
        %v1403 = vpack.c.b16 %v1387, %v1386
        %1420 = vmatprep.subr.bf16.mxu0 0
        %1421 = vmatpush1.bf16.msra.mxu0 %v1395
        %1422 = vmatprep.subr.bf16.mxu0 0
        %1423 = vmatpush1.bf16.msra.mxu0 %v1394
        %1424 = vmatprep.subr.bf16.mxu0 0
        %1425 = vmatpush1.bf16.msra.mxu0 %v1393
        %1426 = vmatprep.subr.bf16.mxu0 0
        %1427 = vmatpush1.bf16.msra.mxu0 %v1392
        %1428 = vmatprep.subr.bf16.mxu0 0
        %1429 = vmatpush1.bf16.msra.mxu0 %v1391
        %1430 = vmatprep.subr.bf16.mxu0 0
        %1431 = vmatpush1.bf16.msra.mxu0 %v1390
        %1432 = vmatprep.subr.bf16.mxu0 0
        %1433 = vmatpush1.bf16.msra.mxu0 %v1389
        %1434 = vmatprep.subr.bf16.mxu0 0
        %1435 = vmatpush1.bf16.msra.mxu0 %v1388
        %1436 = vmatprep.subr.bf16.mxu0 0
        %1437 = vmatpush2.bf16.msra.mxu0 %v1403
        %1438 = vmatprep.subr.bf16.mxu0 0
        %1439 = vmatpush2.bf16.msra.mxu0 %v1402
        %1440 = vmatprep.subr.bf16.mxu0 0
        %1441 = vmatpush2.bf16.msra.mxu0 %v1401
        %1442 = vmatprep.subr.bf16.mxu0 0
        %1443 = vmatpush2.bf16.msra.mxu0 %v1400
        %1444 = vmatprep.subr.bf16.mxu0 0
        %1445 = vmatpush2.bf16.msra.mxu0 %v1399
        %1446 = vmatprep.subr.bf16.mxu0 0
        %1447 = vmatpush2.bf16.msra.mxu0 %v1398
        %1448 = vmatprep.subr.bf16.mxu0 0
        %1449 = vmatpush2.bf16.msra.mxu0 %v1397
        %1450 = vmatprep.subr.bf16.mxu0 0
        %1451 = vmatpush2.bf16.msra.mxu0 %v1396
        %1452 = vmatprep.mubr.bf16.mxu0 %v1261
        %1453 = vmatmul.mubr.bf16.gmra.mxu0 %v1260
        %v1454 = vpop.f32.mrf.mxu0
        %v1455 = vadd.f32 %v1006, %v1454
        %v1456 = vpop.f32.mrf.mxu0
        %v1457 = vpop.f32.mrf.mxu0
        %v1458 = vadd.f32 %v1009, %v1457
        %v1459 = vpop.f32.mrf.mxu0
        %1460 = vmatprep.mubr.bf16.mxu0 %v1263
        %1461 = vmatmul.mubr.bf16.gmra.mxu0 %v1262
        %v1462 = vpop.f32.mrf.mxu0
        %v1463 = vadd.f32 %v1014, %v1462
        %v1464 = vpop.f32.mrf.mxu0
        %v1465 = vpop.f32.mrf.mxu0
        %v1466 = vadd.f32 %v1017, %v1465
        %v1467 = vpop.f32.mrf.mxu0
        %1468 = vmatprep.mubr.bf16.mxu0 %v1265
        %1469 = vmatmul.mubr.bf16.gmra.mxu0 %v1264
        %v1470 = vpop.f32.mrf.mxu0
        %v1471 = vadd.f32 %v1022, %v1470
        %v1472 = vpop.f32.mrf.mxu0
        %v1473 = vpop.f32.mrf.mxu0
        %v1474 = vadd.f32 %v1025, %v1473
        %v1475 = vpop.f32.mrf.mxu0
        %1476 = vmatprep.mubr.bf16.mxu0 %v1267
        %1477 = vmatmul.mubr.bf16.gmra.mxu0 %v1266
        %v1478 = vpop.f32.mrf.mxu0
        %v1479 = vadd.f32 %v1030, %v1478
        %v1480 = vpop.f32.mrf.mxu0
        %v1481 = vpop.f32.mrf.mxu0
        %v1482 = vadd.f32 %v1033, %v1481
        %v1483 = vpop.f32.mrf.mxu0
        %1484 = vmatprep.mubr.bf16.mxu0 %v1269
        %1485 = vmatmul.mubr.bf16.gmra.mxu0 %v1268
        %v1486 = vpop.f32.mrf.mxu0
        %v1487 = vadd.f32 %v1038, %v1486
        %v1488 = vpop.f32.mrf.mxu0
        %v1489 = vpop.f32.mrf.mxu0
        %v1490 = vadd.f32 %v1041, %v1489
        %v1491 = vpop.f32.mrf.mxu0
        %1492 = vmatprep.mubr.bf16.mxu0 %v1271
        %1493 = vmatmul.mubr.bf16.gmra.mxu0 %v1270
        %v1494 = vpop.f32.mrf.mxu0
        %v1495 = vadd.f32 %v1046, %v1494
        %v1496 = vpop.f32.mrf.mxu0
        %v1497 = vpop.f32.mrf.mxu0
        %v1498 = vadd.f32 %v1049, %v1497
        %v1499 = vpop.f32.mrf.mxu0
        %1500 = vmatprep.mubr.bf16.mxu0 %v1273
        %1501 = vmatmul.mubr.bf16.gmra.mxu0 %v1272
        %v1502 = vpop.f32.mrf.mxu0
        %v1503 = vadd.f32 %v1054, %v1502
        %v1504 = vpop.f32.mrf.mxu0
        %v1505 = vpop.f32.mrf.mxu0
        %v1506 = vadd.f32 %v1057, %v1505
        %v1507 = vpop.f32.mrf.mxu0
        %1508 = vmatprep.mubr.bf16.mxu0 %v1275
        %1509 = vmatmul.mubr.bf16.gmra.mxu0 %v1274
        %v1510 = vpop.f32.mrf.mxu0
        %v1511 = vadd.f32 %v1062, %v1510
        %v1512 = vpop.f32.mrf.mxu0
        %v1513 = vpop.f32.mrf.mxu0
        %v1514 = vadd.f32 %v1065, %v1513
        %v1515 = vpop.f32.mrf.mxu0
        %1516 = vmatprep.mubr.bf16.mxu0 %v1277
        %1517 = vmatmul.mubr.bf16.gmra.mxu0 %v1276
        %v1518 = vpop.f32.mrf.mxu0
        %v1519 = vadd.f32 %v1070, %v1518
        %v1520 = vpop.f32.mrf.mxu0
        %v1521 = vpop.f32.mrf.mxu0
        %v1522 = vadd.f32 %v1073, %v1521
        %v1523 = vpop.f32.mrf.mxu0
        %1524 = vmatprep.mubr.bf16.mxu0 %v1279
        %1525 = vmatmul.mubr.bf16.gmra.mxu0 %v1278
        %v1526 = vpop.f32.mrf.mxu0
        %v1527 = vadd.f32 %v1078, %v1526
        %v1528 = vpop.f32.mrf.mxu0
        %v1529 = vpop.f32.mrf.mxu0
        %v1530 = vadd.f32 %v1081, %v1529
        %v1531 = vpop.f32.mrf.mxu0
        %1532 = vmatprep.mubr.bf16.mxu0 %v1281
        %1533 = vmatmul.mubr.bf16.gmra.mxu0 %v1280
        %v1534 = vpop.f32.mrf.mxu0
        %v1535 = vadd.f32 %v1086, %v1534
        %v1536 = vpop.f32.mrf.mxu0
        %v1537 = vpop.f32.mrf.mxu0
        %v1538 = vadd.f32 %v1089, %v1537
        %v1539 = vpop.f32.mrf.mxu0
        %1540 = vmatprep.mubr.bf16.mxu0 %v1283
        %1541 = vmatmul.mubr.bf16.gmra.mxu0 %v1282
        %v1542 = vpop.f32.mrf.mxu0
        %v1543 = vadd.f32 %v1094, %v1542
        %v1544 = vpop.f32.mrf.mxu0
        %v1545 = vpop.f32.mrf.mxu0
        %v1546 = vadd.f32 %v1097, %v1545
        %v1547 = vpop.f32.mrf.mxu0
        %1548 = vmatprep.mubr.bf16.mxu0 %v1285
        %1549 = vmatmul.mubr.bf16.gmra.mxu0 %v1284
        %v1550 = vpop.f32.mrf.mxu0
        %v1551 = vadd.f32 %v1102, %v1550
        %v1552 = vpop.f32.mrf.mxu0
        %v1553 = vpop.f32.mrf.mxu0
        %v1554 = vadd.f32 %v1105, %v1553
        %v1555 = vpop.f32.mrf.mxu0
        %1556 = vmatprep.mubr.bf16.mxu0 %v1287
        %1557 = vmatmul.mubr.bf16.gmra.mxu0 %v1286
        %v1558 = vpop.f32.mrf.mxu0
        %v1559 = vadd.f32 %v1110, %v1558
        %v1560 = vpop.f32.mrf.mxu0
        %v1561 = vpop.f32.mrf.mxu0
        %v1562 = vadd.f32 %v1113, %v1561
        %v1563 = vpop.f32.mrf.mxu0
        %1564 = vmatprep.mubr.bf16.mxu0 %v1289
        %1565 = vmatmul.mubr.bf16.gmra.mxu0 %v1288
        %v1566 = vpop.f32.mrf.mxu0
        %v1567 = vadd.f32 %v1118, %v1566
        %v1568 = vpop.f32.mrf.mxu0
        %v1569 = vpop.f32.mrf.mxu0
        %v1570 = vadd.f32 %v1121, %v1569
        %v1571 = vpop.f32.mrf.mxu0
        %1572 = vmatprep.mubr.bf16.mxu0 %v1291
        %1573 = vmatmul.mubr.bf16.gmra.mxu0 %v1290
        %v1574 = vpop.f32.mrf.mxu0
        %v1575 = vadd.f32 %v1126, %v1574
        %v1576 = vpop.f32.mrf.mxu0
        %v1577 = vpop.f32.mrf.mxu0
        %v1578 = vadd.f32 %v1129, %v1577
        %v1579 = vpop.f32.mrf.mxu0
        %1580 = vdwg.mxu0
        %v1581 = vpack.c.bf16 %v1458, %v1455
        %v1582 = vpack.c.bf16 %v1466, %v1463
        %v1583 = vpack.c.bf16 %v1474, %v1471
        %v1584 = vpack.c.bf16 %v1482, %v1479
        %v1585 = vpack.c.bf16 %v1490, %v1487
        %v1586 = vpack.c.bf16 %v1498, %v1495
        %v1587 = vpack.c.bf16 %v1506, %v1503
        %v1588 = vpack.c.bf16 %v1514, %v1511
        %v1589 = vpack.c.bf16 %v1522, %v1519
        %v1590 = vpack.c.bf16 %v1530, %v1527
        %v1591 = vpack.c.bf16 %v1538, %v1535
        %v1592 = vpack.c.bf16 %v1546, %v1543
        %v1593 = vpack.c.bf16 %v1554, %v1551
        %v1594 = vpack.c.bf16 %v1562, %v1559
        %v1595 = vpack.c.bf16 %v1570, %v1567
        %v1596 = vpack.c.bf16 %v1578, %v1575
        %v1597 = vmax.bf16 %v1581, 0
        %v1598 = vmax.bf16 %v1582, 0
        %v1599 = vmax.bf16 %v1583, 0
        %v1600 = vmax.bf16 %v1584, 0
        %v1601 = vmax.bf16 %v1585, 0
        %v1602 = vmax.bf16 %v1586, 0
        %v1603 = vmax.bf16 %v1587, 0
        %v1604 = vmax.bf16 %v1588, 0
        %v1605 = vmax.bf16 %v1589, 0
        %v1606 = vmax.bf16 %v1590, 0
        %v1607 = vmax.bf16 %v1591, 0
        %v1608 = vmax.bf16 %v1592, 0
        %v1609 = vmax.bf16 %v1593, 0
        %v1610 = vmax.bf16 %v1594, 0
        %v1611 = vmax.bf16 %v1595, 0
        %v1612 = vmax.bf16 %v1596, 0
        %v1613 = vmax.bf16 %v1581, %v1583
        %v1614 = vmax.bf16 %v1582, %v1584
        %v1615 = vmax.bf16 %v1613, %v1585
        %v1616 = vmax.bf16 %v1614, %v1586
        %v1617 = vmax.bf16 %v1615, %v1587
        %v1618 = vmax.bf16 %v1616, %v1588
        %v1619 = vmax.bf16 %v1617, %v1618
        %v1620 = vunpack.i.l.bf16 %v1619
        %v1621 = vunpack.i.h.bf16 %v1619
        %v1622 = vmax.f32 %v1620, %v1621
        %v1623 = vrot.slane %v1622, 4
        %v1624 = vmax.f32 %v1622, %v1623
        %v1625 = vrot.slane %v1624, 2
        %v1626 = vmax.f32 %v1624, %v1625
        %v1627 = vrot.slane %v1626, 1
        %v1628 = vmax.f32 %v1626, %v1627
        %v1629 = vpack.i.bf16 %v1628, %v1628
        %v1630 = vmax.bf16 %v1589, %v1591
        %v1631 = vmax.bf16 %v1590, %v1592
        %v1632 = vmax.bf16 %v1630, %v1593
        %v1633 = vmax.bf16 %v1631, %v1594
        %v1634 = vmax.bf16 %v1632, %v1595
        %v1635 = vmax.bf16 %v1633, %v1596
        %v1636 = vmax.bf16 %v1634, %v1635
        %v1637 = vunpack.i.l.bf16 %v1636
        %v1638 = vunpack.i.h.bf16 %v1636
        %v1639 = vmax.f32 %v1637, %v1638
        %v1640 = vrot.slane %v1639, 4
        %v1641 = vmax.f32 %v1639, %v1640
        %v1642 = vrot.slane %v1641, 2
        %v1643 = vmax.f32 %v1641, %v1642
        %v1644 = vrot.slane %v1643, 1
        %v1645 = vmax.f32 %v1643, %v1644
        %v1646 = vpack.i.bf16 %v1645, %v1645
        %v1647 = vmax.bf16 %v1629, 0
        %v1648 = vmax.bf16 %v1646, 0
        %s1649 = scalar_lea.vmem [#allocation5], 128
        %v1650 = vld [vmem:[%s1649 + $0x40] sm:$0xf]
        %v1651 = vld [vmem:[%s1649 + $0x44] sm:$0xf]
        %v1652 = vld [vmem:[%s1649 + $0x48] sm:$0xf]
        %v1653 = vld [vmem:[%s1649 + $0x4c] sm:$0xf]
        %v1654 = vld [vmem:[%s1649 + $0x50] sm:$0xf]
        %v1655 = vld [vmem:[%s1649 + $0x54] sm:$0xf]
        %v1656 = vld [vmem:[%s1649 + $0x58] sm:$0xf]
        %v1657 = vld [vmem:[%s1649 + $0x5c] sm:$0xf]
        %v1658 = vld [vmem:[%s1649 + $0x60] sm:$0xf]
        %v1659 = vld [vmem:[%s1649 + $0x64] sm:$0xf]
        %v1660 = vld [vmem:[%s1649 + $0x68] sm:$0xf]
        %v1661 = vld [vmem:[%s1649 + $0x6c] sm:$0xf]
        %v1662 = vld [vmem:[%s1649 + $0x70] sm:$0xf]
        %v1663 = vld [vmem:[%s1649 + $0x74] sm:$0xf]
        %v1664 = vld [vmem:[%s1649 + $0x78] sm:$0xf]
        %v1665 = vld [vmem:[%s1649 + $0x7c] sm:$0xf]
        %s1666 = scalar_lea.vmem [#allocation7], 1
        %v1667 = vld [vmem:[%s1666] sm:$0x1]
        %v1669 = vlaneseq
        %v1670 = vshrl.u32 %v1669, 7
        %v1671 = vsub.s32 0, %v1670
        %v1672 = vrot.slane %v1667, %v1671
        %v1676 = vunpack.c.l.b16 %v1647
        %v1677 = vunpack.c.l.b16 %v1648
        %vm1678 = vcmask 1041409
        %v1679 = vsel %vm1678, %v1677, %v1676
        %v1680 = vpack.c.b16 %v1679, %v1679
        %v1698 = vunpack.c.l.b16 %v1650
        %v1699 = vunpack.c.l.b16 %v1651
        %v1700 = vunpack.c.l.b16 %v1652
        %v1701 = vunpack.c.l.b16 %v1653
        %v1702 = vunpack.c.l.b16 %v1654
        %v1703 = vunpack.c.l.b16 %v1655
        %v1704 = vunpack.c.l.b16 %v1656
        %v1705 = vunpack.c.l.b16 %v1657
        %v1706 = vunpack.c.l.b16 %v1658
        %v1707 = vunpack.c.l.b16 %v1659
        %v1708 = vunpack.c.l.b16 %v1660
        %v1709 = vunpack.c.l.b16 %v1661
        %v1710 = vunpack.c.l.b16 %v1662
        %v1711 = vunpack.c.l.b16 %v1663
        %v1712 = vunpack.c.l.b16 %v1664
        %v1713 = vunpack.c.l.b16 %v1665
        %v1714 = vpack.c.b16 %v1699, %v1698
        %v1715 = vpack.c.b16 %v1701, %v1700
        %v1716 = vpack.c.b16 %v1703, %v1702
        %v1717 = vpack.c.b16 %v1705, %v1704
        %v1718 = vpack.c.b16 %v1707, %v1706
        %v1719 = vpack.c.b16 %v1709, %v1708
        %v1720 = vpack.c.b16 %v1711, %v1710
        %v1721 = vpack.c.b16 %v1713, %v1712
        %1730 = vmatprep.subr.bf16.mxu0 0
        %1731 = vmatpush1.bf16.msra.mxu0 %v1721
        %1732 = vmatprep.subr.bf16.mxu0 0
        %1733 = vmatpush1.bf16.msra.mxu0 %v1720
        %1734 = vmatprep.subr.bf16.mxu0 0
        %1735 = vmatpush1.bf16.msra.mxu0 %v1719
        %1736 = vmatprep.subr.bf16.mxu0 0
        %1737 = vmatpush1.bf16.msra.mxu0 %v1718
        %1738 = vmatprep.subr.bf16.mxu0 0
        %1739 = vmatpush1.bf16.msra.mxu0 %v1717
        %1740 = vmatprep.subr.bf16.mxu0 0
        %1741 = vmatpush1.bf16.msra.mxu0 %v1716
        %1742 = vmatprep.subr.bf16.mxu0 0
        %1743 = vmatpush1.bf16.msra.mxu0 %v1715
        %1744 = vmatprep.subr.bf16.mxu0 0
        %1745 = vmatpush1.bf16.msra.mxu0 %v1714
        %1746 = vmatprep.subr.bf16.mxu0 0
        %1747 = vmatpush2.bf16.msra.mxu0 0
        %1748 = vmatprep.subr.bf16.mxu0 0
        %1749 = vmatpush2.bf16.msra.mxu0 0
        %1750 = vmatprep.subr.bf16.mxu0 0
        %1751 = vmatpush2.bf16.msra.mxu0 0
        %1752 = vmatprep.subr.bf16.mxu0 0
        %1753 = vmatpush2.bf16.msra.mxu0 0
        %1754 = vmatprep.subr.bf16.mxu0 0
        %1755 = vmatpush2.bf16.msra.mxu0 0
        %1756 = vmatprep.subr.bf16.mxu0 0
        %1757 = vmatpush2.bf16.msra.mxu0 0
        %1758 = vmatprep.subr.bf16.mxu0 0
        %1759 = vmatpush2.bf16.msra.mxu0 0
        %1760 = vmatprep.subr.bf16.mxu0 0
        %1761 = vmatpush2.bf16.msra.mxu0 0
        %1762 = vmatprep.mubr.bf16.mxu0 0
        %1763 = vmatmul.mubr.bf16.gmra.mxu0 %v1680
        %v1764 = vpop.f32.mrf.mxu0
        %v1765 = vadd.f32 %v1672, %v1764
        %v1766 = vpop.f32.mrf.mxu0
        %v1767 = vpop.f32.mrf.mxu0
        %v1768 = vpop.f32.mrf.mxu0
        %1769 = vdwg.mxu0
        %v1770 = vld [vmem:[%s1649] sm:$0xf]
        %v1771 = vld [vmem:[%s1649 + $0x4] sm:$0xf]
        %v1772 = vld [vmem:[%s1649 + $0x8] sm:$0xf]
        %v1773 = vld [vmem:[%s1649 + $0xc] sm:$0xf]
        %v1774 = vld [vmem:[%s1649 + $0x10] sm:$0xf]
        %v1775 = vld [vmem:[%s1649 + $0x14] sm:$0xf]
        %v1776 = vld [vmem:[%s1649 + $0x18] sm:$0xf]
        %v1777 = vld [vmem:[%s1649 + $0x1c] sm:$0xf]
        %v1778 = vld [vmem:[%s1649 + $0x20] sm:$0xf]
        %v1779 = vld [vmem:[%s1649 + $0x24] sm:$0xf]
        %v1780 = vld [vmem:[%s1649 + $0x28] sm:$0xf]
        %v1781 = vld [vmem:[%s1649 + $0x2c] sm:$0xf]
        %v1782 = vld [vmem:[%s1649 + $0x30] sm:$0xf]
        %v1783 = vld [vmem:[%s1649 + $0x34] sm:$0xf]
        %v1784 = vld [vmem:[%s1649 + $0x38] sm:$0xf]
        %v1785 = vld [vmem:[%s1649 + $0x3c] sm:$0xf]
        %v1802 = vunpack.c.l.b16 %v1770
        %v1803 = vunpack.c.l.b16 %v1771
        %v1804 = vunpack.c.l.b16 %v1772
        %v1805 = vunpack.c.l.b16 %v1773
        %v1806 = vunpack.c.l.b16 %v1774
        %v1807 = vunpack.c.l.b16 %v1775
        %v1808 = vunpack.c.l.b16 %v1776
        %v1809 = vunpack.c.l.b16 %v1777
        %v1810 = vunpack.c.l.b16 %v1778
        %v1811 = vunpack.c.l.b16 %v1779
        %v1812 = vunpack.c.l.b16 %v1780
        %v1813 = vunpack.c.l.b16 %v1781
        %v1814 = vunpack.c.l.b16 %v1782
        %v1815 = vunpack.c.l.b16 %v1783
        %v1816 = vunpack.c.l.b16 %v1784
        %v1817 = vunpack.c.l.b16 %v1785
        %v1818 = vpack.c.b16 %v1803, %v1802
        %v1819 = vpack.c.b16 %v1805, %v1804
        %v1820 = vpack.c.b16 %v1807, %v1806
        %v1821 = vpack.c.b16 %v1809, %v1808
        %v1822 = vpack.c.b16 %v1811, %v1810
        %v1823 = vpack.c.b16 %v1813, %v1812
        %v1824 = vpack.c.b16 %v1815, %v1814
        %v1825 = vpack.c.b16 %v1817, %v1816
        %1834 = vmatprep.subr.bf16.mxu0 0
        %1835 = vmatpush1.bf16.msra.mxu0 %v1825
        %1836 = vmatprep.subr.bf16.mxu0 0
        %1837 = vmatpush1.bf16.msra.mxu0 %v1824
        %1838 = vmatprep.subr.bf16.mxu0 0
        %1839 = vmatpush1.bf16.msra.mxu0 %v1823
        %1840 = vmatprep.subr.bf16.mxu0 0
        %1841 = vmatpush1.bf16.msra.mxu0 %v1822
        %1842 = vmatprep.subr.bf16.mxu0 0
        %1843 = vmatpush1.bf16.msra.mxu0 %v1821
        %1844 = vmatprep.subr.bf16.mxu0 0
        %1845 = vmatpush1.bf16.msra.mxu0 %v1820
        %1846 = vmatprep.subr.bf16.mxu0 0
        %1847 = vmatpush1.bf16.msra.mxu0 %v1819
        %1848 = vmatprep.subr.bf16.mxu0 0
        %1849 = vmatpush1.bf16.msra.mxu0 %v1818
        %1850 = vmatprep.subr.bf16.mxu0 0
        %1851 = vmatpush2.bf16.msra.mxu0 0
        %1852 = vmatprep.subr.bf16.mxu0 0
        %1853 = vmatpush2.bf16.msra.mxu0 0
        %1854 = vmatprep.subr.bf16.mxu0 0
        %1855 = vmatpush2.bf16.msra.mxu0 0
        %1856 = vmatprep.subr.bf16.mxu0 0
        %1857 = vmatpush2.bf16.msra.mxu0 0
        %1858 = vmatprep.subr.bf16.mxu0 0
        %1859 = vmatpush2.bf16.msra.mxu0 0
        %1860 = vmatprep.subr.bf16.mxu0 0
        %1861 = vmatpush2.bf16.msra.mxu0 0
        %1862 = vmatprep.subr.bf16.mxu0 0
        %1863 = vmatpush2.bf16.msra.mxu0 0
        %1864 = vmatprep.subr.bf16.mxu0 0
        %1865 = vmatpush2.bf16.msra.mxu0 0
        %1866 = vmatprep.mubr.bf16.mxu0 0
        %1867 = vmatmul.mubr.bf16.gmra.mxu0 %v1597
        %v1868 = vpop.f32.mrf.mxu0
        %v1869 = vadd.f32 0.0, %v1868
        %v1870 = vpop.f32.mrf.mxu0
        %v1871 = vpop.f32.mrf.mxu0
        %v1872 = vadd.f32 0.0, %v1871
        %v1873 = vpop.f32.mrf.mxu0
        %1874 = vmatprep.mubr.bf16.mxu0 0
        %1875 = vmatmul.mubr.bf16.gmra.mxu0 %v1598
        %v1876 = vpop.f32.mrf.mxu0
        %v1877 = vadd.f32 0.0, %v1876
        %v1878 = vpop.f32.mrf.mxu0
        %v1879 = vpop.f32.mrf.mxu0
        %v1880 = vadd.f32 0.0, %v1879
        %v1881 = vpop.f32.mrf.mxu0
        %1882 = vmatprep.mubr.bf16.mxu0 0
        %1883 = vmatmul.mubr.bf16.gmra.mxu0 %v1599
        %v1884 = vpop.f32.mrf.mxu0
        %v1885 = vadd.f32 0.0, %v1884
        %v1886 = vpop.f32.mrf.mxu0
        %v1887 = vpop.f32.mrf.mxu0
        %v1888 = vadd.f32 0.0, %v1887
        %v1889 = vpop.f32.mrf.mxu0
        %1890 = vmatprep.mubr.bf16.mxu0 0
        %1891 = vmatmul.mubr.bf16.gmra.mxu0 %v1600
        %v1892 = vpop.f32.mrf.mxu0
        %v1893 = vadd.f32 0.0, %v1892
        %v1894 = vpop.f32.mrf.mxu0
        %v1895 = vpop.f32.mrf.mxu0
        %v1896 = vadd.f32 0.0, %v1895
        %v1897 = vpop.f32.mrf.mxu0
        %1898 = vmatprep.mubr.bf16.mxu0 0
        %1899 = vmatmul.mubr.bf16.gmra.mxu0 %v1601
        %v1900 = vpop.f32.mrf.mxu0
        %v1901 = vadd.f32 0.0, %v1900
        %v1902 = vpop.f32.mrf.mxu0
        %v1903 = vpop.f32.mrf.mxu0
        %v1904 = vadd.f32 0.0, %v1903
        %v1905 = vpop.f32.mrf.mxu0
        %1906 = vmatprep.mubr.bf16.mxu0 0
        %1907 = vmatmul.mubr.bf16.gmra.mxu0 %v1602
        %v1908 = vpop.f32.mrf.mxu0
        %v1909 = vadd.f32 0.0, %v1908
        %v1910 = vpop.f32.mrf.mxu0
        %v1911 = vpop.f32.mrf.mxu0
        %v1912 = vadd.f32 0.0, %v1911
        %v1913 = vpop.f32.mrf.mxu0
        %1914 = vmatprep.mubr.bf16.mxu0 0
        %1915 = vmatmul.mubr.bf16.gmra.mxu0 %v1603
        %v1916 = vpop.f32.mrf.mxu0
        %v1917 = vadd.f32 0.0, %v1916
        %v1918 = vpop.f32.mrf.mxu0
        %v1919 = vpop.f32.mrf.mxu0
        %v1920 = vadd.f32 0.0, %v1919
        %v1921 = vpop.f32.mrf.mxu0
        %1922 = vmatprep.mubr.bf16.mxu0 0
        %1923 = vmatmul.mubr.bf16.gmra.mxu0 %v1604
        %v1924 = vpop.f32.mrf.mxu0
        %v1925 = vadd.f32 0.0, %v1924
        %v1926 = vpop.f32.mrf.mxu0
        %v1927 = vpop.f32.mrf.mxu0
        %v1928 = vadd.f32 0.0, %v1927
        %v1929 = vpop.f32.mrf.mxu0
        %1930 = vmatprep.mubr.bf16.mxu0 0
        %1931 = vmatmul.mubr.bf16.gmra.mxu0 %v1605
        %v1932 = vpop.f32.mrf.mxu0
        %v1933 = vadd.f32 0.0, %v1932
        %v1934 = vpop.f32.mrf.mxu0
        %v1935 = vpop.f32.mrf.mxu0
        %v1936 = vadd.f32 0.0, %v1935
        %v1937 = vpop.f32.mrf.mxu0
        %1938 = vmatprep.mubr.bf16.mxu0 0
        %1939 = vmatmul.mubr.bf16.gmra.mxu0 %v1606
        %v1940 = vpop.f32.mrf.mxu0
        %v1941 = vadd.f32 0.0, %v1940
        %v1942 = vpop.f32.mrf.mxu0
        %v1943 = vpop.f32.mrf.mxu0
        %v1944 = vadd.f32 0.0, %v1943
        %v1945 = vpop.f32.mrf.mxu0
        %1946 = vmatprep.mubr.bf16.mxu0 0
        %1947 = vmatmul.mubr.bf16.gmra.mxu0 %v1607
        %v1948 = vpop.f32.mrf.mxu0
        %v1949 = vadd.f32 0.0, %v1948
        %v1950 = vpop.f32.mrf.mxu0
        %v1951 = vpop.f32.mrf.mxu0
        %v1952 = vadd.f32 0.0, %v1951
        %v1953 = vpop.f32.mrf.mxu0
        %1954 = vmatprep.mubr.bf16.mxu0 0
        %1955 = vmatmul.mubr.bf16.gmra.mxu0 %v1608
        %v1956 = vpop.f32.mrf.mxu0
        %v1957 = vadd.f32 0.0, %v1956
        %v1958 = vpop.f32.mrf.mxu0
        %v1959 = vpop.f32.mrf.mxu0
        %v1960 = vadd.f32 0.0, %v1959
        %v1961 = vpop.f32.mrf.mxu0
        %1962 = vmatprep.mubr.bf16.mxu0 0
        %1963 = vmatmul.mubr.bf16.gmra.mxu0 %v1609
        %v1964 = vpop.f32.mrf.mxu0
        %v1965 = vadd.f32 0.0, %v1964
        %v1966 = vpop.f32.mrf.mxu0
        %v1967 = vpop.f32.mrf.mxu0
        %v1968 = vadd.f32 0.0, %v1967
        %v1969 = vpop.f32.mrf.mxu0
        %1970 = vmatprep.mubr.bf16.mxu0 0
        %1971 = vmatmul.mubr.bf16.gmra.mxu0 %v1610
        %v1972 = vpop.f32.mrf.mxu0
        %v1973 = vadd.f32 0.0, %v1972
        %v1974 = vpop.f32.mrf.mxu0
        %v1975 = vpop.f32.mrf.mxu0
        %v1976 = vadd.f32 0.0, %v1975
        %v1977 = vpop.f32.mrf.mxu0
        %1978 = vmatprep.mubr.bf16.mxu0 0
        %1979 = vmatmul.mubr.bf16.gmra.mxu0 %v1611
        %v1980 = vpop.f32.mrf.mxu0
        %v1981 = vadd.f32 0.0, %v1980
        %v1982 = vpop.f32.mrf.mxu0
        %v1983 = vpop.f32.mrf.mxu0
        %v1984 = vadd.f32 0.0, %v1983
        %v1985 = vpop.f32.mrf.mxu0
        %1986 = vmatprep.mubr.bf16.mxu0 0
        %1987 = vmatmul.mubr.bf16.gmra.mxu0 %v1612
        %v1988 = vpop.f32.mrf.mxu0
        %v1989 = vadd.f32 0.0, %v1988
        %v1990 = vpop.f32.mrf.mxu0
        %v1991 = vpop.f32.mrf.mxu0
        %v1992 = vadd.f32 0.0, %v1991
        %v1993 = vpop.f32.mrf.mxu0
        %1994 = vdwg.mxu0
        %v1997 = vunpack.c.l.s4 1966171168
        %v1998 = vunpack.c.0.s8 %v1997
        %v1999 = vlaneseq
        %v2000 = vshrl.u32 %v1999, 7
        %v2001 = vsub.s32 %v1998, %v2000
        %v2002 = vrot.slane %v1765, %v2001
        %v2003 = vcombine.high %v2002, %v2002
        %v2005 = vunpack.c.l.s4 1966171168
        %v2006 = vunpack.c.0.s8 %v2005
        %v2007 = vlaneseq
        %v2008 = vshrl.u32 %v2007, 7
        %v2009 = vsub.s32 %v2006, %v2008
        %v2010 = vrot.slane %v2002, %v2009
        %v2012 = vunpack.c.l.s4 1966171168
        %v2013 = vunpack.c.0.s8 %v2012
        %v2014 = vlaneseq
        %v2015 = vshrl.u32 %v2014, 7
        %v2016 = vsub.s32 %v2013, %v2015
        %v2017 = vrot.slane %v2003, %v2016
        %v2018 = vlaneseq
        %v2019 = vshrl.u32 %v2018, 7
        %v2020 = vsub.s32 0, %v2019
        %v2021 = vrot.slane %v2010, %v2020
        %v2022 = vlaneseq
        %v2023 = vshrl.u32 %v2022, 7
        %v2024 = vsub.s32 0, %v2023
        %v2025 = vrot.slane %v2017, %v2024
        %v2028 = vadd.f32 %v1869, %v2021
        %v2029 = vadd.f32 %v1872, %v2021
        %v2030 = vadd.f32 %v1877, %v2021
        %v2031 = vadd.f32 %v1880, %v2021
        %v2032 = vadd.f32 %v1885, %v2021
        %v2033 = vadd.f32 %v1888, %v2021
        %v2034 = vadd.f32 %v1893, %v2021
        %v2035 = vadd.f32 %v1896, %v2021
        %v2036 = vadd.f32 %v1901, %v2021
        %v2037 = vadd.f32 %v1904, %v2021
        %v2038 = vadd.f32 %v1909, %v2021
        %v2039 = vadd.f32 %v1912, %v2021
        %v2040 = vadd.f32 %v1917, %v2021
        %v2041 = vadd.f32 %v1920, %v2021
        %v2042 = vadd.f32 %v1925, %v2021
        %v2043 = vadd.f32 %v1928, %v2021
        %v2044 = vadd.f32 %v1933, %v2025
        %v2045 = vadd.f32 %v1936, %v2025
        %v2046 = vadd.f32 %v1941, %v2025
        %v2047 = vadd.f32 %v1944, %v2025
        %v2048 = vadd.f32 %v1949, %v2025
        %v2049 = vadd.f32 %v1952, %v2025
        %v2050 = vadd.f32 %v1957, %v2025
        %v2051 = vadd.f32 %v1960, %v2025
        %v2052 = vadd.f32 %v1965, %v2025
        %v2053 = vadd.f32 %v1968, %v2025
        %v2054 = vadd.f32 %v1973, %v2025
        %v2055 = vadd.f32 %v1976, %v2025
        %v2056 = vadd.f32 %v1981, %v2025
        %v2057 = vadd.f32 %v1984, %v2025
        %v2058 = vadd.f32 %v1989, %v2025
        %v2059 = vadd.f32 %v1992, %v2025
        %v2060 = vmax.f32 %v2028, 0.0
        %v2061 = vmax.f32 %v2029, 0.0
        %v2062 = vmax.f32 %v2030, 0.0
        %v2063 = vmax.f32 %v2031, 0.0
        %v2064 = vmax.f32 %v2032, 0.0
        %v2065 = vmax.f32 %v2033, 0.0
        %v2066 = vmax.f32 %v2034, 0.0
        %v2067 = vmax.f32 %v2035, 0.0
        %v2068 = vmax.f32 %v2036, 0.0
        %v2069 = vmax.f32 %v2037, 0.0
        %v2070 = vmax.f32 %v2038, 0.0
        %v2071 = vmax.f32 %v2039, 0.0
        %v2072 = vmax.f32 %v2040, 0.0
        %v2073 = vmax.f32 %v2041, 0.0
        %v2074 = vmax.f32 %v2042, 0.0
        %v2075 = vmax.f32 %v2043, 0.0
        %v2076 = vmax.f32 %v2044, 0.0
        %v2077 = vmax.f32 %v2045, 0.0
        %v2078 = vmax.f32 %v2046, 0.0
        %v2079 = vmax.f32 %v2047, 0.0
        %v2080 = vmax.f32 %v2048, 0.0
        %v2081 = vmax.f32 %v2049, 0.0
        %v2082 = vmax.f32 %v2050, 0.0
        %v2083 = vmax.f32 %v2051, 0.0
        %v2084 = vmax.f32 %v2052, 0.0
        %v2085 = vmax.f32 %v2053, 0.0
        %v2086 = vmax.f32 %v2054, 0.0
        %v2087 = vmax.f32 %v2055, 0.0
        %v2088 = vmax.f32 %v2056, 0.0
        %v2089 = vmax.f32 %v2057, 0.0
        %v2090 = vmax.f32 %v2058, 0.0
        %v2091 = vmax.f32 %v2059, 0.0
        %v2092 = vpack.c.bf16 %v2061, %v2060
        %v2093 = vpack.c.bf16 %v2063, %v2062
        %v2094 = vpack.c.bf16 %v2065, %v2064
        %v2095 = vpack.c.bf16 %v2067, %v2066
        %v2096 = vpack.c.bf16 %v2069, %v2068
        %v2097 = vpack.c.bf16 %v2071, %v2070
        %v2098 = vpack.c.bf16 %v2073, %v2072
        %v2099 = vpack.c.bf16 %v2075, %v2074
        %v2100 = vpack.c.bf16 %v2077, %v2076
        %v2101 = vpack.c.bf16 %v2079, %v2078
        %v2102 = vpack.c.bf16 %v2081, %v2080
        %v2103 = vpack.c.bf16 %v2083, %v2082
        %v2104 = vpack.c.bf16 %v2085, %v2084
        %v2105 = vpack.c.bf16 %v2087, %v2086
        %v2106 = vpack.c.bf16 %v2089, %v2088
        %v2107 = vpack.c.bf16 %v2091, %v2090
        %s2108 = scalar_lea.vmem [#allocation8], 64
        %v2109 = vld [vmem:[%s2108] sm:$0xf]
        %v2110 = vld [vmem:[%s2108 + $0x4] sm:$0xf]
        %v2111 = vld [vmem:[%s2108 + $0x8] sm:$0xf]
        %v2112 = vld [vmem:[%s2108 + $0xc] sm:$0xf]
        %v2113 = vld [vmem:[%s2108 + $0x10] sm:$0xf]
        %v2114 = vld [vmem:[%s2108 + $0x14] sm:$0xf]
        %v2115 = vld [vmem:[%s2108 + $0x18] sm:$0xf]
        %v2116 = vld [vmem:[%s2108 + $0x1c] sm:$0xf]
        %v2117 = vld [vmem:[%s2108 + $0x20] sm:$0xf]
        %v2118 = vld [vmem:[%s2108 + $0x24] sm:$0xf]
        %v2119 = vld [vmem:[%s2108 + $0x28] sm:$0xf]
        %v2120 = vld [vmem:[%s2108 + $0x2c] sm:$0xf]
        %v2121 = vld [vmem:[%s2108 + $0x30] sm:$0xf]
        %v2122 = vld [vmem:[%s2108 + $0x34] sm:$0xf]
        %v2123 = vld [vmem:[%s2108 + $0x38] sm:$0xf]
        %v2124 = vld [vmem:[%s2108 + $0x3c] sm:$0xf]
        %s2125 = scalar_lea.vmem %s4, 1
        %v2126 = vld [vmem:[%s2125] sm:$0x1]
        %v2128 = vlaneseq
        %v2129 = vshrl.u32 %v2128, 7
        %v2130 = vsub.s32 0, %v2129
        %v2131 = vrot.slane %v2126, %v2130
        %v2149 = vunpack.c.l.b16 %v2109
        %v2150 = vunpack.c.l.b16 %v2110
        %v2151 = vunpack.c.l.b16 %v2111
        %v2152 = vunpack.c.l.b16 %v2112
        %v2153 = vunpack.c.l.b16 %v2113
        %v2154 = vunpack.c.l.b16 %v2114
        %v2155 = vunpack.c.l.b16 %v2115
        %v2156 = vunpack.c.l.b16 %v2116
        %v2157 = vunpack.c.l.b16 %v2117
        %v2158 = vunpack.c.l.b16 %v2118
        %v2159 = vunpack.c.l.b16 %v2119
        %v2160 = vunpack.c.l.b16 %v2120
        %v2161 = vunpack.c.l.b16 %v2121
        %v2162 = vunpack.c.l.b16 %v2122
        %v2163 = vunpack.c.l.b16 %v2123
        %v2164 = vunpack.c.l.b16 %v2124
        %v2165 = vpack.c.b16 %v2150, %v2149
        %v2166 = vpack.c.b16 %v2152, %v2151
        %v2167 = vpack.c.b16 %v2154, %v2153
        %v2168 = vpack.c.b16 %v2156, %v2155
        %v2169 = vpack.c.b16 %v2158, %v2157
        %v2170 = vpack.c.b16 %v2160, %v2159
        %v2171 = vpack.c.b16 %v2162, %v2161
        %v2172 = vpack.c.b16 %v2164, %v2163
        %2181 = vmatprep.subr.bf16.mxu0 0
        %2182 = vmatpush1.bf16.msra.mxu0 %v2172
        %2183 = vmatprep.subr.bf16.mxu0 0
        %2184 = vmatpush1.bf16.msra.mxu0 %v2171
        %2185 = vmatprep.subr.bf16.mxu0 0
        %2186 = vmatpush1.bf16.msra.mxu0 %v2170
        %2187 = vmatprep.subr.bf16.mxu0 0
        %2188 = vmatpush1.bf16.msra.mxu0 %v2169
        %2189 = vmatprep.subr.bf16.mxu0 0
        %2190 = vmatpush1.bf16.msra.mxu0 %v2168
        %2191 = vmatprep.subr.bf16.mxu0 0
        %2192 = vmatpush1.bf16.msra.mxu0 %v2167
        %2193 = vmatprep.subr.bf16.mxu0 0
        %2194 = vmatpush1.bf16.msra.mxu0 %v2166
        %2195 = vmatprep.subr.bf16.mxu0 0
        %2196 = vmatpush1.bf16.msra.mxu0 %v2165
        %2197 = vmatprep.subr.bf16.mxu0 0
        %2198 = vmatpush2.bf16.msra.mxu0 0
        %2199 = vmatprep.subr.bf16.mxu0 0
        %2200 = vmatpush2.bf16.msra.mxu0 0
        %2201 = vmatprep.subr.bf16.mxu0 0
        %2202 = vmatpush2.bf16.msra.mxu0 0
        %2203 = vmatprep.subr.bf16.mxu0 0
        %2204 = vmatpush2.bf16.msra.mxu0 0
        %2205 = vmatprep.subr.bf16.mxu0 0
        %2206 = vmatpush2.bf16.msra.mxu0 0
        %2207 = vmatprep.subr.bf16.mxu0 0
        %2208 = vmatpush2.bf16.msra.mxu0 0
        %2209 = vmatprep.subr.bf16.mxu0 0
        %2210 = vmatpush2.bf16.msra.mxu0 0
        %2211 = vmatprep.subr.bf16.mxu0 0
        %2212 = vmatpush2.bf16.msra.mxu0 0
        %2213 = vmatprep.mubr.bf16.mxu0 0
        %2214 = vmatmul.mubr.bf16.gmra.mxu0 %v2092
        %v2215 = vpop.f32.mrf.mxu0
        %v2216 = vadd.f32 %v2131, %v2215
        %v2217 = vpop.f32.mrf.mxu0
        %v2218 = vpop.f32.mrf.mxu0
        %v2219 = vadd.f32 %v2131, %v2218
        %v2220 = vpop.f32.mrf.mxu0
        %2221 = vmatprep.mubr.bf16.mxu0 0
        %2222 = vmatmul.mubr.bf16.gmra.mxu0 %v2093
        %v2223 = vpop.f32.mrf.mxu0
        %v2224 = vadd.f32 %v2131, %v2223
        %v2225 = vpop.f32.mrf.mxu0
        %v2226 = vpop.f32.mrf.mxu0
        %v2227 = vadd.f32 %v2131, %v2226
        %v2228 = vpop.f32.mrf.mxu0
        %2229 = vmatprep.mubr.bf16.mxu0 0
        %2230 = vmatmul.mubr.bf16.gmra.mxu0 %v2094
        %v2231 = vpop.f32.mrf.mxu0
        %v2232 = vadd.f32 %v2131, %v2231
        %v2233 = vpop.f32.mrf.mxu0
        %v2234 = vpop.f32.mrf.mxu0
        %v2235 = vadd.f32 %v2131, %v2234
        %v2236 = vpop.f32.mrf.mxu0
        %2237 = vmatprep.mubr.bf16.mxu0 0
        %2238 = vmatmul.mubr.bf16.gmra.mxu0 %v2095
        %v2239 = vpop.f32.mrf.mxu0
        %v2240 = vadd.f32 %v2131, %v2239
        %v2241 = vpop.f32.mrf.mxu0
        %v2242 = vpop.f32.mrf.mxu0
        %v2243 = vadd.f32 %v2131, %v2242
        %v2244 = vpop.f32.mrf.mxu0
        %2245 = vmatprep.mubr.bf16.mxu0 0
        %2246 = vmatmul.mubr.bf16.gmra.mxu0 %v2096
        %v2247 = vpop.f32.mrf.mxu0
        %v2248 = vadd.f32 %v2131, %v2247
        %v2249 = vpop.f32.mrf.mxu0
        %v2250 = vpop.f32.mrf.mxu0
        %v2251 = vadd.f32 %v2131, %v2250
        %v2252 = vpop.f32.mrf.mxu0
        %2253 = vmatprep.mubr.bf16.mxu0 0
        %2254 = vmatmul.mubr.bf16.gmra.mxu0 %v2097
        %v2255 = vpop.f32.mrf.mxu0
        %v2256 = vadd.f32 %v2131, %v2255
        %v2257 = vpop.f32.mrf.mxu0
        %v2258 = vpop.f32.mrf.mxu0
        %v2259 = vadd.f32 %v2131, %v2258
        %v2260 = vpop.f32.mrf.mxu0
        %2261 = vmatprep.mubr.bf16.mxu0 0
        %2262 = vmatmul.mubr.bf16.gmra.mxu0 %v2098
        %v2263 = vpop.f32.mrf.mxu0
        %v2264 = vadd.f32 %v2131, %v2263
        %v2265 = vpop.f32.mrf.mxu0
        %v2266 = vpop.f32.mrf.mxu0
        %v2267 = vadd.f32 %v2131, %v2266
        %v2268 = vpop.f32.mrf.mxu0
        %2269 = vmatprep.mubr.bf16.mxu0 0
        %2270 = vmatmul.mubr.bf16.gmra.mxu0 %v2099
        %v2271 = vpop.f32.mrf.mxu0
        %v2272 = vadd.f32 %v2131, %v2271
        %v2273 = vpop.f32.mrf.mxu0
        %v2274 = vpop.f32.mrf.mxu0
        %v2275 = vadd.f32 %v2131, %v2274
        %v2276 = vpop.f32.mrf.mxu0
        %2277 = vmatprep.mubr.bf16.mxu0 0
        %2278 = vmatmul.mubr.bf16.gmra.mxu0 %v2100
        %v2279 = vpop.f32.mrf.mxu0
        %v2280 = vadd.f32 %v2131, %v2279
        %v2281 = vpop.f32.mrf.mxu0
        %v2282 = vpop.f32.mrf.mxu0
        %v2283 = vadd.f32 %v2131, %v2282
        %v2284 = vpop.f32.mrf.mxu0
        %2285 = vmatprep.mubr.bf16.mxu0 0
        %2286 = vmatmul.mubr.bf16.gmra.mxu0 %v2101
        %v2287 = vpop.f32.mrf.mxu0
        %v2288 = vadd.f32 %v2131, %v2287
        %v2289 = vpop.f32.mrf.mxu0
        %v2290 = vpop.f32.mrf.mxu0
        %v2291 = vadd.f32 %v2131, %v2290
        %v2292 = vpop.f32.mrf.mxu0
        %2293 = vmatprep.mubr.bf16.mxu0 0
        %2294 = vmatmul.mubr.bf16.gmra.mxu0 %v2102
        %v2295 = vpop.f32.mrf.mxu0
        %v2296 = vadd.f32 %v2131, %v2295
        %v2297 = vpop.f32.mrf.mxu0
        %v2298 = vpop.f32.mrf.mxu0
        %v2299 = vadd.f32 %v2131, %v2298
        %v2300 = vpop.f32.mrf.mxu0
        %2301 = vmatprep.mubr.bf16.mxu0 0
        %2302 = vmatmul.mubr.bf16.gmra.mxu0 %v2103
        %v2303 = vpop.f32.mrf.mxu0
        %v2304 = vadd.f32 %v2131, %v2303
        %v2305 = vpop.f32.mrf.mxu0
        %v2306 = vpop.f32.mrf.mxu0
        %v2307 = vadd.f32 %v2131, %v2306
        %v2308 = vpop.f32.mrf.mxu0
        %2309 = vmatprep.mubr.bf16.mxu0 0
        %2310 = vmatmul.mubr.bf16.gmra.mxu0 %v2104
        %v2311 = vpop.f32.mrf.mxu0
        %v2312 = vadd.f32 %v2131, %v2311
        %v2313 = vpop.f32.mrf.mxu0
        %v2314 = vpop.f32.mrf.mxu0
        %v2315 = vadd.f32 %v2131, %v2314
        %v2316 = vpop.f32.mrf.mxu0
        %2317 = vmatprep.mubr.bf16.mxu0 0
        %2318 = vmatmul.mubr.bf16.gmra.mxu0 %v2105
        %v2319 = vpop.f32.mrf.mxu0
        %v2320 = vadd.f32 %v2131, %v2319
        %v2321 = vpop.f32.mrf.mxu0
        %v2322 = vpop.f32.mrf.mxu0
        %v2323 = vadd.f32 %v2131, %v2322
        %v2324 = vpop.f32.mrf.mxu0
        %2325 = vmatprep.mubr.bf16.mxu0 0
        %2326 = vmatmul.mubr.bf16.gmra.mxu0 %v2106
        %v2327 = vpop.f32.mrf.mxu0
        %v2328 = vadd.f32 %v2131, %v2327
        %v2329 = vpop.f32.mrf.mxu0
        %v2330 = vpop.f32.mrf.mxu0
        %v2331 = vadd.f32 %v2131, %v2330
        %v2332 = vpop.f32.mrf.mxu0
        %2333 = vmatprep.mubr.bf16.mxu0 0
        %2334 = vmatmul.mubr.bf16.gmra.mxu0 %v2107
        %v2335 = vpop.f32.mrf.mxu0
        %v2336 = vadd.f32 %v2131, %v2335
        %v2337 = vpop.f32.mrf.mxu0
        %v2338 = vpop.f32.mrf.mxu0
        %v2339 = vadd.f32 %v2131, %v2338
        %v2340 = vpop.f32.mrf.mxu0
        %2341 = vdwg.mxu0
        %s2342 = scalar_lea.vmem [#allocation10], 128
        %v2343 = vld [vmem:[%s2342 + $0x40] sm:$0xf]
        %v2344 = vld [vmem:[%s2342 + $0x44] sm:$0xf]
        %v2345 = vld [vmem:[%s2342 + $0x48] sm:$0xf]
        %v2346 = vld [vmem:[%s2342 + $0x4c] sm:$0xf]
        %v2347 = vld [vmem:[%s2342 + $0x50] sm:$0xf]
        %v2348 = vld [vmem:[%s2342 + $0x54] sm:$0xf]
        %v2349 = vld [vmem:[%s2342 + $0x58] sm:$0xf]
        %v2350 = vld [vmem:[%s2342 + $0x5c] sm:$0xf]
        %v2351 = vld [vmem:[%s2342 + $0x60] sm:$0xf]
        %v2352 = vld [vmem:[%s2342 + $0x64] sm:$0xf]
        %v2353 = vld [vmem:[%s2342 + $0x68] sm:$0xf]
        %v2354 = vld [vmem:[%s2342 + $0x6c] sm:$0xf]
        %v2355 = vld [vmem:[%s2342 + $0x70] sm:$0xf]
        %v2356 = vld [vmem:[%s2342 + $0x74] sm:$0xf]
        %v2357 = vld [vmem:[%s2342 + $0x78] sm:$0xf]
        %v2358 = vld [vmem:[%s2342 + $0x7c] sm:$0xf]
        %v2361 = vunpack.c.l.b16 %v1629
        %v2362 = vunpack.c.l.b16 %v1646
        %v2363 = vsel %vm1678, %v2362, %v2361
        %v2364 = vpack.c.b16 %v2363, %v2363
        %v2382 = vunpack.c.l.b16 %v2343
        %v2383 = vunpack.c.l.b16 %v2344
        %v2384 = vunpack.c.l.b16 %v2345
        %v2385 = vunpack.c.l.b16 %v2346
        %v2386 = vunpack.c.l.b16 %v2347
        %v2387 = vunpack.c.l.b16 %v2348
        %v2388 = vunpack.c.l.b16 %v2349
        %v2389 = vunpack.c.l.b16 %v2350
        %v2390 = vunpack.c.l.b16 %v2351
        %v2391 = vunpack.c.l.b16 %v2352
        %v2392 = vunpack.c.l.b16 %v2353
        %v2393 = vunpack.c.l.b16 %v2354
        %v2394 = vunpack.c.l.b16 %v2355
        %v2395 = vunpack.c.l.b16 %v2356
        %v2396 = vunpack.c.l.b16 %v2357
        %v2397 = vunpack.c.l.b16 %v2358
        %v2398 = vpack.c.b16 %v2383, %v2382
        %v2399 = vpack.c.b16 %v2385, %v2384
        %v2400 = vpack.c.b16 %v2387, %v2386
        %v2401 = vpack.c.b16 %v2389, %v2388
        %v2402 = vpack.c.b16 %v2391, %v2390
        %v2403 = vpack.c.b16 %v2393, %v2392
        %v2404 = vpack.c.b16 %v2395, %v2394
        %v2405 = vpack.c.b16 %v2397, %v2396
        %2414 = vmatprep.subr.bf16.mxu0 0
        %2415 = vmatpush1.bf16.msra.mxu0 %v2405
        %2416 = vmatprep.subr.bf16.mxu0 0
        %2417 = vmatpush1.bf16.msra.mxu0 %v2404
        %2418 = vmatprep.subr.bf16.mxu0 0
        %2419 = vmatpush1.bf16.msra.mxu0 %v2403
        %2420 = vmatprep.subr.bf16.mxu0 0
        %2421 = vmatpush1.bf16.msra.mxu0 %v2402
        %2422 = vmatprep.subr.bf16.mxu0 0
        %2423 = vmatpush1.bf16.msra.mxu0 %v2401
        %2424 = vmatprep.subr.bf16.mxu0 0
        %2425 = vmatpush1.bf16.msra.mxu0 %v2400
        %2426 = vmatprep.subr.bf16.mxu0 0
        %2427 = vmatpush1.bf16.msra.mxu0 %v2399
        %2428 = vmatprep.subr.bf16.mxu0 0
        %2429 = vmatpush1.bf16.msra.mxu0 %v2398
        %2430 = vmatprep.subr.bf16.mxu0 0
        %2431 = vmatpush2.bf16.msra.mxu0 0
        %2432 = vmatprep.subr.bf16.mxu0 0
        %2433 = vmatpush2.bf16.msra.mxu0 0
        %2434 = vmatprep.subr.bf16.mxu0 0
        %2435 = vmatpush2.bf16.msra.mxu0 0
        %2436 = vmatprep.subr.bf16.mxu0 0
        %2437 = vmatpush2.bf16.msra.mxu0 0
        %2438 = vmatprep.subr.bf16.mxu0 0
        %2439 = vmatpush2.bf16.msra.mxu0 0
        %2440 = vmatprep.subr.bf16.mxu0 0
        %2441 = vmatpush2.bf16.msra.mxu0 0
        %2442 = vmatprep.subr.bf16.mxu0 0
        %2443 = vmatpush2.bf16.msra.mxu0 0
        %2444 = vmatprep.subr.bf16.mxu0 0
        %2445 = vmatpush2.bf16.msra.mxu0 0
        %2446 = vmatprep.mubr.bf16.mxu0 0
        %2447 = vmatmul.mubr.bf16.gmra.mxu0 %v2364
        %v2448 = vpop.f32.mrf.mxu0
        %v2449 = vadd.f32 0.0, %v2448
        %v2450 = vpop.f32.mrf.mxu0
        %v2451 = vpop.f32.mrf.mxu0
        %v2452 = vpop.f32.mrf.mxu0
        %2453 = vdwg.mxu0
        %v2454 = vld [vmem:[%s2342] sm:$0xf]
        %v2455 = vld [vmem:[%s2342 + $0x4] sm:$0xf]
        %v2456 = vld [vmem:[%s2342 + $0x8] sm:$0xf]
        %v2457 = vld [vmem:[%s2342 + $0xc] sm:$0xf]
        %v2458 = vld [vmem:[%s2342 + $0x10] sm:$0xf]
        %v2459 = vld [vmem:[%s2342 + $0x14] sm:$0xf]
        %v2460 = vld [vmem:[%s2342 + $0x18] sm:$0xf]
        %v2461 = vld [vmem:[%s2342 + $0x1c] sm:$0xf]
        %v2462 = vld [vmem:[%s2342 + $0x20] sm:$0xf]
        %v2463 = vld [vmem:[%s2342 + $0x24] sm:$0xf]
        %v2464 = vld [vmem:[%s2342 + $0x28] sm:$0xf]
        %v2465 = vld [vmem:[%s2342 + $0x2c] sm:$0xf]
        %v2466 = vld [vmem:[%s2342 + $0x30] sm:$0xf]
        %v2467 = vld [vmem:[%s2342 + $0x34] sm:$0xf]
        %v2468 = vld [vmem:[%s2342 + $0x38] sm:$0xf]
        %v2469 = vld [vmem:[%s2342 + $0x3c] sm:$0xf]
        %v2486 = vunpack.c.l.b16 %v2454
        %v2487 = vunpack.c.l.b16 %v2455
        %v2488 = vunpack.c.l.b16 %v2456
        %v2489 = vunpack.c.l.b16 %v2457
        %v2490 = vunpack.c.l.b16 %v2458
        %v2491 = vunpack.c.l.b16 %v2459
        %v2492 = vunpack.c.l.b16 %v2460
        %v2493 = vunpack.c.l.b16 %v2461
        %v2494 = vunpack.c.l.b16 %v2462
        %v2495 = vunpack.c.l.b16 %v2463
        %v2496 = vunpack.c.l.b16 %v2464
        %v2497 = vunpack.c.l.b16 %v2465
        %v2498 = vunpack.c.l.b16 %v2466
        %v2499 = vunpack.c.l.b16 %v2467
        %v2500 = vunpack.c.l.b16 %v2468
        %v2501 = vunpack.c.l.b16 %v2469
        %v2502 = vpack.c.b16 %v2487, %v2486
        %v2503 = vpack.c.b16 %v2489, %v2488
        %v2504 = vpack.c.b16 %v2491, %v2490
        %v2505 = vpack.c.b16 %v2493, %v2492
        %v2506 = vpack.c.b16 %v2495, %v2494
        %v2507 = vpack.c.b16 %v2497, %v2496
        %v2508 = vpack.c.b16 %v2499, %v2498
        %v2509 = vpack.c.b16 %v2501, %v2500
        %2518 = vmatprep.subr.bf16.mxu0 0
        %2519 = vmatpush1.bf16.msra.mxu0 %v2509
        %2520 = vmatprep.subr.bf16.mxu0 0
        %2521 = vmatpush1.bf16.msra.mxu0 %v2508
        %2522 = vmatprep.subr.bf16.mxu0 0
        %2523 = vmatpush1.bf16.msra.mxu0 %v2507
        %2524 = vmatprep.subr.bf16.mxu0 0
        %2525 = vmatpush1.bf16.msra.mxu0 %v2506
        %2526 = vmatprep.subr.bf16.mxu0 0
        %2527 = vmatpush1.bf16.msra.mxu0 %v2505
        %2528 = vmatprep.subr.bf16.mxu0 0
        %2529 = vmatpush1.bf16.msra.mxu0 %v2504
        %2530 = vmatprep.subr.bf16.mxu0 0
        %2531 = vmatpush1.bf16.msra.mxu0 %v2503
        %2532 = vmatprep.subr.bf16.mxu0 0
        %2533 = vmatpush1.bf16.msra.mxu0 %v2502
        %2534 = vmatprep.subr.bf16.mxu0 0
        %2535 = vmatpush2.bf16.msra.mxu0 0
        %2536 = vmatprep.subr.bf16.mxu0 0
        %2537 = vmatpush2.bf16.msra.mxu0 0
        %2538 = vmatprep.subr.bf16.mxu0 0
        %2539 = vmatpush2.bf16.msra.mxu0 0
        %2540 = vmatprep.subr.bf16.mxu0 0
        %2541 = vmatpush2.bf16.msra.mxu0 0
        %2542 = vmatprep.subr.bf16.mxu0 0
        %2543 = vmatpush2.bf16.msra.mxu0 0
        %2544 = vmatprep.subr.bf16.mxu0 0
        %2545 = vmatpush2.bf16.msra.mxu0 0
        %2546 = vmatprep.subr.bf16.mxu0 0
        %2547 = vmatpush2.bf16.msra.mxu0 0
        %2548 = vmatprep.subr.bf16.mxu0 0
        %2549 = vmatpush2.bf16.msra.mxu0 0
        %2550 = vmatprep.mubr.bf16.mxu0 0
        %2551 = vmatmul.mubr.bf16.gmra.mxu0 %v1581
        %v2552 = vpop.f32.mrf.mxu0
        %v2553 = vadd.f32 %v2216, %v2552
        %v2554 = vpop.f32.mrf.mxu0
        %v2555 = vpop.f32.mrf.mxu0
        %v2556 = vadd.f32 %v2219, %v2555
        %v2557 = vpop.f32.mrf.mxu0
        %2558 = vmatprep.mubr.bf16.mxu0 0
        %2559 = vmatmul.mubr.bf16.gmra.mxu0 %v1582
        %v2560 = vpop.f32.mrf.mxu0
        %v2561 = vadd.f32 %v2224, %v2560
        %v2562 = vpop.f32.mrf.mxu0
        %v2563 = vpop.f32.mrf.mxu0
        %v2564 = vadd.f32 %v2227, %v2563
        %v2565 = vpop.f32.mrf.mxu0
        %2566 = vmatprep.mubr.bf16.mxu0 0
        %2567 = vmatmul.mubr.bf16.gmra.mxu0 %v1583
        %v2568 = vpop.f32.mrf.mxu0
        %v2569 = vadd.f32 %v2232, %v2568
        %v2570 = vpop.f32.mrf.mxu0
        %v2571 = vpop.f32.mrf.mxu0
        %v2572 = vadd.f32 %v2235, %v2571
        %v2573 = vpop.f32.mrf.mxu0
        %2574 = vmatprep.mubr.bf16.mxu0 0
        %2575 = vmatmul.mubr.bf16.gmra.mxu0 %v1584
        %v2576 = vpop.f32.mrf.mxu0
        %v2577 = vadd.f32 %v2240, %v2576
        %v2578 = vpop.f32.mrf.mxu0
        %v2579 = vpop.f32.mrf.mxu0
        %v2580 = vadd.f32 %v2243, %v2579
        %v2581 = vpop.f32.mrf.mxu0
        %2582 = vmatprep.mubr.bf16.mxu0 0
        %2583 = vmatmul.mubr.bf16.gmra.mxu0 %v1585
        %v2584 = vpop.f32.mrf.mxu0
        %v2585 = vadd.f32 %v2248, %v2584
        %v2586 = vpop.f32.mrf.mxu0
        %v2587 = vpop.f32.mrf.mxu0
        %v2588 = vadd.f32 %v2251, %v2587
        %v2589 = vpop.f32.mrf.mxu0
        %2590 = vmatprep.mubr.bf16.mxu0 0
        %2591 = vmatmul.mubr.bf16.gmra.mxu0 %v1586
        %v2592 = vpop.f32.mrf.mxu0
        %v2593 = vadd.f32 %v2256, %v2592
        %v2594 = vpop.f32.mrf.mxu0
        %v2595 = vpop.f32.mrf.mxu0
        %v2596 = vadd.f32 %v2259, %v2595
        %v2597 = vpop.f32.mrf.mxu0
        %2598 = vmatprep.mubr.bf16.mxu0 0
        %2599 = vmatmul.mubr.bf16.gmra.mxu0 %v1587
        %v2600 = vpop.f32.mrf.mxu0
        %v2601 = vadd.f32 %v2264, %v2600
        %v2602 = vpop.f32.mrf.mxu0
        %v2603 = vpop.f32.mrf.mxu0
        %v2604 = vadd.f32 %v2267, %v2603
        %v2605 = vpop.f32.mrf.mxu0
        %2606 = vmatprep.mubr.bf16.mxu0 0
        %2607 = vmatmul.mubr.bf16.gmra.mxu0 %v1588
        %v2608 = vpop.f32.mrf.mxu0
        %v2609 = vadd.f32 %v2272, %v2608
        %v2610 = vpop.f32.mrf.mxu0
        %v2611 = vpop.f32.mrf.mxu0
        %v2612 = vadd.f32 %v2275, %v2611
        %v2613 = vpop.f32.mrf.mxu0
        %2614 = vmatprep.mubr.bf16.mxu0 0
        %2615 = vmatmul.mubr.bf16.gmra.mxu0 %v1589
        %v2616 = vpop.f32.mrf.mxu0
        %v2617 = vadd.f32 %v2280, %v2616
        %v2618 = vpop.f32.mrf.mxu0
        %v2619 = vpop.f32.mrf.mxu0
        %v2620 = vadd.f32 %v2283, %v2619
        %v2621 = vpop.f32.mrf.mxu0
        %2622 = vmatprep.mubr.bf16.mxu0 0
        %2623 = vmatmul.mubr.bf16.gmra.mxu0 %v1590
        %v2624 = vpop.f32.mrf.mxu0
        %v2625 = vadd.f32 %v2288, %v2624
        %v2626 = vpop.f32.mrf.mxu0
        %v2627 = vpop.f32.mrf.mxu0
        %v2628 = vadd.f32 %v2291, %v2627
        %v2629 = vpop.f32.mrf.mxu0
        %2630 = vmatprep.mubr.bf16.mxu0 0
        %2631 = vmatmul.mubr.bf16.gmra.mxu0 %v1591
        %v2632 = vpop.f32.mrf.mxu0
        %v2633 = vadd.f32 %v2296, %v2632
        %v2634 = vpop.f32.mrf.mxu0
        %v2635 = vpop.f32.mrf.mxu0
        %v2636 = vadd.f32 %v2299, %v2635
        %v2637 = vpop.f32.mrf.mxu0
        %2638 = vmatprep.mubr.bf16.mxu0 0
        %2639 = vmatmul.mubr.bf16.gmra.mxu0 %v1592
        %v2640 = vpop.f32.mrf.mxu0
        %v2641 = vadd.f32 %v2304, %v2640
        %v2642 = vpop.f32.mrf.mxu0
        %v2643 = vpop.f32.mrf.mxu0
        %v2644 = vadd.f32 %v2307, %v2643
        %v2645 = vpop.f32.mrf.mxu0
        %2646 = vmatprep.mubr.bf16.mxu0 0
        %2647 = vmatmul.mubr.bf16.gmra.mxu0 %v1593
        %v2648 = vpop.f32.mrf.mxu0
        %v2649 = vadd.f32 %v2312, %v2648
        %v2650 = vpop.f32.mrf.mxu0
        %v2651 = vpop.f32.mrf.mxu0
        %v2652 = vadd.f32 %v2315, %v2651
        %v2653 = vpop.f32.mrf.mxu0
        %2654 = vmatprep.mubr.bf16.mxu0 0
        %2655 = vmatmul.mubr.bf16.gmra.mxu0 %v1594
        %v2656 = vpop.f32.mrf.mxu0
        %v2657 = vadd.f32 %v2320, %v2656
        %v2658 = vpop.f32.mrf.mxu0
        %v2659 = vpop.f32.mrf.mxu0
        %v2660 = vadd.f32 %v2323, %v2659
        %v2661 = vpop.f32.mrf.mxu0
        %2662 = vmatprep.mubr.bf16.mxu0 0
        %2663 = vmatmul.mubr.bf16.gmra.mxu0 %v1595
        %v2664 = vpop.f32.mrf.mxu0
        %v2665 = vadd.f32 %v2328, %v2664
        %v2666 = vpop.f32.mrf.mxu0
        %v2667 = vpop.f32.mrf.mxu0
        %v2668 = vadd.f32 %v2331, %v2667
        %v2669 = vpop.f32.mrf.mxu0
        %2670 = vmatprep.mubr.bf16.mxu0 0
        %2671 = vmatmul.mubr.bf16.gmra.mxu0 %v1596
        %v2672 = vpop.f32.mrf.mxu0
        %v2673 = vadd.f32 %v2336, %v2672
        %v2674 = vpop.f32.mrf.mxu0
        %v2675 = vpop.f32.mrf.mxu0
        %v2676 = vadd.f32 %v2339, %v2675
        %v2677 = vpop.f32.mrf.mxu0
        %2678 = vdwg.mxu0
        %v2681 = vunpack.c.l.s4 1966171168
        %v2682 = vunpack.c.0.s8 %v2681
        %v2683 = vlaneseq
        %v2684 = vshrl.u32 %v2683, 7
        %v2685 = vsub.s32 %v2682, %v2684
        %v2686 = vrot.slane %v2449, %v2685
        %v2687 = vcombine.high %v2686, %v2686
        %v2689 = vunpack.c.l.s4 1966171168
        %v2690 = vunpack.c.0.s8 %v2689
        %v2691 = vlaneseq
        %v2692 = vshrl.u32 %v2691, 7
        %v2693 = vsub.s32 %v2690, %v2692
        %v2694 = vrot.slane %v2686, %v2693
        %v2696 = vunpack.c.l.s4 1966171168
        %v2697 = vunpack.c.0.s8 %v2696
        %v2698 = vlaneseq
        %v2699 = vshrl.u32 %v2698, 7
        %v2700 = vsub.s32 %v2697, %v2699
        %v2701 = vrot.slane %v2687, %v2700
        %v2702 = vlaneseq
        %v2703 = vshrl.u32 %v2702, 7
        %v2704 = vsub.s32 0, %v2703
        %v2705 = vrot.slane %v2694, %v2704
        %v2706 = vlaneseq
        %v2707 = vshrl.u32 %v2706, 7
        %v2708 = vsub.s32 0, %v2707
        %v2709 = vrot.slane %v2701, %v2708
        %v2712 = vadd.f32 %v2553, %v2705
        %v2713 = vadd.f32 %v2556, %v2705
        %v2714 = vadd.f32 %v2561, %v2705
        %v2715 = vadd.f32 %v2564, %v2705
        %v2716 = vadd.f32 %v2569, %v2705
        %v2717 = vadd.f32 %v2572, %v2705
        %v2718 = vadd.f32 %v2577, %v2705
        %v2719 = vadd.f32 %v2580, %v2705
        %v2720 = vadd.f32 %v2585, %v2705
        %v2721 = vadd.f32 %v2588, %v2705
        %v2722 = vadd.f32 %v2593, %v2705
        %v2723 = vadd.f32 %v2596, %v2705
        %v2724 = vadd.f32 %v2601, %v2705
        %v2725 = vadd.f32 %v2604, %v2705
        %v2726 = vadd.f32 %v2609, %v2705
        %v2727 = vadd.f32 %v2612, %v2705
        %v2728 = vadd.f32 %v2617, %v2709
        %v2729 = vadd.f32 %v2620, %v2709
        %v2730 = vadd.f32 %v2625, %v2709
        %v2731 = vadd.f32 %v2628, %v2709
        %v2732 = vadd.f32 %v2633, %v2709
        %v2733 = vadd.f32 %v2636, %v2709
        %v2734 = vadd.f32 %v2641, %v2709
        %v2735 = vadd.f32 %v2644, %v2709
        %v2736 = vadd.f32 %v2649, %v2709
        %v2737 = vadd.f32 %v2652, %v2709
        %v2738 = vadd.f32 %v2657, %v2709
        %v2739 = vadd.f32 %v2660, %v2709
        %v2740 = vadd.f32 %v2665, %v2709
        %v2741 = vadd.f32 %v2668, %v2709
        %v2742 = vadd.f32 %v2673, %v2709
        %v2743 = vadd.f32 %v2676, %v2709
        %v2744 = vpack.c.bf16 %v2713, %v2712
        %v2745 = vpack.c.bf16 %v2715, %v2714
        %v2746 = vpack.c.bf16 %v2717, %v2716
        %v2747 = vpack.c.bf16 %v2719, %v2718
        %v2748 = vpack.c.bf16 %v2721, %v2720
        %v2749 = vpack.c.bf16 %v2723, %v2722
        %v2750 = vpack.c.bf16 %v2725, %v2724
        %v2751 = vpack.c.bf16 %v2727, %v2726
        %v2752 = vpack.c.bf16 %v2729, %v2728
        %v2753 = vpack.c.bf16 %v2731, %v2730
        %v2754 = vpack.c.bf16 %v2733, %v2732
        %v2755 = vpack.c.bf16 %v2735, %v2734
        %v2756 = vpack.c.bf16 %v2737, %v2736
        %v2757 = vpack.c.bf16 %v2739, %v2738
        %v2758 = vpack.c.bf16 %v2741, %v2740
        %v2759 = vpack.c.bf16 %v2743, %v2742
        %v2760 = vmax.bf16 %v2744, 0
        %v2761 = vmax.bf16 %v2745, 0
        %v2762 = vmax.bf16 %v2746, 0
        %v2763 = vmax.bf16 %v2747, 0
        %v2764 = vmax.bf16 %v2748, 0
        %v2765 = vmax.bf16 %v2749, 0
        %v2766 = vmax.bf16 %v2750, 0
        %v2767 = vmax.bf16 %v2751, 0
        %v2768 = vmax.bf16 %v2752, 0
        %v2769 = vmax.bf16 %v2753, 0
        %v2770 = vmax.bf16 %v2754, 0
        %v2771 = vmax.bf16 %v2755, 0
        %v2772 = vmax.bf16 %v2756, 0
        %v2773 = vmax.bf16 %v2757, 0
        %v2774 = vmax.bf16 %v2758, 0
        %v2775 = vmax.bf16 %v2759, 0
        %v2776 = vmax.bf16 %v2744, %v2746
        %v2777 = vmax.bf16 %v2745, %v2747
        %v2778 = vmax.bf16 %v2776, %v2748
        %v2779 = vmax.bf16 %v2777, %v2749
        %v2780 = vmax.bf16 %v2778, %v2750
        %v2781 = vmax.bf16 %v2779, %v2751
        %v2782 = vmax.bf16 %v2780, %v2781
        %v2783 = vunpack.i.l.bf16 %v2782
        %v2784 = vunpack.i.h.bf16 %v2782
        %v2785 = vmax.f32 %v2783, %v2784
        %v2786 = vrot.slane %v2785, 4
        %v2787 = vmax.f32 %v2785, %v2786
        %v2788 = vrot.slane %v2787, 2
        %v2789 = vmax.f32 %v2787, %v2788
        %v2790 = vrot.slane %v2789, 1
        %v2791 = vmax.f32 %v2789, %v2790
        %v2792 = vpack.i.bf16 %v2791, %v2791
        %v2793 = vmax.bf16 %v2752, %v2754
        %v2794 = vmax.bf16 %v2753, %v2755
        %v2795 = vmax.bf16 %v2793, %v2756
        %v2796 = vmax.bf16 %v2794, %v2757
        %v2797 = vmax.bf16 %v2795, %v2758
        %v2798 = vmax.bf16 %v2796, %v2759
        %v2799 = vmax.bf16 %v2797, %v2798
        %v2800 = vunpack.i.l.bf16 %v2799
        %v2801 = vunpack.i.h.bf16 %v2799
        %v2802 = vmax.f32 %v2800, %v2801
        %v2803 = vrot.slane %v2802, 4
        %v2804 = vmax.f32 %v2802, %v2803
        %v2805 = vrot.slane %v2804, 2
        %v2806 = vmax.f32 %v2804, %v2805
        %v2807 = vrot.slane %v2806, 1
        %v2808 = vmax.f32 %v2806, %v2807
        %v2809 = vpack.i.bf16 %v2808, %v2808
        %v2810 = vmax.bf16 %v2792, 0
        %v2811 = vmax.bf16 %v2809, 0
        %s2812 = scalar_lea.vmem [#allocation5], 256
        %v2813 = vld [vmem:[%s2812 + $0x40] sm:$0xf]
        %v2814 = vld [vmem:[%s2812 + $0x44] sm:$0xf]
        %v2815 = vld [vmem:[%s2812 + $0x48] sm:$0xf]
        %v2816 = vld [vmem:[%s2812 + $0x4c] sm:$0xf]
        %v2817 = vld [vmem:[%s2812 + $0x50] sm:$0xf]
        %v2818 = vld [vmem:[%s2812 + $0x54] sm:$0xf]
        %v2819 = vld [vmem:[%s2812 + $0x58] sm:$0xf]
        %v2820 = vld [vmem:[%s2812 + $0x5c] sm:$0xf]
        %v2821 = vld [vmem:[%s2812 + $0x60] sm:$0xf]
        %v2822 = vld [vmem:[%s2812 + $0x64] sm:$0xf]
        %v2823 = vld [vmem:[%s2812 + $0x68] sm:$0xf]
        %v2824 = vld [vmem:[%s2812 + $0x6c] sm:$0xf]
        %v2825 = vld [vmem:[%s2812 + $0x70] sm:$0xf]
        %v2826 = vld [vmem:[%s2812 + $0x74] sm:$0xf]
        %v2827 = vld [vmem:[%s2812 + $0x78] sm:$0xf]
        %v2828 = vld [vmem:[%s2812 + $0x7c] sm:$0xf]
        %s2829 = scalar_lea.vmem [#allocation7], 2
        %v2830 = vld [vmem:[%s2829] sm:$0x1]
        %v2832 = vlaneseq
        %v2833 = vshrl.u32 %v2832, 7
        %v2834 = vsub.s32 0, %v2833
        %v2835 = vrot.slane %v2830, %v2834
        %v2839 = vunpack.c.l.b16 %v2810
        %v2840 = vunpack.c.l.b16 %v2811
        %v2841 = vsel %vm1678, %v2840, %v2839
        %v2842 = vpack.c.b16 %v2841, %v2841
        %v2860 = vunpack.c.l.b16 %v2813
        %v2861 = vunpack.c.l.b16 %v2814
        %v2862 = vunpack.c.l.b16 %v2815
        %v2863 = vunpack.c.l.b16 %v2816
        %v2864 = vunpack.c.l.b16 %v2817
        %v2865 = vunpack.c.l.b16 %v2818
        %v2866 = vunpack.c.l.b16 %v2819
        %v2867 = vunpack.c.l.b16 %v2820
        %v2868 = vunpack.c.l.b16 %v2821
        %v2869 = vunpack.c.l.b16 %v2822
        %v2870 = vunpack.c.l.b16 %v2823
        %v2871 = vunpack.c.l.b16 %v2824
        %v2872 = vunpack.c.l.b16 %v2825
        %v2873 = vunpack.c.l.b16 %v2826
        %v2874 = vunpack.c.l.b16 %v2827
        %v2875 = vunpack.c.l.b16 %v2828
        %v2876 = vpack.c.b16 %v2861, %v2860
        %v2877 = vpack.c.b16 %v2863, %v2862
        %v2878 = vpack.c.b16 %v2865, %v2864
        %v2879 = vpack.c.b16 %v2867, %v2866
        %v2880 = vpack.c.b16 %v2869, %v2868
        %v2881 = vpack.c.b16 %v2871, %v2870
        %v2882 = vpack.c.b16 %v2873, %v2872
        %v2883 = vpack.c.b16 %v2875, %v2874
        %2892 = vmatprep.subr.bf16.mxu0 0
        %2893 = vmatpush1.bf16.msra.mxu0 %v2883
        %2894 = vmatprep.subr.bf16.mxu0 0
        %2895 = vmatpush1.bf16.msra.mxu0 %v2882
        %2896 = vmatprep.subr.bf16.mxu0 0
        %2897 = vmatpush1.bf16.msra.mxu0 %v2881
        %2898 = vmatprep.subr.bf16.mxu0 0
        %2899 = vmatpush1.bf16.msra.mxu0 %v2880
        %2900 = vmatprep.subr.bf16.mxu0 0
        %2901 = vmatpush1.bf16.msra.mxu0 %v2879
        %2902 = vmatprep.subr.bf16.mxu0 0
        %2903 = vmatpush1.bf16.msra.mxu0 %v2878
        %2904 = vmatprep.subr.bf16.mxu0 0
        %2905 = vmatpush1.bf16.msra.mxu0 %v2877
        %2906 = vmatprep.subr.bf16.mxu0 0
        %2907 = vmatpush1.bf16.msra.mxu0 %v2876
        %2908 = vmatprep.subr.bf16.mxu0 0
        %2909 = vmatpush2.bf16.msra.mxu0 0
        %2910 = vmatprep.subr.bf16.mxu0 0
        %2911 = vmatpush2.bf16.msra.mxu0 0
        %2912 = vmatprep.subr.bf16.mxu0 0
        %2913 = vmatpush2.bf16.msra.mxu0 0
        %2914 = vmatprep.subr.bf16.mxu0 0
        %2915 = vmatpush2.bf16.msra.mxu0 0
        %2916 = vmatprep.subr.bf16.mxu0 0
        %2917 = vmatpush2.bf16.msra.mxu0 0
        %2918 = vmatprep.subr.bf16.mxu0 0
        %2919 = vmatpush2.bf16.msra.mxu0 0
        %2920 = vmatprep.subr.bf16.mxu0 0
        %2921 = vmatpush2.bf16.msra.mxu0 0
        %2922 = vmatprep.subr.bf16.mxu0 0
        %2923 = vmatpush2.bf16.msra.mxu0 0
        %2924 = vmatprep.mubr.bf16.mxu0 0
        %2925 = vmatmul.mubr.bf16.gmra.mxu0 %v2842
        %v2926 = vpop.f32.mrf.mxu0
        %v2927 = vadd.f32 %v2835, %v2926
        %v2928 = vpop.f32.mrf.mxu0
        %v2929 = vpop.f32.mrf.mxu0
        %v2930 = vpop.f32.mrf.mxu0
        %2931 = vdwg.mxu0
        %v2932 = vld [vmem:[%s2812] sm:$0xf]
        %v2933 = vld [vmem:[%s2812 + $0x4] sm:$0xf]
        %v2934 = vld [vmem:[%s2812 + $0x8] sm:$0xf]
        %v2935 = vld [vmem:[%s2812 + $0xc] sm:$0xf]
        %v2936 = vld [vmem:[%s2812 + $0x10] sm:$0xf]
        %v2937 = vld [vmem:[%s2812 + $0x14] sm:$0xf]
        %v2938 = vld [vmem:[%s2812 + $0x18] sm:$0xf]
        %v2939 = vld [vmem:[%s2812 + $0x1c] sm:$0xf]
        %v2940 = vld [vmem:[%s2812 + $0x20] sm:$0xf]
        %v2941 = vld [vmem:[%s2812 + $0x24] sm:$0xf]
        %v2942 = vld [vmem:[%s2812 + $0x28] sm:$0xf]
        %v2943 = vld [vmem:[%s2812 + $0x2c] sm:$0xf]
        %v2944 = vld [vmem:[%s2812 + $0x30] sm:$0xf]
        %v2945 = vld [vmem:[%s2812 + $0x34] sm:$0xf]
        %v2946 = vld [vmem:[%s2812 + $0x38] sm:$0xf]
        %v2947 = vld [vmem:[%s2812 + $0x3c] sm:$0xf]
        %v2964 = vunpack.c.l.b16 %v2932
        %v2965 = vunpack.c.l.b16 %v2933
        %v2966 = vunpack.c.l.b16 %v2934
        %v2967 = vunpack.c.l.b16 %v2935
        %v2968 = vunpack.c.l.b16 %v2936
        %v2969 = vunpack.c.l.b16 %v2937
        %v2970 = vunpack.c.l.b16 %v2938
        %v2971 = vunpack.c.l.b16 %v2939
        %v2972 = vunpack.c.l.b16 %v2940
        %v2973 = vunpack.c.l.b16 %v2941
        %v2974 = vunpack.c.l.b16 %v2942
        %v2975 = vunpack.c.l.b16 %v2943
        %v2976 = vunpack.c.l.b16 %v2944
        %v2977 = vunpack.c.l.b16 %v2945
        %v2978 = vunpack.c.l.b16 %v2946
        %v2979 = vunpack.c.l.b16 %v2947
        %v2980 = vpack.c.b16 %v2965, %v2964
        %v2981 = vpack.c.b16 %v2967, %v2966
        %v2982 = vpack.c.b16 %v2969, %v2968
        %v2983 = vpack.c.b16 %v2971, %v2970
        %v2984 = vpack.c.b16 %v2973, %v2972
        %v2985 = vpack.c.b16 %v2975, %v2974
        %v2986 = vpack.c.b16 %v2977, %v2976
        %v2987 = vpack.c.b16 %v2979, %v2978
        %2996 = vmatprep.subr.bf16.mxu0 0
        %2997 = vmatpush1.bf16.msra.mxu0 %v2987
        %2998 = vmatprep.subr.bf16.mxu0 0
        %2999 = vmatpush1.bf16.msra.mxu0 %v2986
        %3000 = vmatprep.subr.bf16.mxu0 0
        %3001 = vmatpush1.bf16.msra.mxu0 %v2985
        %3002 = vmatprep.subr.bf16.mxu0 0
        %3003 = vmatpush1.bf16.msra.mxu0 %v2984
        %3004 = vmatprep.subr.bf16.mxu0 0
        %3005 = vmatpush1.bf16.msra.mxu0 %v2983
        %3006 = vmatprep.subr.bf16.mxu0 0
        %3007 = vmatpush1.bf16.msra.mxu0 %v2982
        %3008 = vmatprep.subr.bf16.mxu0 0
        %3009 = vmatpush1.bf16.msra.mxu0 %v2981
        %3010 = vmatprep.subr.bf16.mxu0 0
        %3011 = vmatpush1.bf16.msra.mxu0 %v2980
        %3012 = vmatprep.subr.bf16.mxu0 0
        %3013 = vmatpush2.bf16.msra.mxu0 0
        %3014 = vmatprep.subr.bf16.mxu0 0
        %3015 = vmatpush2.bf16.msra.mxu0 0
        %3016 = vmatprep.subr.bf16.mxu0 0
        %3017 = vmatpush2.bf16.msra.mxu0 0
        %3018 = vmatprep.subr.bf16.mxu0 0
        %3019 = vmatpush2.bf16.msra.mxu0 0
        %3020 = vmatprep.subr.bf16.mxu0 0
        %3021 = vmatpush2.bf16.msra.mxu0 0
        %3022 = vmatprep.subr.bf16.mxu0 0
        %3023 = vmatpush2.bf16.msra.mxu0 0
        %3024 = vmatprep.subr.bf16.mxu0 0
        %3025 = vmatpush2.bf16.msra.mxu0 0
        %3026 = vmatprep.subr.bf16.mxu0 0
        %3027 = vmatpush2.bf16.msra.mxu0 0
        %3028 = vmatprep.mubr.bf16.mxu0 0
        %3029 = vmatmul.mubr.bf16.gmra.mxu0 %v2760
        %v3030 = vpop.f32.mrf.mxu0
        %v3031 = vadd.f32 0.0, %v3030
        %v3032 = vpop.f32.mrf.mxu0
        %v3033 = vpop.f32.mrf.mxu0
        %v3034 = vadd.f32 0.0, %v3033
        %v3035 = vpop.f32.mrf.mxu0
        %3036 = vmatprep.mubr.bf16.mxu0 0
        %3037 = vmatmul.mubr.bf16.gmra.mxu0 %v2761
        %v3038 = vpop.f32.mrf.mxu0
        %v3039 = vadd.f32 0.0, %v3038
        %v3040 = vpop.f32.mrf.mxu0
        %v3041 = vpop.f32.mrf.mxu0
        %v3042 = vadd.f32 0.0, %v3041
        %v3043 = vpop.f32.mrf.mxu0
        %3044 = vmatprep.mubr.bf16.mxu0 0
        %3045 = vmatmul.mubr.bf16.gmra.mxu0 %v2762
        %v3046 = vpop.f32.mrf.mxu0
        %v3047 = vadd.f32 0.0, %v3046
        %v3048 = vpop.f32.mrf.mxu0
        %v3049 = vpop.f32.mrf.mxu0
        %v3050 = vadd.f32 0.0, %v3049
        %v3051 = vpop.f32.mrf.mxu0
        %3052 = vmatprep.mubr.bf16.mxu0 0
        %3053 = vmatmul.mubr.bf16.gmra.mxu0 %v2763
        %v3054 = vpop.f32.mrf.mxu0
        %v3055 = vadd.f32 0.0, %v3054
        %v3056 = vpop.f32.mrf.mxu0
        %v3057 = vpop.f32.mrf.mxu0
        %v3058 = vadd.f32 0.0, %v3057
        %v3059 = vpop.f32.mrf.mxu0
        %3060 = vmatprep.mubr.bf16.mxu0 0
        %3061 = vmatmul.mubr.bf16.gmra.mxu0 %v2764
        %v3062 = vpop.f32.mrf.mxu0
        %v3063 = vadd.f32 0.0, %v3062
        %v3064 = vpop.f32.mrf.mxu0
        %v3065 = vpop.f32.mrf.mxu0
        %v3066 = vadd.f32 0.0, %v3065
        %v3067 = vpop.f32.mrf.mxu0
        %3068 = vmatprep.mubr.bf16.mxu0 0
        %3069 = vmatmul.mubr.bf16.gmra.mxu0 %v2765
        %v3070 = vpop.f32.mrf.mxu0
        %v3071 = vadd.f32 0.0, %v3070
        %v3072 = vpop.f32.mrf.mxu0
        %v3073 = vpop.f32.mrf.mxu0
        %v3074 = vadd.f32 0.0, %v3073
        %v3075 = vpop.f32.mrf.mxu0
        %3076 = vmatprep.mubr.bf16.mxu0 0
        %3077 = vmatmul.mubr.bf16.gmra.mxu0 %v2766
        %v3078 = vpop.f32.mrf.mxu0
        %v3079 = vadd.f32 0.0, %v3078
        %v3080 = vpop.f32.mrf.mxu0
        %v3081 = vpop.f32.mrf.mxu0
        %v3082 = vadd.f32 0.0, %v3081
        %v3083 = vpop.f32.mrf.mxu0
        %3084 = vmatprep.mubr.bf16.mxu0 0
        %3085 = vmatmul.mubr.bf16.gmra.mxu0 %v2767
        %v3086 = vpop.f32.mrf.mxu0
        %v3087 = vadd.f32 0.0, %v3086
        %v3088 = vpop.f32.mrf.mxu0
        %v3089 = vpop.f32.mrf.mxu0
        %v3090 = vadd.f32 0.0, %v3089
        %v3091 = vpop.f32.mrf.mxu0
        %3092 = vmatprep.mubr.bf16.mxu0 0
        %3093 = vmatmul.mubr.bf16.gmra.mxu0 %v2768
        %v3094 = vpop.f32.mrf.mxu0
        %v3095 = vadd.f32 0.0, %v3094
        %v3096 = vpop.f32.mrf.mxu0
        %v3097 = vpop.f32.mrf.mxu0
        %v3098 = vadd.f32 0.0, %v3097
        %v3099 = vpop.f32.mrf.mxu0
        %3100 = vmatprep.mubr.bf16.mxu0 0
        %3101 = vmatmul.mubr.bf16.gmra.mxu0 %v2769
        %v3102 = vpop.f32.mrf.mxu0
        %v3103 = vadd.f32 0.0, %v3102
        %v3104 = vpop.f32.mrf.mxu0
        %v3105 = vpop.f32.mrf.mxu0
        %v3106 = vadd.f32 0.0, %v3105
        %v3107 = vpop.f32.mrf.mxu0
        %3108 = vmatprep.mubr.bf16.mxu0 0
        %3109 = vmatmul.mubr.bf16.gmra.mxu0 %v2770
        %v3110 = vpop.f32.mrf.mxu0
        %v3111 = vadd.f32 0.0, %v3110
        %v3112 = vpop.f32.mrf.mxu0
        %v3113 = vpop.f32.mrf.mxu0
        %v3114 = vadd.f32 0.0, %v3113
        %v3115 = vpop.f32.mrf.mxu0
        %3116 = vmatprep.mubr.bf16.mxu0 0
        %3117 = vmatmul.mubr.bf16.gmra.mxu0 %v2771
        %v3118 = vpop.f32.mrf.mxu0
        %v3119 = vadd.f32 0.0, %v3118
        %v3120 = vpop.f32.mrf.mxu0
        %v3121 = vpop.f32.mrf.mxu0
        %v3122 = vadd.f32 0.0, %v3121
        %v3123 = vpop.f32.mrf.mxu0
        %3124 = vmatprep.mubr.bf16.mxu0 0
        %3125 = vmatmul.mubr.bf16.gmra.mxu0 %v2772
        %v3126 = vpop.f32.mrf.mxu0
        %v3127 = vadd.f32 0.0, %v3126
        %v3128 = vpop.f32.mrf.mxu0
        %v3129 = vpop.f32.mrf.mxu0
        %v3130 = vadd.f32 0.0, %v3129
        %v3131 = vpop.f32.mrf.mxu0
        %3132 = vmatprep.mubr.bf16.mxu0 0
        %3133 = vmatmul.mubr.bf16.gmra.mxu0 %v2773
        %v3134 = vpop.f32.mrf.mxu0
        %v3135 = vadd.f32 0.0, %v3134
        %v3136 = vpop.f32.mrf.mxu0
        %v3137 = vpop.f32.mrf.mxu0
        %v3138 = vadd.f32 0.0, %v3137
        %v3139 = vpop.f32.mrf.mxu0
        %3140 = vmatprep.mubr.bf16.mxu0 0
        %3141 = vmatmul.mubr.bf16.gmra.mxu0 %v2774
        %v3142 = vpop.f32.mrf.mxu0
        %v3143 = vadd.f32 0.0, %v3142
        %v3144 = vpop.f32.mrf.mxu0
        %v3145 = vpop.f32.mrf.mxu0
        %v3146 = vadd.f32 0.0, %v3145
        %v3147 = vpop.f32.mrf.mxu0
        %3148 = vmatprep.mubr.bf16.mxu0 0
        %3149 = vmatmul.mubr.bf16.gmra.mxu0 %v2775
        %v3150 = vpop.f32.mrf.mxu0
        %v3151 = vadd.f32 0.0, %v3150
        %v3152 = vpop.f32.mrf.mxu0
        %v3153 = vpop.f32.mrf.mxu0
        %v3154 = vadd.f32 0.0, %v3153
        %v3155 = vpop.f32.mrf.mxu0
        %3156 = vdwg.mxu0
        %v3159 = vunpack.c.l.s4 1966171168
        %v3160 = vunpack.c.0.s8 %v3159
        %v3161 = vlaneseq
        %v3162 = vshrl.u32 %v3161, 7
        %v3163 = vsub.s32 %v3160, %v3162
        %v3164 = vrot.slane %v2927, %v3163
        %v3165 = vcombine.high %v3164, %v3164
        %v3167 = vunpack.c.l.s4 1966171168
        %v3168 = vunpack.c.0.s8 %v3167
        %v3169 = vlaneseq
        %v3170 = vshrl.u32 %v3169, 7
        %v3171 = vsub.s32 %v3168, %v3170
        %v3172 = vrot.slane %v3164, %v3171
        %v3174 = vunpack.c.l.s4 1966171168
        %v3175 = vunpack.c.0.s8 %v3174
        %v3176 = vlaneseq
        %v3177 = vshrl.u32 %v3176, 7
        %v3178 = vsub.s32 %v3175, %v3177
        %v3179 = vrot.slane %v3165, %v3178
        %v3180 = vlaneseq
        %v3181 = vshrl.u32 %v3180, 7
        %v3182 = vsub.s32 0, %v3181
        %v3183 = vrot.slane %v3172, %v3182
        %v3184 = vlaneseq
        %v3185 = vshrl.u32 %v3184, 7
        %v3186 = vsub.s32 0, %v3185
        %v3187 = vrot.slane %v3179, %v3186
        %v3190 = vadd.f32 %v3031, %v3183
        %v3191 = vadd.f32 %v3034, %v3183
        %v3192 = vadd.f32 %v3039, %v3183
        %v3193 = vadd.f32 %v3042, %v3183
        %v3194 = vadd.f32 %v3047, %v3183
        %v3195 = vadd.f32 %v3050, %v3183
        %v3196 = vadd.f32 %v3055, %v3183
        %v3197 = vadd.f32 %v3058, %v3183
        %v3198 = vadd.f32 %v3063, %v3183
        %v3199 = vadd.f32 %v3066, %v3183
        %v3200 = vadd.f32 %v3071, %v3183
        %v3201 = vadd.f32 %v3074, %v3183
        %v3202 = vadd.f32 %v3079, %v3183
        %v3203 = vadd.f32 %v3082, %v3183
        %v3204 = vadd.f32 %v3087, %v3183
        %v3205 = vadd.f32 %v3090, %v3183
        %v3206 = vadd.f32 %v3095, %v3187
        %v3207 = vadd.f32 %v3098, %v3187
        %v3208 = vadd.f32 %v3103, %v3187
        %v3209 = vadd.f32 %v3106, %v3187
        %v3210 = vadd.f32 %v3111, %v3187
        %v3211 = vadd.f32 %v3114, %v3187
        %v3212 = vadd.f32 %v3119, %v3187
        %v3213 = vadd.f32 %v3122, %v3187
        %v3214 = vadd.f32 %v3127, %v3187
        %v3215 = vadd.f32 %v3130, %v3187
        %v3216 = vadd.f32 %v3135, %v3187
        %v3217 = vadd.f32 %v3138, %v3187
        %v3218 = vadd.f32 %v3143, %v3187
        %v3219 = vadd.f32 %v3146, %v3187
        %v3220 = vadd.f32 %v3151, %v3187
        %v3221 = vadd.f32 %v3154, %v3187
        %v3222 = vmax.f32 %v3190, 0.0
        %v3223 = vmax.f32 %v3191, 0.0
        %v3224 = vmax.f32 %v3192, 0.0
        %v3225 = vmax.f32 %v3193, 0.0
        %v3226 = vmax.f32 %v3194, 0.0
        %v3227 = vmax.f32 %v3195, 0.0
        %v3228 = vmax.f32 %v3196, 0.0
        %v3229 = vmax.f32 %v3197, 0.0
        %v3230 = vmax.f32 %v3198, 0.0
        %v3231 = vmax.f32 %v3199, 0.0
        %v3232 = vmax.f32 %v3200, 0.0
        %v3233 = vmax.f32 %v3201, 0.0
        %v3234 = vmax.f32 %v3202, 0.0
        %v3235 = vmax.f32 %v3203, 0.0
        %v3236 = vmax.f32 %v3204, 0.0
        %v3237 = vmax.f32 %v3205, 0.0
        %v3238 = vmax.f32 %v3206, 0.0
        %v3239 = vmax.f32 %v3207, 0.0
        %v3240 = vmax.f32 %v3208, 0.0
        %v3241 = vmax.f32 %v3209, 0.0
        %v3242 = vmax.f32 %v3210, 0.0
        %v3243 = vmax.f32 %v3211, 0.0
        %v3244 = vmax.f32 %v3212, 0.0
        %v3245 = vmax.f32 %v3213, 0.0
        %v3246 = vmax.f32 %v3214, 0.0
        %v3247 = vmax.f32 %v3215, 0.0
        %v3248 = vmax.f32 %v3216, 0.0
        %v3249 = vmax.f32 %v3217, 0.0
        %v3250 = vmax.f32 %v3218, 0.0
        %v3251 = vmax.f32 %v3219, 0.0
        %v3252 = vmax.f32 %v3220, 0.0
        %v3253 = vmax.f32 %v3221, 0.0
        %v3254 = vpack.c.bf16 %v3223, %v3222
        %v3255 = vpack.c.bf16 %v3225, %v3224
        %v3256 = vpack.c.bf16 %v3227, %v3226
        %v3257 = vpack.c.bf16 %v3229, %v3228
        %v3258 = vpack.c.bf16 %v3231, %v3230
        %v3259 = vpack.c.bf16 %v3233, %v3232
        %v3260 = vpack.c.bf16 %v3235, %v3234
        %v3261 = vpack.c.bf16 %v3237, %v3236
        %v3262 = vpack.c.bf16 %v3239, %v3238
        %v3263 = vpack.c.bf16 %v3241, %v3240
        %v3264 = vpack.c.bf16 %v3243, %v3242
        %v3265 = vpack.c.bf16 %v3245, %v3244
        %v3266 = vpack.c.bf16 %v3247, %v3246
        %v3267 = vpack.c.bf16 %v3249, %v3248
        %v3268 = vpack.c.bf16 %v3251, %v3250
        %v3269 = vpack.c.bf16 %v3253, %v3252
        %s3270 = scalar_lea.vmem [#allocation8], 128
        %v3271 = vld [vmem:[%s3270] sm:$0xf]
        %v3272 = vld [vmem:[%s3270 + $0x4] sm:$0xf]
        %v3273 = vld [vmem:[%s3270 + $0x8] sm:$0xf]
        %v3274 = vld [vmem:[%s3270 + $0xc] sm:$0xf]
        %v3275 = vld [vmem:[%s3270 + $0x10] sm:$0xf]
        %v3276 = vld [vmem:[%s3270 + $0x14] sm:$0xf]
        %v3277 = vld [vmem:[%s3270 + $0x18] sm:$0xf]
        %v3278 = vld [vmem:[%s3270 + $0x1c] sm:$0xf]
        %v3279 = vld [vmem:[%s3270 + $0x20] sm:$0xf]
        %v3280 = vld [vmem:[%s3270 + $0x24] sm:$0xf]
        %v3281 = vld [vmem:[%s3270 + $0x28] sm:$0xf]
        %v3282 = vld [vmem:[%s3270 + $0x2c] sm:$0xf]
        %v3283 = vld [vmem:[%s3270 + $0x30] sm:$0xf]
        %v3284 = vld [vmem:[%s3270 + $0x34] sm:$0xf]
        %v3285 = vld [vmem:[%s3270 + $0x38] sm:$0xf]
        %v3286 = vld [vmem:[%s3270 + $0x3c] sm:$0xf]
        %s3287 = scalar_lea.vmem %s4, 2
        %v3288 = vld [vmem:[%s3287] sm:$0x1]
        %v3290 = vlaneseq
        %v3291 = vshrl.u32 %v3290, 7
        %v3292 = vsub.s32 0, %v3291
        %v3293 = vrot.slane %v3288, %v3292
        %v3311 = vunpack.c.l.b16 %v3271
        %v3312 = vunpack.c.l.b16 %v3272
        %v3313 = vunpack.c.l.b16 %v3273
        %v3314 = vunpack.c.l.b16 %v3274
        %v3315 = vunpack.c.l.b16 %v3275
        %v3316 = vunpack.c.l.b16 %v3276
        %v3317 = vunpack.c.l.b16 %v3277
        %v3318 = vunpack.c.l.b16 %v3278
        %v3319 = vunpack.c.l.b16 %v3279
        %v3320 = vunpack.c.l.b16 %v3280
        %v3321 = vunpack.c.l.b16 %v3281
        %v3322 = vunpack.c.l.b16 %v3282
        %v3323 = vunpack.c.l.b16 %v3283
        %v3324 = vunpack.c.l.b16 %v3284
        %v3325 = vunpack.c.l.b16 %v3285
        %v3326 = vunpack.c.l.b16 %v3286
        %v3327 = vpack.c.b16 %v3312, %v3311
        %v3328 = vpack.c.b16 %v3314, %v3313
        %v3329 = vpack.c.b16 %v3316, %v3315
        %v3330 = vpack.c.b16 %v3318, %v3317
        %v3331 = vpack.c.b16 %v3320, %v3319
        %v3332 = vpack.c.b16 %v3322, %v3321
        %v3333 = vpack.c.b16 %v3324, %v3323
        %v3334 = vpack.c.b16 %v3326, %v3325
        %3343 = vmatprep.subr.bf16.mxu0 0
        %3344 = vmatpush1.bf16.msra.mxu0 %v3334
        %3345 = vmatprep.subr.bf16.mxu0 0
        %3346 = vmatpush1.bf16.msra.mxu0 %v3333
        %3347 = vmatprep.subr.bf16.mxu0 0
        %3348 = vmatpush1.bf16.msra.mxu0 %v3332
        %3349 = vmatprep.subr.bf16.mxu0 0
        %3350 = vmatpush1.bf16.msra.mxu0 %v3331
        %3351 = vmatprep.subr.bf16.mxu0 0
        %3352 = vmatpush1.bf16.msra.mxu0 %v3330
        %3353 = vmatprep.subr.bf16.mxu0 0
        %3354 = vmatpush1.bf16.msra.mxu0 %v3329
        %3355 = vmatprep.subr.bf16.mxu0 0
        %3356 = vmatpush1.bf16.msra.mxu0 %v3328
        %3357 = vmatprep.subr.bf16.mxu0 0
        %3358 = vmatpush1.bf16.msra.mxu0 %v3327
        %3359 = vmatprep.subr.bf16.mxu0 0
        %3360 = vmatpush2.bf16.msra.mxu0 0
        %3361 = vmatprep.subr.bf16.mxu0 0
        %3362 = vmatpush2.bf16.msra.mxu0 0
        %3363 = vmatprep.subr.bf16.mxu0 0
        %3364 = vmatpush2.bf16.msra.mxu0 0
        %3365 = vmatprep.subr.bf16.mxu0 0
        %3366 = vmatpush2.bf16.msra.mxu0 0
        %3367 = vmatprep.subr.bf16.mxu0 0
        %3368 = vmatpush2.bf16.msra.mxu0 0
        %3369 = vmatprep.subr.bf16.mxu0 0
        %3370 = vmatpush2.bf16.msra.mxu0 0
        %3371 = vmatprep.subr.bf16.mxu0 0
        %3372 = vmatpush2.bf16.msra.mxu0 0
        %3373 = vmatprep.subr.bf16.mxu0 0
        %3374 = vmatpush2.bf16.msra.mxu0 0
        %3375 = vmatprep.mubr.bf16.mxu0 0
        %3376 = vmatmul.mubr.bf16.gmra.mxu0 %v3254
        %v3377 = vpop.f32.mrf.mxu0
        %v3378 = vadd.f32 %v3293, %v3377
        %v3379 = vpop.f32.mrf.mxu0
        %v3380 = vpop.f32.mrf.mxu0
        %v3381 = vadd.f32 %v3293, %v3380
        %v3382 = vpop.f32.mrf.mxu0
        %3383 = vmatprep.mubr.bf16.mxu0 0
        %3384 = vmatmul.mubr.bf16.gmra.mxu0 %v3255
        %v3385 = vpop.f32.mrf.mxu0
        %v3386 = vadd.f32 %v3293, %v3385
        %v3387 = vpop.f32.mrf.mxu0
        %v3388 = vpop.f32.mrf.mxu0
        %v3389 = vadd.f32 %v3293, %v3388
        %v3390 = vpop.f32.mrf.mxu0
        %3391 = vmatprep.mubr.bf16.mxu0 0
        %3392 = vmatmul.mubr.bf16.gmra.mxu0 %v3256
        %v3393 = vpop.f32.mrf.mxu0
        %v3394 = vadd.f32 %v3293, %v3393
        %v3395 = vpop.f32.mrf.mxu0
        %v3396 = vpop.f32.mrf.mxu0
        %v3397 = vadd.f32 %v3293, %v3396
        %v3398 = vpop.f32.mrf.mxu0
        %3399 = vmatprep.mubr.bf16.mxu0 0
        %3400 = vmatmul.mubr.bf16.gmra.mxu0 %v3257
        %v3401 = vpop.f32.mrf.mxu0
        %v3402 = vadd.f32 %v3293, %v3401
        %v3403 = vpop.f32.mrf.mxu0
        %v3404 = vpop.f32.mrf.mxu0
        %v3405 = vadd.f32 %v3293, %v3404
        %v3406 = vpop.f32.mrf.mxu0
        %3407 = vmatprep.mubr.bf16.mxu0 0
        %3408 = vmatmul.mubr.bf16.gmra.mxu0 %v3258
        %v3409 = vpop.f32.mrf.mxu0
        %v3410 = vadd.f32 %v3293, %v3409
        %v3411 = vpop.f32.mrf.mxu0
        %v3412 = vpop.f32.mrf.mxu0
        %v3413 = vadd.f32 %v3293, %v3412
        %v3414 = vpop.f32.mrf.mxu0
        %3415 = vmatprep.mubr.bf16.mxu0 0
        %3416 = vmatmul.mubr.bf16.gmra.mxu0 %v3259
        %v3417 = vpop.f32.mrf.mxu0
        %v3418 = vadd.f32 %v3293, %v3417
        %v3419 = vpop.f32.mrf.mxu0
        %v3420 = vpop.f32.mrf.mxu0
        %v3421 = vadd.f32 %v3293, %v3420
        %v3422 = vpop.f32.mrf.mxu0
        %3423 = vmatprep.mubr.bf16.mxu0 0
        %3424 = vmatmul.mubr.bf16.gmra.mxu0 %v3260
        %v3425 = vpop.f32.mrf.mxu0
        %v3426 = vadd.f32 %v3293, %v3425
        %v3427 = vpop.f32.mrf.mxu0
        %v3428 = vpop.f32.mrf.mxu0
        %v3429 = vadd.f32 %v3293, %v3428
        %v3430 = vpop.f32.mrf.mxu0
        %3431 = vmatprep.mubr.bf16.mxu0 0
        %3432 = vmatmul.mubr.bf16.gmra.mxu0 %v3261
        %v3433 = vpop.f32.mrf.mxu0
        %v3434 = vadd.f32 %v3293, %v3433
        %v3435 = vpop.f32.mrf.mxu0
        %v3436 = vpop.f32.mrf.mxu0
        %v3437 = vadd.f32 %v3293, %v3436
        %v3438 = vpop.f32.mrf.mxu0
        %3439 = vmatprep.mubr.bf16.mxu0 0
        %3440 = vmatmul.mubr.bf16.gmra.mxu0 %v3262
        %v3441 = vpop.f32.mrf.mxu0
        %v3442 = vadd.f32 %v3293, %v3441
        %v3443 = vpop.f32.mrf.mxu0
        %v3444 = vpop.f32.mrf.mxu0
        %v3445 = vadd.f32 %v3293, %v3444
        %v3446 = vpop.f32.mrf.mxu0
        %3447 = vmatprep.mubr.bf16.mxu0 0
        %3448 = vmatmul.mubr.bf16.gmra.mxu0 %v3263
        %v3449 = vpop.f32.mrf.mxu0
        %v3450 = vadd.f32 %v3293, %v3449
        %v3451 = vpop.f32.mrf.mxu0
        %v3452 = vpop.f32.mrf.mxu0
        %v3453 = vadd.f32 %v3293, %v3452
        %v3454 = vpop.f32.mrf.mxu0
        %3455 = vmatprep.mubr.bf16.mxu0 0
        %3456 = vmatmul.mubr.bf16.gmra.mxu0 %v3264
        %v3457 = vpop.f32.mrf.mxu0
        %v3458 = vadd.f32 %v3293, %v3457
        %v3459 = vpop.f32.mrf.mxu0
        %v3460 = vpop.f32.mrf.mxu0
        %v3461 = vadd.f32 %v3293, %v3460
        %v3462 = vpop.f32.mrf.mxu0
        %3463 = vmatprep.mubr.bf16.mxu0 0
        %3464 = vmatmul.mubr.bf16.gmra.mxu0 %v3265
        %v3465 = vpop.f32.mrf.mxu0
        %v3466 = vadd.f32 %v3293, %v3465
        %v3467 = vpop.f32.mrf.mxu0
        %v3468 = vpop.f32.mrf.mxu0
        %v3469 = vadd.f32 %v3293, %v3468
        %v3470 = vpop.f32.mrf.mxu0
        %3471 = vmatprep.mubr.bf16.mxu0 0
        %3472 = vmatmul.mubr.bf16.gmra.mxu0 %v3266
        %v3473 = vpop.f32.mrf.mxu0
        %v3474 = vadd.f32 %v3293, %v3473
        %v3475 = vpop.f32.mrf.mxu0
        %v3476 = vpop.f32.mrf.mxu0
        %v3477 = vadd.f32 %v3293, %v3476
        %v3478 = vpop.f32.mrf.mxu0
        %3479 = vmatprep.mubr.bf16.mxu0 0
        %3480 = vmatmul.mubr.bf16.gmra.mxu0 %v3267
        %v3481 = vpop.f32.mrf.mxu0
        %v3482 = vadd.f32 %v3293, %v3481
        %v3483 = vpop.f32.mrf.mxu0
        %v3484 = vpop.f32.mrf.mxu0
        %v3485 = vadd.f32 %v3293, %v3484
        %v3486 = vpop.f32.mrf.mxu0
        %3487 = vmatprep.mubr.bf16.mxu0 0
        %3488 = vmatmul.mubr.bf16.gmra.mxu0 %v3268
        %v3489 = vpop.f32.mrf.mxu0
        %v3490 = vadd.f32 %v3293, %v3489
        %v3491 = vpop.f32.mrf.mxu0
        %v3492 = vpop.f32.mrf.mxu0
        %v3493 = vadd.f32 %v3293, %v3492
        %v3494 = vpop.f32.mrf.mxu0
        %3495 = vmatprep.mubr.bf16.mxu0 0
        %3496 = vmatmul.mubr.bf16.gmra.mxu0 %v3269
        %v3497 = vpop.f32.mrf.mxu0
        %v3498 = vadd.f32 %v3293, %v3497
        %v3499 = vpop.f32.mrf.mxu0
        %v3500 = vpop.f32.mrf.mxu0
        %v3501 = vadd.f32 %v3293, %v3500
        %v3502 = vpop.f32.mrf.mxu0
        %3503 = vdwg.mxu0
        %s3504 = scalar_lea.vmem [#allocation10], 256
        %v3505 = vld [vmem:[%s3504 + $0x40] sm:$0xf]
        %v3506 = vld [vmem:[%s3504 + $0x44] sm:$0xf]
        %v3507 = vld [vmem:[%s3504 + $0x48] sm:$0xf]
        %v3508 = vld [vmem:[%s3504 + $0x4c] sm:$0xf]
        %v3509 = vld [vmem:[%s3504 + $0x50] sm:$0xf]
        %v3510 = vld [vmem:[%s3504 + $0x54] sm:$0xf]
        %v3511 = vld [vmem:[%s3504 + $0x58] sm:$0xf]
        %v3512 = vld [vmem:[%s3504 + $0x5c] sm:$0xf]
        %v3513 = vld [vmem:[%s3504 + $0x60] sm:$0xf]
        %v3514 = vld [vmem:[%s3504 + $0x64] sm:$0xf]
        %v3515 = vld [vmem:[%s3504 + $0x68] sm:$0xf]
        %v3516 = vld [vmem:[%s3504 + $0x6c] sm:$0xf]
        %v3517 = vld [vmem:[%s3504 + $0x70] sm:$0xf]
        %v3518 = vld [vmem:[%s3504 + $0x74] sm:$0xf]
        %v3519 = vld [vmem:[%s3504 + $0x78] sm:$0xf]
        %v3520 = vld [vmem:[%s3504 + $0x7c] sm:$0xf]
        %v3523 = vunpack.c.l.b16 %v2792
        %v3524 = vunpack.c.l.b16 %v2809
        %v3525 = vsel %vm1678, %v3524, %v3523
        %v3526 = vpack.c.b16 %v3525, %v3525
        %v3544 = vunpack.c.l.b16 %v3505
        %v3545 = vunpack.c.l.b16 %v3506
        %v3546 = vunpack.c.l.b16 %v3507
        %v3547 = vunpack.c.l.b16 %v3508
        %v3548 = vunpack.c.l.b16 %v3509
        %v3549 = vunpack.c.l.b16 %v3510
        %v3550 = vunpack.c.l.b16 %v3511
        %v3551 = vunpack.c.l.b16 %v3512
        %v3552 = vunpack.c.l.b16 %v3513
        %v3553 = vunpack.c.l.b16 %v3514
        %v3554 = vunpack.c.l.b16 %v3515
        %v3555 = vunpack.c.l.b16 %v3516
        %v3556 = vunpack.c.l.b16 %v3517
        %v3557 = vunpack.c.l.b16 %v3518
        %v3558 = vunpack.c.l.b16 %v3519
        %v3559 = vunpack.c.l.b16 %v3520
        %v3560 = vpack.c.b16 %v3545, %v3544
        %v3561 = vpack.c.b16 %v3547, %v3546
        %v3562 = vpack.c.b16 %v3549, %v3548
        %v3563 = vpack.c.b16 %v3551, %v3550
        %v3564 = vpack.c.b16 %v3553, %v3552
        %v3565 = vpack.c.b16 %v3555, %v3554
        %v3566 = vpack.c.b16 %v3557, %v3556
        %v3567 = vpack.c.b16 %v3559, %v3558
        %3576 = vmatprep.subr.bf16.mxu0 0
        %3577 = vmatpush1.bf16.msra.mxu0 %v3567
        %3578 = vmatprep.subr.bf16.mxu0 0
        %3579 = vmatpush1.bf16.msra.mxu0 %v3566
        %3580 = vmatprep.subr.bf16.mxu0 0
        %3581 = vmatpush1.bf16.msra.mxu0 %v3565
        %3582 = vmatprep.subr.bf16.mxu0 0
        %3583 = vmatpush1.bf16.msra.mxu0 %v3564
        %3584 = vmatprep.subr.bf16.mxu0 0
        %3585 = vmatpush1.bf16.msra.mxu0 %v3563
        %3586 = vmatprep.subr.bf16.mxu0 0
        %3587 = vmatpush1.bf16.msra.mxu0 %v3562
        %3588 = vmatprep.subr.bf16.mxu0 0
        %3589 = vmatpush1.bf16.msra.mxu0 %v3561
        %3590 = vmatprep.subr.bf16.mxu0 0
        %3591 = vmatpush1.bf16.msra.mxu0 %v3560
        %3592 = vmatprep.subr.bf16.mxu0 0
        %3593 = vmatpush2.bf16.msra.mxu0 0
        %3594 = vmatprep.subr.bf16.mxu0 0
        %3595 = vmatpush2.bf16.msra.mxu0 0
        %3596 = vmatprep.subr.bf16.mxu0 0
        %3597 = vmatpush2.bf16.msra.mxu0 0
        %3598 = vmatprep.subr.bf16.mxu0 0
        %3599 = vmatpush2.bf16.msra.mxu0 0
        %3600 = vmatprep.subr.bf16.mxu0 0
        %3601 = vmatpush2.bf16.msra.mxu0 0
        %3602 = vmatprep.subr.bf16.mxu0 0
        %3603 = vmatpush2.bf16.msra.mxu0 0
        %3604 = vmatprep.subr.bf16.mxu0 0
        %3605 = vmatpush2.bf16.msra.mxu0 0
        %3606 = vmatprep.subr.bf16.mxu0 0
        %3607 = vmatpush2.bf16.msra.mxu0 0
        %3608 = vmatprep.mubr.bf16.mxu0 0
        %3609 = vmatmul.mubr.bf16.gmra.mxu0 %v3526
        %v3610 = vpop.f32.mrf.mxu0
        %v3611 = vadd.f32 0.0, %v3610
        %v3612 = vpop.f32.mrf.mxu0
        %v3613 = vpop.f32.mrf.mxu0
        %v3614 = vpop.f32.mrf.mxu0
        %3615 = vdwg.mxu0
        %v3616 = vld [vmem:[%s3504] sm:$0xf]
        %v3617 = vld [vmem:[%s3504 + $0x4] sm:$0xf]
        %v3618 = vld [vmem:[%s3504 + $0x8] sm:$0xf]
        %v3619 = vld [vmem:[%s3504 + $0xc] sm:$0xf]
        %v3620 = vld [vmem:[%s3504 + $0x10] sm:$0xf]
        %v3621 = vld [vmem:[%s3504 + $0x14] sm:$0xf]
        %v3622 = vld [vmem:[%s3504 + $0x18] sm:$0xf]
        %v3623 = vld [vmem:[%s3504 + $0x1c] sm:$0xf]
        %v3624 = vld [vmem:[%s3504 + $0x20] sm:$0xf]
        %v3625 = vld [vmem:[%s3504 + $0x24] sm:$0xf]
        %v3626 = vld [vmem:[%s3504 + $0x28] sm:$0xf]
        %v3627 = vld [vmem:[%s3504 + $0x2c] sm:$0xf]
        %v3628 = vld [vmem:[%s3504 + $0x30] sm:$0xf]
        %v3629 = vld [vmem:[%s3504 + $0x34] sm:$0xf]
        %v3630 = vld [vmem:[%s3504 + $0x38] sm:$0xf]
        %v3631 = vld [vmem:[%s3504 + $0x3c] sm:$0xf]
        %v3648 = vunpack.c.l.b16 %v3616
        %v3649 = vunpack.c.l.b16 %v3617
        %v3650 = vunpack.c.l.b16 %v3618
        %v3651 = vunpack.c.l.b16 %v3619
        %v3652 = vunpack.c.l.b16 %v3620
        %v3653 = vunpack.c.l.b16 %v3621
        %v3654 = vunpack.c.l.b16 %v3622
        %v3655 = vunpack.c.l.b16 %v3623
        %v3656 = vunpack.c.l.b16 %v3624
        %v3657 = vunpack.c.l.b16 %v3625
        %v3658 = vunpack.c.l.b16 %v3626
        %v3659 = vunpack.c.l.b16 %v3627
        %v3660 = vunpack.c.l.b16 %v3628
        %v3661 = vunpack.c.l.b16 %v3629
        %v3662 = vunpack.c.l.b16 %v3630
        %v3663 = vunpack.c.l.b16 %v3631
        %v3664 = vpack.c.b16 %v3649, %v3648
        %v3665 = vpack.c.b16 %v3651, %v3650
        %v3666 = vpack.c.b16 %v3653, %v3652
        %v3667 = vpack.c.b16 %v3655, %v3654
        %v3668 = vpack.c.b16 %v3657, %v3656
        %v3669 = vpack.c.b16 %v3659, %v3658
        %v3670 = vpack.c.b16 %v3661, %v3660
        %v3671 = vpack.c.b16 %v3663, %v3662
        %3680 = vmatprep.subr.bf16.mxu0 0
        %3681 = vmatpush1.bf16.msra.mxu0 %v3671
        %3682 = vmatprep.subr.bf16.mxu0 0
        %3683 = vmatpush1.bf16.msra.mxu0 %v3670
        %3684 = vmatprep.subr.bf16.mxu0 0
        %3685 = vmatpush1.bf16.msra.mxu0 %v3669
        %3686 = vmatprep.subr.bf16.mxu0 0
        %3687 = vmatpush1.bf16.msra.mxu0 %v3668
        %3688 = vmatprep.subr.bf16.mxu0 0
        %3689 = vmatpush1.bf16.msra.mxu0 %v3667
        %3690 = vmatprep.subr.bf16.mxu0 0
        %3691 = vmatpush1.bf16.msra.mxu0 %v3666
        %3692 = vmatprep.subr.bf16.mxu0 0
        %3693 = vmatpush1.bf16.msra.mxu0 %v3665
        %3694 = vmatprep.subr.bf16.mxu0 0
        %3695 = vmatpush1.bf16.msra.mxu0 %v3664
        %3696 = vmatprep.subr.bf16.mxu0 0
        %3697 = vmatpush2.bf16.msra.mxu0 0
        %3698 = vmatprep.subr.bf16.mxu0 0
        %3699 = vmatpush2.bf16.msra.mxu0 0
        %3700 = vmatprep.subr.bf16.mxu0 0
        %3701 = vmatpush2.bf16.msra.mxu0 0
        %3702 = vmatprep.subr.bf16.mxu0 0
        %3703 = vmatpush2.bf16.msra.mxu0 0
        %3704 = vmatprep.subr.bf16.mxu0 0
        %3705 = vmatpush2.bf16.msra.mxu0 0
        %3706 = vmatprep.subr.bf16.mxu0 0
        %3707 = vmatpush2.bf16.msra.mxu0 0
        %3708 = vmatprep.subr.bf16.mxu0 0
        %3709 = vmatpush2.bf16.msra.mxu0 0
        %3710 = vmatprep.subr.bf16.mxu0 0
        %3711 = vmatpush2.bf16.msra.mxu0 0
        %3712 = vmatprep.mubr.bf16.mxu0 0
        %3713 = vmatmul.mubr.bf16.gmra.mxu0 %v2744
        %v3714 = vpop.f32.mrf.mxu0
        %v3715 = vadd.f32 %v3378, %v3714
        %v3716 = vpop.f32.mrf.mxu0
        %v3717 = vpop.f32.mrf.mxu0
        %v3718 = vadd.f32 %v3381, %v3717
        %v3719 = vpop.f32.mrf.mxu0
        %3720 = vmatprep.mubr.bf16.mxu0 0
        %3721 = vmatmul.mubr.bf16.gmra.mxu0 %v2745
        %v3722 = vpop.f32.mrf.mxu0
        %v3723 = vadd.f32 %v3386, %v3722
        %v3724 = vpop.f32.mrf.mxu0
        %v3725 = vpop.f32.mrf.mxu0
        %v3726 = vadd.f32 %v3389, %v3725
        %v3727 = vpop.f32.mrf.mxu0
        %3728 = vmatprep.mubr.bf16.mxu0 0
        %3729 = vmatmul.mubr.bf16.gmra.mxu0 %v2746
        %v3730 = vpop.f32.mrf.mxu0
        %v3731 = vadd.f32 %v3394, %v3730
        %v3732 = vpop.f32.mrf.mxu0
        %v3733 = vpop.f32.mrf.mxu0
        %v3734 = vadd.f32 %v3397, %v3733
        %v3735 = vpop.f32.mrf.mxu0
        %3736 = vmatprep.mubr.bf16.mxu0 0
        %3737 = vmatmul.mubr.bf16.gmra.mxu0 %v2747
        %v3738 = vpop.f32.mrf.mxu0
        %v3739 = vadd.f32 %v3402, %v3738
        %v3740 = vpop.f32.mrf.mxu0
        %v3741 = vpop.f32.mrf.mxu0
        %v3742 = vadd.f32 %v3405, %v3741
        %v3743 = vpop.f32.mrf.mxu0
        %3744 = vmatprep.mubr.bf16.mxu0 0
        %3745 = vmatmul.mubr.bf16.gmra.mxu0 %v2748
        %v3746 = vpop.f32.mrf.mxu0
        %v3747 = vadd.f32 %v3410, %v3746
        %v3748 = vpop.f32.mrf.mxu0
        %v3749 = vpop.f32.mrf.mxu0
        %v3750 = vadd.f32 %v3413, %v3749
        %v3751 = vpop.f32.mrf.mxu0
        %3752 = vmatprep.mubr.bf16.mxu0 0
        %3753 = vmatmul.mubr.bf16.gmra.mxu0 %v2749
        %v3754 = vpop.f32.mrf.mxu0
        %v3755 = vadd.f32 %v3418, %v3754
        %v3756 = vpop.f32.mrf.mxu0
        %v3757 = vpop.f32.mrf.mxu0
        %v3758 = vadd.f32 %v3421, %v3757
        %v3759 = vpop.f32.mrf.mxu0
        %3760 = vmatprep.mubr.bf16.mxu0 0
        %3761 = vmatmul.mubr.bf16.gmra.mxu0 %v2750
        %v3762 = vpop.f32.mrf.mxu0
        %v3763 = vadd.f32 %v3426, %v3762
        %v3764 = vpop.f32.mrf.mxu0
        %v3765 = vpop.f32.mrf.mxu0
        %v3766 = vadd.f32 %v3429, %v3765
        %v3767 = vpop.f32.mrf.mxu0
        %3768 = vmatprep.mubr.bf16.mxu0 0
        %3769 = vmatmul.mubr.bf16.gmra.mxu0 %v2751
        %v3770 = vpop.f32.mrf.mxu0
        %v3771 = vadd.f32 %v3434, %v3770
        %v3772 = vpop.f32.mrf.mxu0
        %v3773 = vpop.f32.mrf.mxu0
        %v3774 = vadd.f32 %v3437, %v3773
        %v3775 = vpop.f32.mrf.mxu0
        %3776 = vmatprep.mubr.bf16.mxu0 0
        %3777 = vmatmul.mubr.bf16.gmra.mxu0 %v2752
        %v3778 = vpop.f32.mrf.mxu0
        %v3779 = vadd.f32 %v3442, %v3778
        %v3780 = vpop.f32.mrf.mxu0
        %v3781 = vpop.f32.mrf.mxu0
        %v3782 = vadd.f32 %v3445, %v3781
        %v3783 = vpop.f32.mrf.mxu0
        %3784 = vmatprep.mubr.bf16.mxu0 0
        %3785 = vmatmul.mubr.bf16.gmra.mxu0 %v2753
        %v3786 = vpop.f32.mrf.mxu0
        %v3787 = vadd.f32 %v3450, %v3786
        %v3788 = vpop.f32.mrf.mxu0
        %v3789 = vpop.f32.mrf.mxu0
        %v3790 = vadd.f32 %v3453, %v3789
        %v3791 = vpop.f32.mrf.mxu0
        %3792 = vmatprep.mubr.bf16.mxu0 0
        %3793 = vmatmul.mubr.bf16.gmra.mxu0 %v2754
        %v3794 = vpop.f32.mrf.mxu0
        %v3795 = vadd.f32 %v3458, %v3794
        %v3796 = vpop.f32.mrf.mxu0
        %v3797 = vpop.f32.mrf.mxu0
        %v3798 = vadd.f32 %v3461, %v3797
        %v3799 = vpop.f32.mrf.mxu0
        %3800 = vmatprep.mubr.bf16.mxu0 0
        %3801 = vmatmul.mubr.bf16.gmra.mxu0 %v2755
        %v3802 = vpop.f32.mrf.mxu0
        %v3803 = vadd.f32 %v3466, %v3802
        %v3804 = vpop.f32.mrf.mxu0
        %v3805 = vpop.f32.mrf.mxu0
        %v3806 = vadd.f32 %v3469, %v3805
        %v3807 = vpop.f32.mrf.mxu0
        %3808 = vmatprep.mubr.bf16.mxu0 0
        %3809 = vmatmul.mubr.bf16.gmra.mxu0 %v2756
        %v3810 = vpop.f32.mrf.mxu0
        %v3811 = vadd.f32 %v3474, %v3810
        %v3812 = vpop.f32.mrf.mxu0
        %v3813 = vpop.f32.mrf.mxu0
        %v3814 = vadd.f32 %v3477, %v3813
        %v3815 = vpop.f32.mrf.mxu0
        %3816 = vmatprep.mubr.bf16.mxu0 0
        %3817 = vmatmul.mubr.bf16.gmra.mxu0 %v2757
        %v3818 = vpop.f32.mrf.mxu0
        %v3819 = vadd.f32 %v3482, %v3818
        %v3820 = vpop.f32.mrf.mxu0
        %v3821 = vpop.f32.mrf.mxu0
        %v3822 = vadd.f32 %v3485, %v3821
        %v3823 = vpop.f32.mrf.mxu0
        %3824 = vmatprep.mubr.bf16.mxu0 0
        %3825 = vmatmul.mubr.bf16.gmra.mxu0 %v2758
        %v3826 = vpop.f32.mrf.mxu0
        %v3827 = vadd.f32 %v3490, %v3826
        %v3828 = vpop.f32.mrf.mxu0
        %v3829 = vpop.f32.mrf.mxu0
        %v3830 = vadd.f32 %v3493, %v3829
        %v3831 = vpop.f32.mrf.mxu0
        %3832 = vmatprep.mubr.bf16.mxu0 0
        %3833 = vmatmul.mubr.bf16.gmra.mxu0 %v2759
        %v3834 = vpop.f32.mrf.mxu0
        %v3835 = vadd.f32 %v3498, %v3834
        %v3836 = vpop.f32.mrf.mxu0
        %v3837 = vpop.f32.mrf.mxu0
        %v3838 = vadd.f32 %v3501, %v3837
        %v3839 = vpop.f32.mrf.mxu0
        %3840 = vdwg.mxu0
        %v3843 = vunpack.c.l.s4 1966171168
        %v3844 = vunpack.c.0.s8 %v3843
        %v3845 = vlaneseq
        %v3846 = vshrl.u32 %v3845, 7
        %v3847 = vsub.s32 %v3844, %v3846
        %v3848 = vrot.slane %v3611, %v3847
        %v3849 = vcombine.high %v3848, %v3848
        %v3851 = vunpack.c.l.s4 1966171168
        %v3852 = vunpack.c.0.s8 %v3851
        %v3853 = vlaneseq
        %v3854 = vshrl.u32 %v3853, 7
        %v3855 = vsub.s32 %v3852, %v3854
        %v3856 = vrot.slane %v3848, %v3855
        %v3858 = vunpack.c.l.s4 1966171168
        %v3859 = vunpack.c.0.s8 %v3858
        %v3860 = vlaneseq
        %v3861 = vshrl.u32 %v3860, 7
        %v3862 = vsub.s32 %v3859, %v3861
        %v3863 = vrot.slane %v3849, %v3862
        %v3864 = vlaneseq
        %v3865 = vshrl.u32 %v3864, 7
        %v3866 = vsub.s32 0, %v3865
        %v3867 = vrot.slane %v3856, %v3866
        %v3868 = vlaneseq
        %v3869 = vshrl.u32 %v3868, 7
        %v3870 = vsub.s32 0, %v3869
        %v3871 = vrot.slane %v3863, %v3870
        %v3874 = vadd.f32 %v3715, %v3867
        %v3875 = vadd.f32 %v3718, %v3867
        %v3876 = vadd.f32 %v3723, %v3867
        %v3877 = vadd.f32 %v3726, %v3867
        %v3878 = vadd.f32 %v3731, %v3867
        %v3879 = vadd.f32 %v3734, %v3867
        %v3880 = vadd.f32 %v3739, %v3867
        %v3881 = vadd.f32 %v3742, %v3867
        %v3882 = vadd.f32 %v3747, %v3867
        %v3883 = vadd.f32 %v3750, %v3867
        %v3884 = vadd.f32 %v3755, %v3867
        %v3885 = vadd.f32 %v3758, %v3867
        %v3886 = vadd.f32 %v3763, %v3867
        %v3887 = vadd.f32 %v3766, %v3867
        %v3888 = vadd.f32 %v3771, %v3867
        %v3889 = vadd.f32 %v3774, %v3867
        %v3890 = vadd.f32 %v3779, %v3871
        %v3891 = vadd.f32 %v3782, %v3871
        %v3892 = vadd.f32 %v3787, %v3871
        %v3893 = vadd.f32 %v3790, %v3871
        %v3894 = vadd.f32 %v3795, %v3871
        %v3895 = vadd.f32 %v3798, %v3871
        %v3896 = vadd.f32 %v3803, %v3871
        %v3897 = vadd.f32 %v3806, %v3871
        %v3898 = vadd.f32 %v3811, %v3871
        %v3899 = vadd.f32 %v3814, %v3871
        %v3900 = vadd.f32 %v3819, %v3871
        %v3901 = vadd.f32 %v3822, %v3871
        %v3902 = vadd.f32 %v3827, %v3871
        %v3903 = vadd.f32 %v3830, %v3871
        %v3904 = vadd.f32 %v3835, %v3871
        %v3905 = vadd.f32 %v3838, %v3871
        %v3906 = vpack.c.bf16 %v3875, %v3874
        %v3907 = vpack.c.bf16 %v3877, %v3876
        %v3908 = vpack.c.bf16 %v3879, %v3878
        %v3909 = vpack.c.bf16 %v3881, %v3880
        %v3910 = vpack.c.bf16 %v3883, %v3882
        %v3911 = vpack.c.bf16 %v3885, %v3884
        %v3912 = vpack.c.bf16 %v3887, %v3886
        %v3913 = vpack.c.bf16 %v3889, %v3888
        %v3914 = vpack.c.bf16 %v3891, %v3890
        %v3915 = vpack.c.bf16 %v3893, %v3892
        %v3916 = vpack.c.bf16 %v3895, %v3894
        %v3917 = vpack.c.bf16 %v3897, %v3896
        %v3918 = vpack.c.bf16 %v3899, %v3898
        %v3919 = vpack.c.bf16 %v3901, %v3900
        %v3920 = vpack.c.bf16 %v3903, %v3902
        %v3921 = vpack.c.bf16 %v3905, %v3904
        %v3922 = vmax.bf16 %v3906, 0
        %v3923 = vmax.bf16 %v3907, 0
        %v3924 = vmax.bf16 %v3908, 0
        %v3925 = vmax.bf16 %v3909, 0
        %v3926 = vmax.bf16 %v3910, 0
        %v3927 = vmax.bf16 %v3911, 0
        %v3928 = vmax.bf16 %v3912, 0
        %v3929 = vmax.bf16 %v3913, 0
        %v3930 = vmax.bf16 %v3914, 0
        %v3931 = vmax.bf16 %v3915, 0
        %v3932 = vmax.bf16 %v3916, 0
        %v3933 = vmax.bf16 %v3917, 0
        %v3934 = vmax.bf16 %v3918, 0
        %v3935 = vmax.bf16 %v3919, 0
        %v3936 = vmax.bf16 %v3920, 0
        %v3937 = vmax.bf16 %v3921, 0
        %v3938 = vmax.bf16 %v3906, %v3908
        %v3939 = vmax.bf16 %v3907, %v3909
        %v3940 = vmax.bf16 %v3938, %v3910
        %v3941 = vmax.bf16 %v3939, %v3911
        %v3942 = vmax.bf16 %v3940, %v3912
        %v3943 = vmax.bf16 %v3941, %v3913
        %v3944 = vmax.bf16 %v3942, %v3943
        %v3945 = vunpack.i.l.bf16 %v3944
        %v3946 = vunpack.i.h.bf16 %v3944
        %v3947 = vmax.f32 %v3945, %v3946
        %v3948 = vrot.slane %v3947, 4
        %v3949 = vmax.f32 %v3947, %v3948
        %v3950 = vrot.slane %v3949, 2
        %v3951 = vmax.f32 %v3949, %v3950
        %v3952 = vrot.slane %v3951, 1
        %v3953 = vmax.f32 %v3951, %v3952
        %v3954 = vpack.i.bf16 %v3953, %v3953
        %v3955 = vmax.bf16 %v3914, %v3916
        %v3956 = vmax.bf16 %v3915, %v3917
        %v3957 = vmax.bf16 %v3955, %v3918
        %v3958 = vmax.bf16 %v3956, %v3919
        %v3959 = vmax.bf16 %v3957, %v3920
        %v3960 = vmax.bf16 %v3958, %v3921
        %v3961 = vmax.bf16 %v3959, %v3960
        %v3962 = vunpack.i.l.bf16 %v3961
        %v3963 = vunpack.i.h.bf16 %v3961
        %v3964 = vmax.f32 %v3962, %v3963
        %v3965 = vrot.slane %v3964, 4
        %v3966 = vmax.f32 %v3964, %v3965
        %v3967 = vrot.slane %v3966, 2
        %v3968 = vmax.f32 %v3966, %v3967
        %v3969 = vrot.slane %v3968, 1
        %v3970 = vmax.f32 %v3968, %v3969
        %v3971 = vpack.i.bf16 %v3970, %v3970
        %v3972 = vmax.bf16 %v3954, 0
        %v3973 = vmax.bf16 %v3971, 0
        %s3974 = scalar_lea.vmem [#allocation5], 384
        %v3975 = vld [vmem:[%s3974 + $0x40] sm:$0xf]
        %v3976 = vld [vmem:[%s3974 + $0x44] sm:$0xf]
        %v3977 = vld [vmem:[%s3974 + $0x48] sm:$0xf]
        %v3978 = vld [vmem:[%s3974 + $0x4c] sm:$0xf]
        %v3979 = vld [vmem:[%s3974 + $0x50] sm:$0xf]
        %v3980 = vld [vmem:[%s3974 + $0x54] sm:$0xf]
        %v3981 = vld [vmem:[%s3974 + $0x58] sm:$0xf]
        %v3982 = vld [vmem:[%s3974 + $0x5c] sm:$0xf]
        %v3983 = vld [vmem:[%s3974 + $0x60] sm:$0xf]
        %v3984 = vld [vmem:[%s3974 + $0x64] sm:$0xf]
        %v3985 = vld [vmem:[%s3974 + $0x68] sm:$0xf]
        %v3986 = vld [vmem:[%s3974 + $0x6c] sm:$0xf]
        %v3987 = vld [vmem:[%s3974 + $0x70] sm:$0xf]
        %v3988 = vld [vmem:[%s3974 + $0x74] sm:$0xf]
        %v3989 = vld [vmem:[%s3974 + $0x78] sm:$0xf]
        %v3990 = vld [vmem:[%s3974 + $0x7c] sm:$0xf]
        %s3991 = scalar_lea.vmem [#allocation7], 3
        %v3992 = vld [vmem:[%s3991] sm:$0x1]
        %v3994 = vlaneseq
        %v3995 = vshrl.u32 %v3994, 7
        %v3996 = vsub.s32 0, %v3995
        %v3997 = vrot.slane %v3992, %v3996
        %v4001 = vunpack.c.l.b16 %v3972
        %v4002 = vunpack.c.l.b16 %v3973
        %v4003 = vsel %vm1678, %v4002, %v4001
        %v4004 = vpack.c.b16 %v4003, %v4003
        %v4022 = vunpack.c.l.b16 %v3975
        %v4023 = vunpack.c.l.b16 %v3976
        %v4024 = vunpack.c.l.b16 %v3977
        %v4025 = vunpack.c.l.b16 %v3978
        %v4026 = vunpack.c.l.b16 %v3979
        %v4027 = vunpack.c.l.b16 %v3980
        %v4028 = vunpack.c.l.b16 %v3981
        %v4029 = vunpack.c.l.b16 %v3982
        %v4030 = vunpack.c.l.b16 %v3983
        %v4031 = vunpack.c.l.b16 %v3984
        %v4032 = vunpack.c.l.b16 %v3985
        %v4033 = vunpack.c.l.b16 %v3986
        %v4034 = vunpack.c.l.b16 %v3987
        %v4035 = vunpack.c.l.b16 %v3988
        %v4036 = vunpack.c.l.b16 %v3989
        %v4037 = vunpack.c.l.b16 %v3990
        %v4038 = vpack.c.b16 %v4023, %v4022
        %v4039 = vpack.c.b16 %v4025, %v4024
        %v4040 = vpack.c.b16 %v4027, %v4026
        %v4041 = vpack.c.b16 %v4029, %v4028
        %v4042 = vpack.c.b16 %v4031, %v4030
        %v4043 = vpack.c.b16 %v4033, %v4032
        %v4044 = vpack.c.b16 %v4035, %v4034
        %v4045 = vpack.c.b16 %v4037, %v4036
        %4054 = vmatprep.subr.bf16.mxu0 0
        %4055 = vmatpush1.bf16.msra.mxu0 %v4045
        %4056 = vmatprep.subr.bf16.mxu0 0
        %4057 = vmatpush1.bf16.msra.mxu0 %v4044
        %4058 = vmatprep.subr.bf16.mxu0 0
        %4059 = vmatpush1.bf16.msra.mxu0 %v4043
        %4060 = vmatprep.subr.bf16.mxu0 0
        %4061 = vmatpush1.bf16.msra.mxu0 %v4042
        %4062 = vmatprep.subr.bf16.mxu0 0
        %4063 = vmatpush1.bf16.msra.mxu0 %v4041
        %4064 = vmatprep.subr.bf16.mxu0 0
        %4065 = vmatpush1.bf16.msra.mxu0 %v4040
        %4066 = vmatprep.subr.bf16.mxu0 0
        %4067 = vmatpush1.bf16.msra.mxu0 %v4039
        %4068 = vmatprep.subr.bf16.mxu0 0
        %4069 = vmatpush1.bf16.msra.mxu0 %v4038
        %4070 = vmatprep.subr.bf16.mxu0 0
        %4071 = vmatpush2.bf16.msra.mxu0 0
        %4072 = vmatprep.subr.bf16.mxu0 0
        %4073 = vmatpush2.bf16.msra.mxu0 0
        %4074 = vmatprep.subr.bf16.mxu0 0
        %4075 = vmatpush2.bf16.msra.mxu0 0
        %4076 = vmatprep.subr.bf16.mxu0 0
        %4077 = vmatpush2.bf16.msra.mxu0 0
        %4078 = vmatprep.subr.bf16.mxu0 0
        %4079 = vmatpush2.bf16.msra.mxu0 0
        %4080 = vmatprep.subr.bf16.mxu0 0
        %4081 = vmatpush2.bf16.msra.mxu0 0
        %4082 = vmatprep.subr.bf16.mxu0 0
        %4083 = vmatpush2.bf16.msra.mxu0 0
        %4084 = vmatprep.subr.bf16.mxu0 0
        %4085 = vmatpush2.bf16.msra.mxu0 0
        %4086 = vmatprep.mubr.bf16.mxu0 0
        %4087 = vmatmul.mubr.bf16.gmra.mxu0 %v4004
        %v4088 = vpop.f32.mrf.mxu0
        %v4089 = vadd.f32 %v3997, %v4088
        %v4090 = vpop.f32.mrf.mxu0
        %v4091 = vpop.f32.mrf.mxu0
        %v4092 = vpop.f32.mrf.mxu0
        %4093 = vdwg.mxu0
        %v4094 = vld [vmem:[%s3974] sm:$0xf]
        %v4095 = vld [vmem:[%s3974 + $0x4] sm:$0xf]
        %v4096 = vld [vmem:[%s3974 + $0x8] sm:$0xf]
        %v4097 = vld [vmem:[%s3974 + $0xc] sm:$0xf]
        %v4098 = vld [vmem:[%s3974 + $0x10] sm:$0xf]
        %v4099 = vld [vmem:[%s3974 + $0x14] sm:$0xf]
        %v4100 = vld [vmem:[%s3974 + $0x18] sm:$0xf]
        %v4101 = vld [vmem:[%s3974 + $0x1c] sm:$0xf]
        %v4102 = vld [vmem:[%s3974 + $0x20] sm:$0xf]
        %v4103 = vld [vmem:[%s3974 + $0x24] sm:$0xf]
        %v4104 = vld [vmem:[%s3974 + $0x28] sm:$0xf]
        %v4105 = vld [vmem:[%s3974 + $0x2c] sm:$0xf]
        %v4106 = vld [vmem:[%s3974 + $0x30] sm:$0xf]
        %v4107 = vld [vmem:[%s3974 + $0x34] sm:$0xf]
        %v4108 = vld [vmem:[%s3974 + $0x38] sm:$0xf]
        %v4109 = vld [vmem:[%s3974 + $0x3c] sm:$0xf]
        %v4126 = vunpack.c.l.b16 %v4094
        %v4127 = vunpack.c.l.b16 %v4095
        %v4128 = vunpack.c.l.b16 %v4096
        %v4129 = vunpack.c.l.b16 %v4097
        %v4130 = vunpack.c.l.b16 %v4098
        %v4131 = vunpack.c.l.b16 %v4099
        %v4132 = vunpack.c.l.b16 %v4100
        %v4133 = vunpack.c.l.b16 %v4101
        %v4134 = vunpack.c.l.b16 %v4102
        %v4135 = vunpack.c.l.b16 %v4103
        %v4136 = vunpack.c.l.b16 %v4104
        %v4137 = vunpack.c.l.b16 %v4105
        %v4138 = vunpack.c.l.b16 %v4106
        %v4139 = vunpack.c.l.b16 %v4107
        %v4140 = vunpack.c.l.b16 %v4108
        %v4141 = vunpack.c.l.b16 %v4109
        %v4142 = vpack.c.b16 %v4127, %v4126
        %v4143 = vpack.c.b16 %v4129, %v4128
        %v4144 = vpack.c.b16 %v4131, %v4130
        %v4145 = vpack.c.b16 %v4133, %v4132
        %v4146 = vpack.c.b16 %v4135, %v4134
        %v4147 = vpack.c.b16 %v4137, %v4136
        %v4148 = vpack.c.b16 %v4139, %v4138
        %v4149 = vpack.c.b16 %v4141, %v4140
        %4158 = vmatprep.subr.bf16.mxu0 0
        %4159 = vmatpush1.bf16.msra.mxu0 %v4149
        %4160 = vmatprep.subr.bf16.mxu0 0
        %4161 = vmatpush1.bf16.msra.mxu0 %v4148
        %4162 = vmatprep.subr.bf16.mxu0 0
        %4163 = vmatpush1.bf16.msra.mxu0 %v4147
        %4164 = vmatprep.subr.bf16.mxu0 0
        %4165 = vmatpush1.bf16.msra.mxu0 %v4146
        %4166 = vmatprep.subr.bf16.mxu0 0
        %4167 = vmatpush1.bf16.msra.mxu0 %v4145
        %4168 = vmatprep.subr.bf16.mxu0 0
        %4169 = vmatpush1.bf16.msra.mxu0 %v4144
        %4170 = vmatprep.subr.bf16.mxu0 0
        %4171 = vmatpush1.bf16.msra.mxu0 %v4143
        %4172 = vmatprep.subr.bf16.mxu0 0
        %4173 = vmatpush1.bf16.msra.mxu0 %v4142
        %4174 = vmatprep.subr.bf16.mxu0 0
        %4175 = vmatpush2.bf16.msra.mxu0 0
        %4176 = vmatprep.subr.bf16.mxu0 0
        %4177 = vmatpush2.bf16.msra.mxu0 0
        %4178 = vmatprep.subr.bf16.mxu0 0
        %4179 = vmatpush2.bf16.msra.mxu0 0
        %4180 = vmatprep.subr.bf16.mxu0 0
        %4181 = vmatpush2.bf16.msra.mxu0 0
        %4182 = vmatprep.subr.bf16.mxu0 0
        %4183 = vmatpush2.bf16.msra.mxu0 0
        %4184 = vmatprep.subr.bf16.mxu0 0
        %4185 = vmatpush2.bf16.msra.mxu0 0
        %4186 = vmatprep.subr.bf16.mxu0 0
        %4187 = vmatpush2.bf16.msra.mxu0 0
        %4188 = vmatprep.subr.bf16.mxu0 0
        %4189 = vmatpush2.bf16.msra.mxu0 0
        %4190 = vmatprep.mubr.bf16.mxu0 0
        %4191 = vmatmul.mubr.bf16.gmra.mxu0 %v3922
        %v4192 = vpop.f32.mrf.mxu0
        %v4193 = vadd.f32 0.0, %v4192
        %v4194 = vpop.f32.mrf.mxu0
        %v4195 = vpop.f32.mrf.mxu0
        %v4196 = vadd.f32 0.0, %v4195
        %v4197 = vpop.f32.mrf.mxu0
        %4198 = vmatprep.mubr.bf16.mxu0 0
        %4199 = vmatmul.mubr.bf16.gmra.mxu0 %v3923
        %v4200 = vpop.f32.mrf.mxu0
        %v4201 = vadd.f32 0.0, %v4200
        %v4202 = vpop.f32.mrf.mxu0
        %v4203 = vpop.f32.mrf.mxu0
        %v4204 = vadd.f32 0.0, %v4203
        %v4205 = vpop.f32.mrf.mxu0
        %4206 = vmatprep.mubr.bf16.mxu0 0
        %4207 = vmatmul.mubr.bf16.gmra.mxu0 %v3924
        %v4208 = vpop.f32.mrf.mxu0
        %v4209 = vadd.f32 0.0, %v4208
        %v4210 = vpop.f32.mrf.mxu0
        %v4211 = vpop.f32.mrf.mxu0
        %v4212 = vadd.f32 0.0, %v4211
        %v4213 = vpop.f32.mrf.mxu0
        %4214 = vmatprep.mubr.bf16.mxu0 0
        %4215 = vmatmul.mubr.bf16.gmra.mxu0 %v3925
        %v4216 = vpop.f32.mrf.mxu0
        %v4217 = vadd.f32 0.0, %v4216
        %v4218 = vpop.f32.mrf.mxu0
        %v4219 = vpop.f32.mrf.mxu0
        %v4220 = vadd.f32 0.0, %v4219
        %v4221 = vpop.f32.mrf.mxu0
        %4222 = vmatprep.mubr.bf16.mxu0 0
        %4223 = vmatmul.mubr.bf16.gmra.mxu0 %v3926
        %v4224 = vpop.f32.mrf.mxu0
        %v4225 = vadd.f32 0.0, %v4224
        %v4226 = vpop.f32.mrf.mxu0
        %v4227 = vpop.f32.mrf.mxu0
        %v4228 = vadd.f32 0.0, %v4227
        %v4229 = vpop.f32.mrf.mxu0
        %4230 = vmatprep.mubr.bf16.mxu0 0
        %4231 = vmatmul.mubr.bf16.gmra.mxu0 %v3927
        %v4232 = vpop.f32.mrf.mxu0
        %v4233 = vadd.f32 0.0, %v4232
        %v4234 = vpop.f32.mrf.mxu0
        %v4235 = vpop.f32.mrf.mxu0
        %v4236 = vadd.f32 0.0, %v4235
        %v4237 = vpop.f32.mrf.mxu0
        %4238 = vmatprep.mubr.bf16.mxu0 0
        %4239 = vmatmul.mubr.bf16.gmra.mxu0 %v3928
        %v4240 = vpop.f32.mrf.mxu0
        %v4241 = vadd.f32 0.0, %v4240
        %v4242 = vpop.f32.mrf.mxu0
        %v4243 = vpop.f32.mrf.mxu0
        %v4244 = vadd.f32 0.0, %v4243
        %v4245 = vpop.f32.mrf.mxu0
        %4246 = vmatprep.mubr.bf16.mxu0 0
        %4247 = vmatmul.mubr.bf16.gmra.mxu0 %v3929
        %v4248 = vpop.f32.mrf.mxu0
        %v4249 = vadd.f32 0.0, %v4248
        %v4250 = vpop.f32.mrf.mxu0
        %v4251 = vpop.f32.mrf.mxu0
        %v4252 = vadd.f32 0.0, %v4251
        %v4253 = vpop.f32.mrf.mxu0
        %4254 = vmatprep.mubr.bf16.mxu0 0
        %4255 = vmatmul.mubr.bf16.gmra.mxu0 %v3930
        %v4256 = vpop.f32.mrf.mxu0
        %v4257 = vadd.f32 0.0, %v4256
        %v4258 = vpop.f32.mrf.mxu0
        %v4259 = vpop.f32.mrf.mxu0
        %v4260 = vadd.f32 0.0, %v4259
        %v4261 = vpop.f32.mrf.mxu0
        %4262 = vmatprep.mubr.bf16.mxu0 0
        %4263 = vmatmul.mubr.bf16.gmra.mxu0 %v3931
        %v4264 = vpop.f32.mrf.mxu0
        %v4265 = vadd.f32 0.0, %v4264
        %v4266 = vpop.f32.mrf.mxu0
        %v4267 = vpop.f32.mrf.mxu0
        %v4268 = vadd.f32 0.0, %v4267
        %v4269 = vpop.f32.mrf.mxu0
        %4270 = vmatprep.mubr.bf16.mxu0 0
        %4271 = vmatmul.mubr.bf16.gmra.mxu0 %v3932
        %v4272 = vpop.f32.mrf.mxu0
        %v4273 = vadd.f32 0.0, %v4272
        %v4274 = vpop.f32.mrf.mxu0
        %v4275 = vpop.f32.mrf.mxu0
        %v4276 = vadd.f32 0.0, %v4275
        %v4277 = vpop.f32.mrf.mxu0
        %4278 = vmatprep.mubr.bf16.mxu0 0
        %4279 = vmatmul.mubr.bf16.gmra.mxu0 %v3933
        %v4280 = vpop.f32.mrf.mxu0
        %v4281 = vadd.f32 0.0, %v4280
        %v4282 = vpop.f32.mrf.mxu0
        %v4283 = vpop.f32.mrf.mxu0
        %v4284 = vadd.f32 0.0, %v4283
        %v4285 = vpop.f32.mrf.mxu0
        %4286 = vmatprep.mubr.bf16.mxu0 0
        %4287 = vmatmul.mubr.bf16.gmra.mxu0 %v3934
        %v4288 = vpop.f32.mrf.mxu0
        %v4289 = vadd.f32 0.0, %v4288
        %v4290 = vpop.f32.mrf.mxu0
        %v4291 = vpop.f32.mrf.mxu0
        %v4292 = vadd.f32 0.0, %v4291
        %v4293 = vpop.f32.mrf.mxu0
        %4294 = vmatprep.mubr.bf16.mxu0 0
        %4295 = vmatmul.mubr.bf16.gmra.mxu0 %v3935
        %v4296 = vpop.f32.mrf.mxu0
        %v4297 = vadd.f32 0.0, %v4296
        %v4298 = vpop.f32.mrf.mxu0
        %v4299 = vpop.f32.mrf.mxu0
        %v4300 = vadd.f32 0.0, %v4299
        %v4301 = vpop.f32.mrf.mxu0
        %4302 = vmatprep.mubr.bf16.mxu0 0
        %4303 = vmatmul.mubr.bf16.gmra.mxu0 %v3936
        %v4304 = vpop.f32.mrf.mxu0
        %v4305 = vadd.f32 0.0, %v4304
        %v4306 = vpop.f32.mrf.mxu0
        %v4307 = vpop.f32.mrf.mxu0
        %v4308 = vadd.f32 0.0, %v4307
        %v4309 = vpop.f32.mrf.mxu0
        %4310 = vmatprep.mubr.bf16.mxu0 0
        %4311 = vmatmul.mubr.bf16.gmra.mxu0 %v3937
        %v4312 = vpop.f32.mrf.mxu0
        %v4313 = vadd.f32 0.0, %v4312
        %v4314 = vpop.f32.mrf.mxu0
        %v4315 = vpop.f32.mrf.mxu0
        %v4316 = vadd.f32 0.0, %v4315
        %v4317 = vpop.f32.mrf.mxu0
        %4318 = vdwg.mxu0
        %v4321 = vunpack.c.l.s4 1966171168
        %v4322 = vunpack.c.0.s8 %v4321
        %v4323 = vlaneseq
        %v4324 = vshrl.u32 %v4323, 7
        %v4325 = vsub.s32 %v4322, %v4324
        %v4326 = vrot.slane %v4089, %v4325
        %v4327 = vcombine.high %v4326, %v4326
        %v4329 = vunpack.c.l.s4 1966171168
        %v4330 = vunpack.c.0.s8 %v4329
        %v4331 = vlaneseq
        %v4332 = vshrl.u32 %v4331, 7
        %v4333 = vsub.s32 %v4330, %v4332
        %v4334 = vrot.slane %v4326, %v4333
        %v4336 = vunpack.c.l.s4 1966171168
        %v4337 = vunpack.c.0.s8 %v4336
        %v4338 = vlaneseq
        %v4339 = vshrl.u32 %v4338, 7
        %v4340 = vsub.s32 %v4337, %v4339
        %v4341 = vrot.slane %v4327, %v4340
        %v4342 = vlaneseq
        %v4343 = vshrl.u32 %v4342, 7
        %v4344 = vsub.s32 0, %v4343
        %v4345 = vrot.slane %v4334, %v4344
        %v4346 = vlaneseq
        %v4347 = vshrl.u32 %v4346, 7
        %v4348 = vsub.s32 0, %v4347
        %v4349 = vrot.slane %v4341, %v4348
        %v4352 = vadd.f32 %v4193, %v4345
        %v4353 = vadd.f32 %v4196, %v4345
        %v4354 = vadd.f32 %v4201, %v4345
        %v4355 = vadd.f32 %v4204, %v4345
        %v4356 = vadd.f32 %v4209, %v4345
        %v4357 = vadd.f32 %v4212, %v4345
        %v4358 = vadd.f32 %v4217, %v4345
        %v4359 = vadd.f32 %v4220, %v4345
        %v4360 = vadd.f32 %v4225, %v4345
        %v4361 = vadd.f32 %v4228, %v4345
        %v4362 = vadd.f32 %v4233, %v4345
        %v4363 = vadd.f32 %v4236, %v4345
        %v4364 = vadd.f32 %v4241, %v4345
        %v4365 = vadd.f32 %v4244, %v4345
        %v4366 = vadd.f32 %v4249, %v4345
        %v4367 = vadd.f32 %v4252, %v4345
        %v4368 = vadd.f32 %v4257, %v4349
        %v4369 = vadd.f32 %v4260, %v4349
        %v4370 = vadd.f32 %v4265, %v4349
        %v4371 = vadd.f32 %v4268, %v4349
        %v4372 = vadd.f32 %v4273, %v4349
        %v4373 = vadd.f32 %v4276, %v4349
        %v4374 = vadd.f32 %v4281, %v4349
        %v4375 = vadd.f32 %v4284, %v4349
        %v4376 = vadd.f32 %v4289, %v4349
        %v4377 = vadd.f32 %v4292, %v4349
        %v4378 = vadd.f32 %v4297, %v4349
        %v4379 = vadd.f32 %v4300, %v4349
        %v4380 = vadd.f32 %v4305, %v4349
        %v4381 = vadd.f32 %v4308, %v4349
        %v4382 = vadd.f32 %v4313, %v4349
        %v4383 = vadd.f32 %v4316, %v4349
        %v4384 = vmax.f32 %v4352, 0.0
        %v4385 = vmax.f32 %v4353, 0.0
        %v4386 = vmax.f32 %v4354, 0.0
        %v4387 = vmax.f32 %v4355, 0.0
        %v4388 = vmax.f32 %v4356, 0.0
        %v4389 = vmax.f32 %v4357, 0.0
        %v4390 = vmax.f32 %v4358, 0.0
        %v4391 = vmax.f32 %v4359, 0.0
        %v4392 = vmax.f32 %v4360, 0.0
        %v4393 = vmax.f32 %v4361, 0.0
        %v4394 = vmax.f32 %v4362, 0.0
        %v4395 = vmax.f32 %v4363, 0.0
        %v4396 = vmax.f32 %v4364, 0.0
        %v4397 = vmax.f32 %v4365, 0.0
        %v4398 = vmax.f32 %v4366, 0.0
        %v4399 = vmax.f32 %v4367, 0.0
        %v4400 = vmax.f32 %v4368, 0.0
        %v4401 = vmax.f32 %v4369, 0.0
        %v4402 = vmax.f32 %v4370, 0.0
        %v4403 = vmax.f32 %v4371, 0.0
        %v4404 = vmax.f32 %v4372, 0.0
        %v4405 = vmax.f32 %v4373, 0.0
        %v4406 = vmax.f32 %v4374, 0.0
        %v4407 = vmax.f32 %v4375, 0.0
        %v4408 = vmax.f32 %v4376, 0.0
        %v4409 = vmax.f32 %v4377, 0.0
        %v4410 = vmax.f32 %v4378, 0.0
        %v4411 = vmax.f32 %v4379, 0.0
        %v4412 = vmax.f32 %v4380, 0.0
        %v4413 = vmax.f32 %v4381, 0.0
        %v4414 = vmax.f32 %v4382, 0.0
        %v4415 = vmax.f32 %v4383, 0.0
        %v4416 = vpack.c.bf16 %v4385, %v4384
        %v4417 = vpack.c.bf16 %v4387, %v4386
        %v4418 = vpack.c.bf16 %v4389, %v4388
        %v4419 = vpack.c.bf16 %v4391, %v4390
        %v4420 = vpack.c.bf16 %v4393, %v4392
        %v4421 = vpack.c.bf16 %v4395, %v4394
        %v4422 = vpack.c.bf16 %v4397, %v4396
        %v4423 = vpack.c.bf16 %v4399, %v4398
        %v4424 = vpack.c.bf16 %v4401, %v4400
        %v4425 = vpack.c.bf16 %v4403, %v4402
        %v4426 = vpack.c.bf16 %v4405, %v4404
        %v4427 = vpack.c.bf16 %v4407, %v4406
        %v4428 = vpack.c.bf16 %v4409, %v4408
        %v4429 = vpack.c.bf16 %v4411, %v4410
        %v4430 = vpack.c.bf16 %v4413, %v4412
        %v4431 = vpack.c.bf16 %v4415, %v4414
        %s4432 = scalar_lea.vmem [#allocation8], 192
        %v4433 = vld [vmem:[%s4432] sm:$0xf]
        %v4434 = vld [vmem:[%s4432 + $0x4] sm:$0xf]
        %v4435 = vld [vmem:[%s4432 + $0x8] sm:$0xf]
        %v4436 = vld [vmem:[%s4432 + $0xc] sm:$0xf]
        %v4437 = vld [vmem:[%s4432 + $0x10] sm:$0xf]
        %v4438 = vld [vmem:[%s4432 + $0x14] sm:$0xf]
        %v4439 = vld [vmem:[%s4432 + $0x18] sm:$0xf]
        %v4440 = vld [vmem:[%s4432 + $0x1c] sm:$0xf]
        %v4441 = vld [vmem:[%s4432 + $0x20] sm:$0xf]
        %v4442 = vld [vmem:[%s4432 + $0x24] sm:$0xf]
        %v4443 = vld [vmem:[%s4432 + $0x28] sm:$0xf]
        %v4444 = vld [vmem:[%s4432 + $0x2c] sm:$0xf]
        %v4445 = vld [vmem:[%s4432 + $0x30] sm:$0xf]
        %v4446 = vld [vmem:[%s4432 + $0x34] sm:$0xf]
        %v4447 = vld [vmem:[%s4432 + $0x38] sm:$0xf]
        %v4448 = vld [vmem:[%s4432 + $0x3c] sm:$0xf]
        %s4449 = scalar_lea.vmem %s4, 3
        %v4450 = vld [vmem:[%s4449] sm:$0x1]
        %v4452 = vlaneseq
        %v4453 = vshrl.u32 %v4452, 7
        %v4454 = vsub.s32 0, %v4453
        %v4455 = vrot.slane %v4450, %v4454
        %v4473 = vunpack.c.l.b16 %v4433
        %v4474 = vunpack.c.l.b16 %v4434
        %v4475 = vunpack.c.l.b16 %v4435
        %v4476 = vunpack.c.l.b16 %v4436
        %v4477 = vunpack.c.l.b16 %v4437
        %v4478 = vunpack.c.l.b16 %v4438
        %v4479 = vunpack.c.l.b16 %v4439
        %v4480 = vunpack.c.l.b16 %v4440
        %v4481 = vunpack.c.l.b16 %v4441
        %v4482 = vunpack.c.l.b16 %v4442
        %v4483 = vunpack.c.l.b16 %v4443
        %v4484 = vunpack.c.l.b16 %v4444
        %v4485 = vunpack.c.l.b16 %v4445
        %v4486 = vunpack.c.l.b16 %v4446
        %v4487 = vunpack.c.l.b16 %v4447
        %v4488 = vunpack.c.l.b16 %v4448
        %v4489 = vpack.c.b16 %v4474, %v4473
        %v4490 = vpack.c.b16 %v4476, %v4475
        %v4491 = vpack.c.b16 %v4478, %v4477
        %v4492 = vpack.c.b16 %v4480, %v4479
        %v4493 = vpack.c.b16 %v4482, %v4481
        %v4494 = vpack.c.b16 %v4484, %v4483
        %v4495 = vpack.c.b16 %v4486, %v4485
        %v4496 = vpack.c.b16 %v4488, %v4487
        %4505 = vmatprep.subr.bf16.mxu0 0
        %4506 = vmatpush1.bf16.msra.mxu0 %v4496
        %4507 = vmatprep.subr.bf16.mxu0 0
        %4508 = vmatpush1.bf16.msra.mxu0 %v4495
        %4509 = vmatprep.subr.bf16.mxu0 0
        %4510 = vmatpush1.bf16.msra.mxu0 %v4494
        %4511 = vmatprep.subr.bf16.mxu0 0
        %4512 = vmatpush1.bf16.msra.mxu0 %v4493
        %4513 = vmatprep.subr.bf16.mxu0 0
        %4514 = vmatpush1.bf16.msra.mxu0 %v4492
        %4515 = vmatprep.subr.bf16.mxu0 0
        %4516 = vmatpush1.bf16.msra.mxu0 %v4491
        %4517 = vmatprep.subr.bf16.mxu0 0
        %4518 = vmatpush1.bf16.msra.mxu0 %v4490
        %4519 = vmatprep.subr.bf16.mxu0 0
        %4520 = vmatpush1.bf16.msra.mxu0 %v4489
        %4521 = vmatprep.subr.bf16.mxu0 0
        %4522 = vmatpush2.bf16.msra.mxu0 0
        %4523 = vmatprep.subr.bf16.mxu0 0
        %4524 = vmatpush2.bf16.msra.mxu0 0
        %4525 = vmatprep.subr.bf16.mxu0 0
        %4526 = vmatpush2.bf16.msra.mxu0 0
        %4527 = vmatprep.subr.bf16.mxu0 0
        %4528 = vmatpush2.bf16.msra.mxu0 0
        %4529 = vmatprep.subr.bf16.mxu0 0
        %4530 = vmatpush2.bf16.msra.mxu0 0
        %4531 = vmatprep.subr.bf16.mxu0 0
        %4532 = vmatpush2.bf16.msra.mxu0 0
        %4533 = vmatprep.subr.bf16.mxu0 0
        %4534 = vmatpush2.bf16.msra.mxu0 0
        %4535 = vmatprep.subr.bf16.mxu0 0
        %4536 = vmatpush2.bf16.msra.mxu0 0
        %4537 = vmatprep.mubr.bf16.mxu0 0
        %4538 = vmatmul.mubr.bf16.gmra.mxu0 %v4416
        %v4539 = vpop.f32.mrf.mxu0
        %v4540 = vadd.f32 %v4455, %v4539
        %v4541 = vpop.f32.mrf.mxu0
        %v4542 = vpop.f32.mrf.mxu0
        %v4543 = vadd.f32 %v4455, %v4542
        %v4544 = vpop.f32.mrf.mxu0
        %4545 = vmatprep.mubr.bf16.mxu0 0
        %4546 = vmatmul.mubr.bf16.gmra.mxu0 %v4417
        %v4547 = vpop.f32.mrf.mxu0
        %v4548 = vadd.f32 %v4455, %v4547
        %v4549 = vpop.f32.mrf.mxu0
        %v4550 = vpop.f32.mrf.mxu0
        %v4551 = vadd.f32 %v4455, %v4550
        %v4552 = vpop.f32.mrf.mxu0
        %4553 = vmatprep.mubr.bf16.mxu0 0
        %4554 = vmatmul.mubr.bf16.gmra.mxu0 %v4418
        %v4555 = vpop.f32.mrf.mxu0
        %v4556 = vadd.f32 %v4455, %v4555
        %v4557 = vpop.f32.mrf.mxu0
        %v4558 = vpop.f32.mrf.mxu0
        %v4559 = vadd.f32 %v4455, %v4558
        %v4560 = vpop.f32.mrf.mxu0
        %4561 = vmatprep.mubr.bf16.mxu0 0
        %4562 = vmatmul.mubr.bf16.gmra.mxu0 %v4419
        %v4563 = vpop.f32.mrf.mxu0
        %v4564 = vadd.f32 %v4455, %v4563
        %v4565 = vpop.f32.mrf.mxu0
        %v4566 = vpop.f32.mrf.mxu0
        %v4567 = vadd.f32 %v4455, %v4566
        %v4568 = vpop.f32.mrf.mxu0
        %4569 = vmatprep.mubr.bf16.mxu0 0
        %4570 = vmatmul.mubr.bf16.gmra.mxu0 %v4420
        %v4571 = vpop.f32.mrf.mxu0
        %v4572 = vadd.f32 %v4455, %v4571
        %v4573 = vpop.f32.mrf.mxu0
        %v4574 = vpop.f32.mrf.mxu0
        %v4575 = vadd.f32 %v4455, %v4574
        %v4576 = vpop.f32.mrf.mxu0
        %4577 = vmatprep.mubr.bf16.mxu0 0
        %4578 = vmatmul.mubr.bf16.gmra.mxu0 %v4421
        %v4579 = vpop.f32.mrf.mxu0
        %v4580 = vadd.f32 %v4455, %v4579
        %v4581 = vpop.f32.mrf.mxu0
        %v4582 = vpop.f32.mrf.mxu0
        %v4583 = vadd.f32 %v4455, %v4582
        %v4584 = vpop.f32.mrf.mxu0
        %4585 = vmatprep.mubr.bf16.mxu0 0
        %4586 = vmatmul.mubr.bf16.gmra.mxu0 %v4422
        %v4587 = vpop.f32.mrf.mxu0
        %v4588 = vadd.f32 %v4455, %v4587
        %v4589 = vpop.f32.mrf.mxu0
        %v4590 = vpop.f32.mrf.mxu0
        %v4591 = vadd.f32 %v4455, %v4590
        %v4592 = vpop.f32.mrf.mxu0
        %4593 = vmatprep.mubr.bf16.mxu0 0
        %4594 = vmatmul.mubr.bf16.gmra.mxu0 %v4423
        %v4595 = vpop.f32.mrf.mxu0
        %v4596 = vadd.f32 %v4455, %v4595
        %v4597 = vpop.f32.mrf.mxu0
        %v4598 = vpop.f32.mrf.mxu0
        %v4599 = vadd.f32 %v4455, %v4598
        %v4600 = vpop.f32.mrf.mxu0
        %4601 = vmatprep.mubr.bf16.mxu0 0
        %4602 = vmatmul.mubr.bf16.gmra.mxu0 %v4424
        %v4603 = vpop.f32.mrf.mxu0
        %v4604 = vadd.f32 %v4455, %v4603
        %v4605 = vpop.f32.mrf.mxu0
        %v4606 = vpop.f32.mrf.mxu0
        %v4607 = vadd.f32 %v4455, %v4606
        %v4608 = vpop.f32.mrf.mxu0
        %4609 = vmatprep.mubr.bf16.mxu0 0
        %4610 = vmatmul.mubr.bf16.gmra.mxu0 %v4425
        %v4611 = vpop.f32.mrf.mxu0
        %v4612 = vadd.f32 %v4455, %v4611
        %v4613 = vpop.f32.mrf.mxu0
        %v4614 = vpop.f32.mrf.mxu0
        %v4615 = vadd.f32 %v4455, %v4614
        %v4616 = vpop.f32.mrf.mxu0
        %4617 = vmatprep.mubr.bf16.mxu0 0
        %4618 = vmatmul.mubr.bf16.gmra.mxu0 %v4426
        %v4619 = vpop.f32.mrf.mxu0
        %v4620 = vadd.f32 %v4455, %v4619
        %v4621 = vpop.f32.mrf.mxu0
        %v4622 = vpop.f32.mrf.mxu0
        %v4623 = vadd.f32 %v4455, %v4622
        %v4624 = vpop.f32.mrf.mxu0
        %4625 = vmatprep.mubr.bf16.mxu0 0
        %4626 = vmatmul.mubr.bf16.gmra.mxu0 %v4427
        %v4627 = vpop.f32.mrf.mxu0
        %v4628 = vadd.f32 %v4455, %v4627
        %v4629 = vpop.f32.mrf.mxu0
        %v4630 = vpop.f32.mrf.mxu0
        %v4631 = vadd.f32 %v4455, %v4630
        %v4632 = vpop.f32.mrf.mxu0
        %4633 = vmatprep.mubr.bf16.mxu0 0
        %4634 = vmatmul.mubr.bf16.gmra.mxu0 %v4428
        %v4635 = vpop.f32.mrf.mxu0
        %v4636 = vadd.f32 %v4455, %v4635
        %v4637 = vpop.f32.mrf.mxu0
        %v4638 = vpop.f32.mrf.mxu0
        %v4639 = vadd.f32 %v4455, %v4638
        %v4640 = vpop.f32.mrf.mxu0
        %4641 = vmatprep.mubr.bf16.mxu0 0
        %4642 = vmatmul.mubr.bf16.gmra.mxu0 %v4429
        %v4643 = vpop.f32.mrf.mxu0
        %v4644 = vadd.f32 %v4455, %v4643
        %v4645 = vpop.f32.mrf.mxu0
        %v4646 = vpop.f32.mrf.mxu0
        %v4647 = vadd.f32 %v4455, %v4646
        %v4648 = vpop.f32.mrf.mxu0
        %4649 = vmatprep.mubr.bf16.mxu0 0
        %4650 = vmatmul.mubr.bf16.gmra.mxu0 %v4430
        %v4651 = vpop.f32.mrf.mxu0
        %v4652 = vadd.f32 %v4455, %v4651
        %v4653 = vpop.f32.mrf.mxu0
        %v4654 = vpop.f32.mrf.mxu0
        %v4655 = vadd.f32 %v4455, %v4654
        %v4656 = vpop.f32.mrf.mxu0
        %4657 = vmatprep.mubr.bf16.mxu0 0
        %4658 = vmatmul.mubr.bf16.gmra.mxu0 %v4431
        %v4659 = vpop.f32.mrf.mxu0
        %v4660 = vadd.f32 %v4455, %v4659
        %v4661 = vpop.f32.mrf.mxu0
        %v4662 = vpop.f32.mrf.mxu0
        %v4663 = vadd.f32 %v4455, %v4662
        %v4664 = vpop.f32.mrf.mxu0
        %4665 = vdwg.mxu0
        %s4666 = scalar_lea.vmem [#allocation10], 384
        %v4667 = vld [vmem:[%s4666 + $0x40] sm:$0xf]
        %v4668 = vld [vmem:[%s4666 + $0x44] sm:$0xf]
        %v4669 = vld [vmem:[%s4666 + $0x48] sm:$0xf]
        %v4670 = vld [vmem:[%s4666 + $0x4c] sm:$0xf]
        %v4671 = vld [vmem:[%s4666 + $0x50] sm:$0xf]
        %v4672 = vld [vmem:[%s4666 + $0x54] sm:$0xf]
        %v4673 = vld [vmem:[%s4666 + $0x58] sm:$0xf]
        %v4674 = vld [vmem:[%s4666 + $0x5c] sm:$0xf]
        %v4675 = vld [vmem:[%s4666 + $0x60] sm:$0xf]
        %v4676 = vld [vmem:[%s4666 + $0x64] sm:$0xf]
        %v4677 = vld [vmem:[%s4666 + $0x68] sm:$0xf]
        %v4678 = vld [vmem:[%s4666 + $0x6c] sm:$0xf]
        %v4679 = vld [vmem:[%s4666 + $0x70] sm:$0xf]
        %v4680 = vld [vmem:[%s4666 + $0x74] sm:$0xf]
        %v4681 = vld [vmem:[%s4666 + $0x78] sm:$0xf]
        %v4682 = vld [vmem:[%s4666 + $0x7c] sm:$0xf]
        %v4685 = vunpack.c.l.b16 %v3954
        %v4686 = vunpack.c.l.b16 %v3971
        %v4687 = vsel %vm1678, %v4686, %v4685
        %v4688 = vpack.c.b16 %v4687, %v4687
        %v4706 = vunpack.c.l.b16 %v4667
        %v4707 = vunpack.c.l.b16 %v4668
        %v4708 = vunpack.c.l.b16 %v4669
        %v4709 = vunpack.c.l.b16 %v4670
        %v4710 = vunpack.c.l.b16 %v4671
        %v4711 = vunpack.c.l.b16 %v4672
        %v4712 = vunpack.c.l.b16 %v4673
        %v4713 = vunpack.c.l.b16 %v4674
        %v4714 = vunpack.c.l.b16 %v4675
        %v4715 = vunpack.c.l.b16 %v4676
        %v4716 = vunpack.c.l.b16 %v4677
        %v4717 = vunpack.c.l.b16 %v4678
        %v4718 = vunpack.c.l.b16 %v4679
        %v4719 = vunpack.c.l.b16 %v4680
        %v4720 = vunpack.c.l.b16 %v4681
        %v4721 = vunpack.c.l.b16 %v4682
        %v4722 = vpack.c.b16 %v4707, %v4706
        %v4723 = vpack.c.b16 %v4709, %v4708
        %v4724 = vpack.c.b16 %v4711, %v4710
        %v4725 = vpack.c.b16 %v4713, %v4712
        %v4726 = vpack.c.b16 %v4715, %v4714
        %v4727 = vpack.c.b16 %v4717, %v4716
        %v4728 = vpack.c.b16 %v4719, %v4718
        %v4729 = vpack.c.b16 %v4721, %v4720
        %4738 = vmatprep.subr.bf16.mxu0 0
        %4739 = vmatpush1.bf16.msra.mxu0 %v4729
        %4740 = vmatprep.subr.bf16.mxu0 0
        %4741 = vmatpush1.bf16.msra.mxu0 %v4728
        %4742 = vmatprep.subr.bf16.mxu0 0
        %4743 = vmatpush1.bf16.msra.mxu0 %v4727
        %4744 = vmatprep.subr.bf16.mxu0 0
        %4745 = vmatpush1.bf16.msra.mxu0 %v4726
        %4746 = vmatprep.subr.bf16.mxu0 0
        %4747 = vmatpush1.bf16.msra.mxu0 %v4725
        %4748 = vmatprep.subr.bf16.mxu0 0
        %4749 = vmatpush1.bf16.msra.mxu0 %v4724
        %4750 = vmatprep.subr.bf16.mxu0 0
        %4751 = vmatpush1.bf16.msra.mxu0 %v4723
        %4752 = vmatprep.subr.bf16.mxu0 0
        %4753 = vmatpush1.bf16.msra.mxu0 %v4722
        %4754 = vmatprep.subr.bf16.mxu0 0
        %4755 = vmatpush2.bf16.msra.mxu0 0
        %4756 = vmatprep.subr.bf16.mxu0 0
        %4757 = vmatpush2.bf16.msra.mxu0 0
        %4758 = vmatprep.subr.bf16.mxu0 0
        %4759 = vmatpush2.bf16.msra.mxu0 0
        %4760 = vmatprep.subr.bf16.mxu0 0
        %4761 = vmatpush2.bf16.msra.mxu0 0
        %4762 = vmatprep.subr.bf16.mxu0 0
        %4763 = vmatpush2.bf16.msra.mxu0 0
        %4764 = vmatprep.subr.bf16.mxu0 0
        %4765 = vmatpush2.bf16.msra.mxu0 0
        %4766 = vmatprep.subr.bf16.mxu0 0
        %4767 = vmatpush2.bf16.msra.mxu0 0
        %4768 = vmatprep.subr.bf16.mxu0 0
        %4769 = vmatpush2.bf16.msra.mxu0 0
        %4770 = vmatprep.mubr.bf16.mxu0 0
        %4771 = vmatmul.mubr.bf16.gmra.mxu0 %v4688
        %v4772 = vpop.f32.mrf.mxu0
        %v4773 = vadd.f32 0.0, %v4772
        %v4774 = vpop.f32.mrf.mxu0
        %v4775 = vpop.f32.mrf.mxu0
        %v4776 = vpop.f32.mrf.mxu0
        %4777 = vdwg.mxu0
        %v4778 = vld [vmem:[%s4666] sm:$0xf]
        %v4779 = vld [vmem:[%s4666 + $0x4] sm:$0xf]
        %v4780 = vld [vmem:[%s4666 + $0x8] sm:$0xf]
        %v4781 = vld [vmem:[%s4666 + $0xc] sm:$0xf]
        %v4782 = vld [vmem:[%s4666 + $0x10] sm:$0xf]
        %v4783 = vld [vmem:[%s4666 + $0x14] sm:$0xf]
        %v4784 = vld [vmem:[%s4666 + $0x18] sm:$0xf]
        %v4785 = vld [vmem:[%s4666 + $0x1c] sm:$0xf]
        %v4786 = vld [vmem:[%s4666 + $0x20] sm:$0xf]
        %v4787 = vld [vmem:[%s4666 + $0x24] sm:$0xf]
        %v4788 = vld [vmem:[%s4666 + $0x28] sm:$0xf]
        %v4789 = vld [vmem:[%s4666 + $0x2c] sm:$0xf]
        %v4790 = vld [vmem:[%s4666 + $0x30] sm:$0xf]
        %v4791 = vld [vmem:[%s4666 + $0x34] sm:$0xf]
        %v4792 = vld [vmem:[%s4666 + $0x38] sm:$0xf]
        %v4793 = vld [vmem:[%s4666 + $0x3c] sm:$0xf]
        %v4810 = vunpack.c.l.b16 %v4778
        %v4811 = vunpack.c.l.b16 %v4779
        %v4812 = vunpack.c.l.b16 %v4780
        %v4813 = vunpack.c.l.b16 %v4781
        %v4814 = vunpack.c.l.b16 %v4782
        %v4815 = vunpack.c.l.b16 %v4783
        %v4816 = vunpack.c.l.b16 %v4784
        %v4817 = vunpack.c.l.b16 %v4785
        %v4818 = vunpack.c.l.b16 %v4786
        %v4819 = vunpack.c.l.b16 %v4787
        %v4820 = vunpack.c.l.b16 %v4788
        %v4821 = vunpack.c.l.b16 %v4789
        %v4822 = vunpack.c.l.b16 %v4790
        %v4823 = vunpack.c.l.b16 %v4791
        %v4824 = vunpack.c.l.b16 %v4792
        %v4825 = vunpack.c.l.b16 %v4793
        %v4826 = vpack.c.b16 %v4811, %v4810
        %v4827 = vpack.c.b16 %v4813, %v4812
        %v4828 = vpack.c.b16 %v4815, %v4814
        %v4829 = vpack.c.b16 %v4817, %v4816
        %v4830 = vpack.c.b16 %v4819, %v4818
        %v4831 = vpack.c.b16 %v4821, %v4820
        %v4832 = vpack.c.b16 %v4823, %v4822
        %v4833 = vpack.c.b16 %v4825, %v4824
        %4842 = vmatprep.subr.bf16.mxu0 0
        %4843 = vmatpush1.bf16.msra.mxu0 %v4833
        %4844 = vmatprep.subr.bf16.mxu0 0
        %4845 = vmatpush1.bf16.msra.mxu0 %v4832
        %4846 = vmatprep.subr.bf16.mxu0 0
        %4847 = vmatpush1.bf16.msra.mxu0 %v4831
        %4848 = vmatprep.subr.bf16.mxu0 0
        %4849 = vmatpush1.bf16.msra.mxu0 %v4830
        %4850 = vmatprep.subr.bf16.mxu0 0
        %4851 = vmatpush1.bf16.msra.mxu0 %v4829
        %4852 = vmatprep.subr.bf16.mxu0 0
        %4853 = vmatpush1.bf16.msra.mxu0 %v4828
        %4854 = vmatprep.subr.bf16.mxu0 0
        %4855 = vmatpush1.bf16.msra.mxu0 %v4827
        %4856 = vmatprep.subr.bf16.mxu0 0
        %4857 = vmatpush1.bf16.msra.mxu0 %v4826
        %4858 = vmatprep.subr.bf16.mxu0 0
        %4859 = vmatpush2.bf16.msra.mxu0 0
        %4860 = vmatprep.subr.bf16.mxu0 0
        %4861 = vmatpush2.bf16.msra.mxu0 0
        %4862 = vmatprep.subr.bf16.mxu0 0
        %4863 = vmatpush2.bf16.msra.mxu0 0
        %4864 = vmatprep.subr.bf16.mxu0 0
        %4865 = vmatpush2.bf16.msra.mxu0 0
        %4866 = vmatprep.subr.bf16.mxu0 0
        %4867 = vmatpush2.bf16.msra.mxu0 0
        %4868 = vmatprep.subr.bf16.mxu0 0
        %4869 = vmatpush2.bf16.msra.mxu0 0
        %4870 = vmatprep.subr.bf16.mxu0 0
        %4871 = vmatpush2.bf16.msra.mxu0 0
        %4872 = vmatprep.subr.bf16.mxu0 0
        %4873 = vmatpush2.bf16.msra.mxu0 0
        %4874 = vmatprep.mubr.bf16.mxu0 0
        %4875 = vmatmul.mubr.bf16.gmra.mxu0 %v3906
        %v4876 = vpop.f32.mrf.mxu0
        %v4877 = vadd.f32 %v4540, %v4876
        %v4878 = vpop.f32.mrf.mxu0
        %v4879 = vpop.f32.mrf.mxu0
        %v4880 = vadd.f32 %v4543, %v4879
        %v4881 = vpop.f32.mrf.mxu0
        %4882 = vmatprep.mubr.bf16.mxu0 0
        %4883 = vmatmul.mubr.bf16.gmra.mxu0 %v3907
        %v4884 = vpop.f32.mrf.mxu0
        %v4885 = vadd.f32 %v4548, %v4884
        %v4886 = vpop.f32.mrf.mxu0
        %v4887 = vpop.f32.mrf.mxu0
        %v4888 = vadd.f32 %v4551, %v4887
        %v4889 = vpop.f32.mrf.mxu0
        %4890 = vmatprep.mubr.bf16.mxu0 0
        %4891 = vmatmul.mubr.bf16.gmra.mxu0 %v3908
        %v4892 = vpop.f32.mrf.mxu0
        %v4893 = vadd.f32 %v4556, %v4892
        %v4894 = vpop.f32.mrf.mxu0
        %v4895 = vpop.f32.mrf.mxu0
        %v4896 = vadd.f32 %v4559, %v4895
        %v4897 = vpop.f32.mrf.mxu0
        %4898 = vmatprep.mubr.bf16.mxu0 0
        %4899 = vmatmul.mubr.bf16.gmra.mxu0 %v3909
        %v4900 = vpop.f32.mrf.mxu0
        %v4901 = vadd.f32 %v4564, %v4900
        %v4902 = vpop.f32.mrf.mxu0
        %v4903 = vpop.f32.mrf.mxu0
        %v4904 = vadd.f32 %v4567, %v4903
        %v4905 = vpop.f32.mrf.mxu0
        %4906 = vmatprep.mubr.bf16.mxu0 0
        %4907 = vmatmul.mubr.bf16.gmra.mxu0 %v3910
        %v4908 = vpop.f32.mrf.mxu0
        %v4909 = vadd.f32 %v4572, %v4908
        %v4910 = vpop.f32.mrf.mxu0
        %v4911 = vpop.f32.mrf.mxu0
        %v4912 = vadd.f32 %v4575, %v4911
        %v4913 = vpop.f32.mrf.mxu0
        %4914 = vmatprep.mubr.bf16.mxu0 0
        %4915 = vmatmul.mubr.bf16.gmra.mxu0 %v3911
        %v4916 = vpop.f32.mrf.mxu0
        %v4917 = vadd.f32 %v4580, %v4916
        %v4918 = vpop.f32.mrf.mxu0
        %v4919 = vpop.f32.mrf.mxu0
        %v4920 = vadd.f32 %v4583, %v4919
        %v4921 = vpop.f32.mrf.mxu0
        %4922 = vmatprep.mubr.bf16.mxu0 0
        %4923 = vmatmul.mubr.bf16.gmra.mxu0 %v3912
        %v4924 = vpop.f32.mrf.mxu0
        %v4925 = vadd.f32 %v4588, %v4924
        %v4926 = vpop.f32.mrf.mxu0
        %v4927 = vpop.f32.mrf.mxu0
        %v4928 = vadd.f32 %v4591, %v4927
        %v4929 = vpop.f32.mrf.mxu0
        %4930 = vmatprep.mubr.bf16.mxu0 0
        %4931 = vmatmul.mubr.bf16.gmra.mxu0 %v3913
        %v4932 = vpop.f32.mrf.mxu0
        %v4933 = vadd.f32 %v4596, %v4932
        %v4934 = vpop.f32.mrf.mxu0
        %v4935 = vpop.f32.mrf.mxu0
        %v4936 = vadd.f32 %v4599, %v4935
        %v4937 = vpop.f32.mrf.mxu0
        %4938 = vmatprep.mubr.bf16.mxu0 0
        %4939 = vmatmul.mubr.bf16.gmra.mxu0 %v3914
        %v4940 = vpop.f32.mrf.mxu0
        %v4941 = vadd.f32 %v4604, %v4940
        %v4942 = vpop.f32.mrf.mxu0
        %v4943 = vpop.f32.mrf.mxu0
        %v4944 = vadd.f32 %v4607, %v4943
        %v4945 = vpop.f32.mrf.mxu0
        %4946 = vmatprep.mubr.bf16.mxu0 0
        %4947 = vmatmul.mubr.bf16.gmra.mxu0 %v3915
        %v4948 = vpop.f32.mrf.mxu0
        %v4949 = vadd.f32 %v4612, %v4948
        %v4950 = vpop.f32.mrf.mxu0
        %v4951 = vpop.f32.mrf.mxu0
        %v4952 = vadd.f32 %v4615, %v4951
        %v4953 = vpop.f32.mrf.mxu0
        %4954 = vmatprep.mubr.bf16.mxu0 0
        %4955 = vmatmul.mubr.bf16.gmra.mxu0 %v3916
        %v4956 = vpop.f32.mrf.mxu0
        %v4957 = vadd.f32 %v4620, %v4956
        %v4958 = vpop.f32.mrf.mxu0
        %v4959 = vpop.f32.mrf.mxu0
        %v4960 = vadd.f32 %v4623, %v4959
        %v4961 = vpop.f32.mrf.mxu0
        %4962 = vmatprep.mubr.bf16.mxu0 0
        %4963 = vmatmul.mubr.bf16.gmra.mxu0 %v3917
        %v4964 = vpop.f32.mrf.mxu0
        %v4965 = vadd.f32 %v4628, %v4964
        %v4966 = vpop.f32.mrf.mxu0
        %v4967 = vpop.f32.mrf.mxu0
        %v4968 = vadd.f32 %v4631, %v4967
        %v4969 = vpop.f32.mrf.mxu0
        %4970 = vmatprep.mubr.bf16.mxu0 0
        %4971 = vmatmul.mubr.bf16.gmra.mxu0 %v3918
        %v4972 = vpop.f32.mrf.mxu0
        %v4973 = vadd.f32 %v4636, %v4972
        %v4974 = vpop.f32.mrf.mxu0
        %v4975 = vpop.f32.mrf.mxu0
        %v4976 = vadd.f32 %v4639, %v4975
        %v4977 = vpop.f32.mrf.mxu0
        %4978 = vmatprep.mubr.bf16.mxu0 0
        %4979 = vmatmul.mubr.bf16.gmra.mxu0 %v3919
        %v4980 = vpop.f32.mrf.mxu0
        %v4981 = vadd.f32 %v4644, %v4980
        %v4982 = vpop.f32.mrf.mxu0
        %v4983 = vpop.f32.mrf.mxu0
        %v4984 = vadd.f32 %v4647, %v4983
        %v4985 = vpop.f32.mrf.mxu0
        %4986 = vmatprep.mubr.bf16.mxu0 0
        %4987 = vmatmul.mubr.bf16.gmra.mxu0 %v3920
        %v4988 = vpop.f32.mrf.mxu0
        %v4989 = vadd.f32 %v4652, %v4988
        %v4990 = vpop.f32.mrf.mxu0
        %v4991 = vpop.f32.mrf.mxu0
        %v4992 = vadd.f32 %v4655, %v4991
        %v4993 = vpop.f32.mrf.mxu0
        %4994 = vmatprep.mubr.bf16.mxu0 0
        %4995 = vmatmul.mubr.bf16.gmra.mxu0 %v3921
        %v4996 = vpop.f32.mrf.mxu0
        %v4997 = vadd.f32 %v4660, %v4996
        %v4998 = vpop.f32.mrf.mxu0
        %v4999 = vpop.f32.mrf.mxu0
        %v5000 = vadd.f32 %v4663, %v4999
        %v5001 = vpop.f32.mrf.mxu0
        %5002 = vdwg.mxu0
        %v5005 = vunpack.c.l.s4 1966171168
        %v5006 = vunpack.c.0.s8 %v5005
        %v5007 = vlaneseq
        %v5008 = vshrl.u32 %v5007, 7
        %v5009 = vsub.s32 %v5006, %v5008
        %v5010 = vrot.slane %v4773, %v5009
        %v5011 = vcombine.high %v5010, %v5010
        %v5013 = vunpack.c.l.s4 1966171168
        %v5014 = vunpack.c.0.s8 %v5013
        %v5015 = vlaneseq
        %v5016 = vshrl.u32 %v5015, 7
        %v5017 = vsub.s32 %v5014, %v5016
        %v5018 = vrot.slane %v5010, %v5017
        %v5020 = vunpack.c.l.s4 1966171168
        %v5021 = vunpack.c.0.s8 %v5020
        %v5022 = vlaneseq
        %v5023 = vshrl.u32 %v5022, 7
        %v5024 = vsub.s32 %v5021, %v5023
        %v5025 = vrot.slane %v5011, %v5024
        %v5026 = vlaneseq
        %v5027 = vshrl.u32 %v5026, 7
        %v5028 = vsub.s32 0, %v5027
        %v5029 = vrot.slane %v5018, %v5028
        %v5030 = vlaneseq
        %v5031 = vshrl.u32 %v5030, 7
        %v5032 = vsub.s32 0, %v5031
        %v5033 = vrot.slane %v5025, %v5032
        %v5036 = vadd.f32 %v4877, %v5029
        %v5037 = vadd.f32 %v4880, %v5029
        %v5038 = vadd.f32 %v4885, %v5029
        %v5039 = vadd.f32 %v4888, %v5029
        %v5040 = vadd.f32 %v4893, %v5029
        %v5041 = vadd.f32 %v4896, %v5029
        %v5042 = vadd.f32 %v4901, %v5029
        %v5043 = vadd.f32 %v4904, %v5029
        %v5044 = vadd.f32 %v4909, %v5029
        %v5045 = vadd.f32 %v4912, %v5029
        %v5046 = vadd.f32 %v4917, %v5029
        %v5047 = vadd.f32 %v4920, %v5029
        %v5048 = vadd.f32 %v4925, %v5029
        %v5049 = vadd.f32 %v4928, %v5029
        %v5050 = vadd.f32 %v4933, %v5029
        %v5051 = vadd.f32 %v4936, %v5029
        %v5052 = vadd.f32 %v4941, %v5033
        %v5053 = vadd.f32 %v4944, %v5033
        %v5054 = vadd.f32 %v4949, %v5033
        %v5055 = vadd.f32 %v4952, %v5033
        %v5056 = vadd.f32 %v4957, %v5033
        %v5057 = vadd.f32 %v4960, %v5033
        %v5058 = vadd.f32 %v4965, %v5033
        %v5059 = vadd.f32 %v4968, %v5033
        %v5060 = vadd.f32 %v4973, %v5033
        %v5061 = vadd.f32 %v4976, %v5033
        %v5062 = vadd.f32 %v4981, %v5033
        %v5063 = vadd.f32 %v4984, %v5033
        %v5064 = vadd.f32 %v4989, %v5033
        %v5065 = vadd.f32 %v4992, %v5033
        %v5066 = vadd.f32 %v4997, %v5033
        %v5067 = vadd.f32 %v5000, %v5033
        %v5068 = vpack.c.bf16 %v5037, %v5036
        %v5069 = vpack.c.bf16 %v5039, %v5038
        %v5070 = vpack.c.bf16 %v5041, %v5040
        %v5071 = vpack.c.bf16 %v5043, %v5042
        %v5072 = vpack.c.bf16 %v5045, %v5044
        %v5073 = vpack.c.bf16 %v5047, %v5046
        %v5074 = vpack.c.bf16 %v5049, %v5048
        %v5075 = vpack.c.bf16 %v5051, %v5050
        %v5076 = vpack.c.bf16 %v5053, %v5052
        %v5077 = vpack.c.bf16 %v5055, %v5054
        %v5078 = vpack.c.bf16 %v5057, %v5056
        %v5079 = vpack.c.bf16 %v5059, %v5058
        %v5080 = vpack.c.bf16 %v5061, %v5060
        %v5081 = vpack.c.bf16 %v5063, %v5062
        %v5082 = vpack.c.bf16 %v5065, %v5064
        %v5083 = vpack.c.bf16 %v5067, %v5066
        %v5084 = vmax.bf16 %v5068, 0
        %v5085 = vmax.bf16 %v5069, 0
        %v5086 = vmax.bf16 %v5070, 0
        %v5087 = vmax.bf16 %v5071, 0
        %v5088 = vmax.bf16 %v5072, 0
        %v5089 = vmax.bf16 %v5073, 0
        %v5090 = vmax.bf16 %v5074, 0
        %v5091 = vmax.bf16 %v5075, 0
        %v5092 = vmax.bf16 %v5076, 0
        %v5093 = vmax.bf16 %v5077, 0
        %v5094 = vmax.bf16 %v5078, 0
        %v5095 = vmax.bf16 %v5079, 0
        %v5096 = vmax.bf16 %v5080, 0
        %v5097 = vmax.bf16 %v5081, 0
        %v5098 = vmax.bf16 %v5082, 0
        %v5099 = vmax.bf16 %v5083, 0
        %v5100 = vmax.bf16 %v5068, %v5070
        %v5101 = vmax.bf16 %v5069, %v5071
        %v5102 = vmax.bf16 %v5100, %v5072
        %v5103 = vmax.bf16 %v5101, %v5073
        %v5104 = vmax.bf16 %v5102, %v5074
        %v5105 = vmax.bf16 %v5103, %v5075
        %v5106 = vmax.bf16 %v5104, %v5105
        %v5107 = vunpack.i.l.bf16 %v5106
        %v5108 = vunpack.i.h.bf16 %v5106
        %v5109 = vmax.f32 %v5107, %v5108
        %v5110 = vrot.slane %v5109, 4
        %v5111 = vmax.f32 %v5109, %v5110
        %v5112 = vrot.slane %v5111, 2
        %v5113 = vmax.f32 %v5111, %v5112
        %v5114 = vrot.slane %v5113, 1
        %v5115 = vmax.f32 %v5113, %v5114
        %v5116 = vpack.i.bf16 %v5115, %v5115
        %v5117 = vmax.bf16 %v5076, %v5078
        %v5118 = vmax.bf16 %v5077, %v5079
        %v5119 = vmax.bf16 %v5117, %v5080
        %v5120 = vmax.bf16 %v5118, %v5081
        %v5121 = vmax.bf16 %v5119, %v5082
        %v5122 = vmax.bf16 %v5120, %v5083
        %v5123 = vmax.bf16 %v5121, %v5122
        %v5124 = vunpack.i.l.bf16 %v5123
        %v5125 = vunpack.i.h.bf16 %v5123
        %v5126 = vmax.f32 %v5124, %v5125
        %v5127 = vrot.slane %v5126, 4
        %v5128 = vmax.f32 %v5126, %v5127
        %v5129 = vrot.slane %v5128, 2
        %v5130 = vmax.f32 %v5128, %v5129
        %v5131 = vrot.slane %v5130, 1
        %v5132 = vmax.f32 %v5130, %v5131
        %v5133 = vpack.i.bf16 %v5132, %v5132
        %v5134 = vmax.bf16 %v5116, 0
        %v5135 = vmax.bf16 %v5133, 0
        %s5136 = scalar_lea.vmem [#allocation5], 512
        %v5137 = vld [vmem:[%s5136 + $0x40] sm:$0xf]
        %v5138 = vld [vmem:[%s5136 + $0x44] sm:$0xf]
        %v5139 = vld [vmem:[%s5136 + $0x48] sm:$0xf]
        %v5140 = vld [vmem:[%s5136 + $0x4c] sm:$0xf]
        %v5141 = vld [vmem:[%s5136 + $0x50] sm:$0xf]
        %v5142 = vld [vmem:[%s5136 + $0x54] sm:$0xf]
        %v5143 = vld [vmem:[%s5136 + $0x58] sm:$0xf]
        %v5144 = vld [vmem:[%s5136 + $0x5c] sm:$0xf]
        %v5145 = vld [vmem:[%s5136 + $0x60] sm:$0xf]
        %v5146 = vld [vmem:[%s5136 + $0x64] sm:$0xf]
        %v5147 = vld [vmem:[%s5136 + $0x68] sm:$0xf]
        %v5148 = vld [vmem:[%s5136 + $0x6c] sm:$0xf]
        %v5149 = vld [vmem:[%s5136 + $0x70] sm:$0xf]
        %v5150 = vld [vmem:[%s5136 + $0x74] sm:$0xf]
        %v5151 = vld [vmem:[%s5136 + $0x78] sm:$0xf]
        %v5152 = vld [vmem:[%s5136 + $0x7c] sm:$0xf]
        %s5153 = scalar_lea.vmem [#allocation7], 4
        %v5154 = vld [vmem:[%s5153] sm:$0x1]
        %v5156 = vlaneseq
        %v5157 = vshrl.u32 %v5156, 7
        %v5158 = vsub.s32 0, %v5157
        %v5159 = vrot.slane %v5154, %v5158
        %v5163 = vunpack.c.l.b16 %v5134
        %v5164 = vunpack.c.l.b16 %v5135
        %v5165 = vsel %vm1678, %v5164, %v5163
        %v5166 = vpack.c.b16 %v5165, %v5165
        %v5184 = vunpack.c.l.b16 %v5137
        %v5185 = vunpack.c.l.b16 %v5138
        %v5186 = vunpack.c.l.b16 %v5139
        %v5187 = vunpack.c.l.b16 %v5140
        %v5188 = vunpack.c.l.b16 %v5141
        %v5189 = vunpack.c.l.b16 %v5142
        %v5190 = vunpack.c.l.b16 %v5143
        %v5191 = vunpack.c.l.b16 %v5144
        %v5192 = vunpack.c.l.b16 %v5145
        %v5193 = vunpack.c.l.b16 %v5146
        %v5194 = vunpack.c.l.b16 %v5147
        %v5195 = vunpack.c.l.b16 %v5148
        %v5196 = vunpack.c.l.b16 %v5149
        %v5197 = vunpack.c.l.b16 %v5150
        %v5198 = vunpack.c.l.b16 %v5151
        %v5199 = vunpack.c.l.b16 %v5152
        %v5200 = vpack.c.b16 %v5185, %v5184
        %v5201 = vpack.c.b16 %v5187, %v5186
        %v5202 = vpack.c.b16 %v5189, %v5188
        %v5203 = vpack.c.b16 %v5191, %v5190
        %v5204 = vpack.c.b16 %v5193, %v5192
        %v5205 = vpack.c.b16 %v5195, %v5194
        %v5206 = vpack.c.b16 %v5197, %v5196
        %v5207 = vpack.c.b16 %v5199, %v5198
        %5216 = vmatprep.subr.bf16.mxu0 0
        %5217 = vmatpush1.bf16.msra.mxu0 %v5207
        %5218 = vmatprep.subr.bf16.mxu0 0
        %5219 = vmatpush1.bf16.msra.mxu0 %v5206
        %5220 = vmatprep.subr.bf16.mxu0 0
        %5221 = vmatpush1.bf16.msra.mxu0 %v5205
        %5222 = vmatprep.subr.bf16.mxu0 0
        %5223 = vmatpush1.bf16.msra.mxu0 %v5204
        %5224 = vmatprep.subr.bf16.mxu0 0
        %5225 = vmatpush1.bf16.msra.mxu0 %v5203
        %5226 = vmatprep.subr.bf16.mxu0 0
        %5227 = vmatpush1.bf16.msra.mxu0 %v5202
        %5228 = vmatprep.subr.bf16.mxu0 0
        %5229 = vmatpush1.bf16.msra.mxu0 %v5201
        %5230 = vmatprep.subr.bf16.mxu0 0
        %5231 = vmatpush1.bf16.msra.mxu0 %v5200
        %5232 = vmatprep.subr.bf16.mxu0 0
        %5233 = vmatpush2.bf16.msra.mxu0 0
        %5234 = vmatprep.subr.bf16.mxu0 0
        %5235 = vmatpush2.bf16.msra.mxu0 0
        %5236 = vmatprep.subr.bf16.mxu0 0
        %5237 = vmatpush2.bf16.msra.mxu0 0
        %5238 = vmatprep.subr.bf16.mxu0 0
        %5239 = vmatpush2.bf16.msra.mxu0 0
        %5240 = vmatprep.subr.bf16.mxu0 0
        %5241 = vmatpush2.bf16.msra.mxu0 0
        %5242 = vmatprep.subr.bf16.mxu0 0
        %5243 = vmatpush2.bf16.msra.mxu0 0
        %5244 = vmatprep.subr.bf16.mxu0 0
        %5245 = vmatpush2.bf16.msra.mxu0 0
        %5246 = vmatprep.subr.bf16.mxu0 0
        %5247 = vmatpush2.bf16.msra.mxu0 0
        %5248 = vmatprep.mubr.bf16.mxu0 0
        %5249 = vmatmul.mubr.bf16.gmra.mxu0 %v5166
        %v5250 = vpop.f32.mrf.mxu0
        %v5251 = vadd.f32 %v5159, %v5250
        %v5252 = vpop.f32.mrf.mxu0
        %v5253 = vpop.f32.mrf.mxu0
        %v5254 = vpop.f32.mrf.mxu0
        %5255 = vdwg.mxu0
        %v5256 = vld [vmem:[%s5136] sm:$0xf]
        %v5257 = vld [vmem:[%s5136 + $0x4] sm:$0xf]
        %v5258 = vld [vmem:[%s5136 + $0x8] sm:$0xf]
        %v5259 = vld [vmem:[%s5136 + $0xc] sm:$0xf]
        %v5260 = vld [vmem:[%s5136 + $0x10] sm:$0xf]
        %v5261 = vld [vmem:[%s5136 + $0x14] sm:$0xf]
        %v5262 = vld [vmem:[%s5136 + $0x18] sm:$0xf]
        %v5263 = vld [vmem:[%s5136 + $0x1c] sm:$0xf]
        %v5264 = vld [vmem:[%s5136 + $0x20] sm:$0xf]
        %v5265 = vld [vmem:[%s5136 + $0x24] sm:$0xf]
        %v5266 = vld [vmem:[%s5136 + $0x28] sm:$0xf]
        %v5267 = vld [vmem:[%s5136 + $0x2c] sm:$0xf]
        %v5268 = vld [vmem:[%s5136 + $0x30] sm:$0xf]
        %v5269 = vld [vmem:[%s5136 + $0x34] sm:$0xf]
        %v5270 = vld [vmem:[%s5136 + $0x38] sm:$0xf]
        %v5271 = vld [vmem:[%s5136 + $0x3c] sm:$0xf]
        %v5288 = vunpack.c.l.b16 %v5256
        %v5289 = vunpack.c.l.b16 %v5257
        %v5290 = vunpack.c.l.b16 %v5258
        %v5291 = vunpack.c.l.b16 %v5259
        %v5292 = vunpack.c.l.b16 %v5260
        %v5293 = vunpack.c.l.b16 %v5261
        %v5294 = vunpack.c.l.b16 %v5262
        %v5295 = vunpack.c.l.b16 %v5263
        %v5296 = vunpack.c.l.b16 %v5264
        %v5297 = vunpack.c.l.b16 %v5265
        %v5298 = vunpack.c.l.b16 %v5266
        %v5299 = vunpack.c.l.b16 %v5267
        %v5300 = vunpack.c.l.b16 %v5268
        %v5301 = vunpack.c.l.b16 %v5269
        %v5302 = vunpack.c.l.b16 %v5270
        %v5303 = vunpack.c.l.b16 %v5271
        %v5304 = vpack.c.b16 %v5289, %v5288
        %v5305 = vpack.c.b16 %v5291, %v5290
        %v5306 = vpack.c.b16 %v5293, %v5292
        %v5307 = vpack.c.b16 %v5295, %v5294
        %v5308 = vpack.c.b16 %v5297, %v5296
        %v5309 = vpack.c.b16 %v5299, %v5298
        %v5310 = vpack.c.b16 %v5301, %v5300
        %v5311 = vpack.c.b16 %v5303, %v5302
        %5320 = vmatprep.subr.bf16.mxu0 0
        %5321 = vmatpush1.bf16.msra.mxu0 %v5311
        %5322 = vmatprep.subr.bf16.mxu0 0
        %5323 = vmatpush1.bf16.msra.mxu0 %v5310
        %5324 = vmatprep.subr.bf16.mxu0 0
        %5325 = vmatpush1.bf16.msra.mxu0 %v5309
        %5326 = vmatprep.subr.bf16.mxu0 0
        %5327 = vmatpush1.bf16.msra.mxu0 %v5308
        %5328 = vmatprep.subr.bf16.mxu0 0
        %5329 = vmatpush1.bf16.msra.mxu0 %v5307
        %5330 = vmatprep.subr.bf16.mxu0 0
        %5331 = vmatpush1.bf16.msra.mxu0 %v5306
        %5332 = vmatprep.subr.bf16.mxu0 0
        %5333 = vmatpush1.bf16.msra.mxu0 %v5305
        %5334 = vmatprep.subr.bf16.mxu0 0
        %5335 = vmatpush1.bf16.msra.mxu0 %v5304
        %5336 = vmatprep.subr.bf16.mxu0 0
        %5337 = vmatpush2.bf16.msra.mxu0 0
        %5338 = vmatprep.subr.bf16.mxu0 0
        %5339 = vmatpush2.bf16.msra.mxu0 0
        %5340 = vmatprep.subr.bf16.mxu0 0
        %5341 = vmatpush2.bf16.msra.mxu0 0
        %5342 = vmatprep.subr.bf16.mxu0 0
        %5343 = vmatpush2.bf16.msra.mxu0 0
        %5344 = vmatprep.subr.bf16.mxu0 0
        %5345 = vmatpush2.bf16.msra.mxu0 0
        %5346 = vmatprep.subr.bf16.mxu0 0
        %5347 = vmatpush2.bf16.msra.mxu0 0
        %5348 = vmatprep.subr.bf16.mxu0 0
        %5349 = vmatpush2.bf16.msra.mxu0 0
        %5350 = vmatprep.subr.bf16.mxu0 0
        %5351 = vmatpush2.bf16.msra.mxu0 0
        %5352 = vmatprep.mubr.bf16.mxu0 0
        %5353 = vmatmul.mubr.bf16.gmra.mxu0 %v5084
        %v5354 = vpop.f32.mrf.mxu0
        %v5355 = vadd.f32 0.0, %v5354
        %v5356 = vpop.f32.mrf.mxu0
        %v5357 = vpop.f32.mrf.mxu0
        %v5358 = vadd.f32 0.0, %v5357
        %v5359 = vpop.f32.mrf.mxu0
        %5360 = vmatprep.mubr.bf16.mxu0 0
        %5361 = vmatmul.mubr.bf16.gmra.mxu0 %v5085
        %v5362 = vpop.f32.mrf.mxu0
        %v5363 = vadd.f32 0.0, %v5362
        %v5364 = vpop.f32.mrf.mxu0
        %v5365 = vpop.f32.mrf.mxu0
        %v5366 = vadd.f32 0.0, %v5365
        %v5367 = vpop.f32.mrf.mxu0
        %5368 = vmatprep.mubr.bf16.mxu0 0
        %5369 = vmatmul.mubr.bf16.gmra.mxu0 %v5086
        %v5370 = vpop.f32.mrf.mxu0
        %v5371 = vadd.f32 0.0, %v5370
        %v5372 = vpop.f32.mrf.mxu0
        %v5373 = vpop.f32.mrf.mxu0
        %v5374 = vadd.f32 0.0, %v5373
        %v5375 = vpop.f32.mrf.mxu0
        %5376 = vmatprep.mubr.bf16.mxu0 0
        %5377 = vmatmul.mubr.bf16.gmra.mxu0 %v5087
        %v5378 = vpop.f32.mrf.mxu0
        %v5379 = vadd.f32 0.0, %v5378
        %v5380 = vpop.f32.mrf.mxu0
        %v5381 = vpop.f32.mrf.mxu0
        %v5382 = vadd.f32 0.0, %v5381
        %v5383 = vpop.f32.mrf.mxu0
        %5384 = vmatprep.mubr.bf16.mxu0 0
        %5385 = vmatmul.mubr.bf16.gmra.mxu0 %v5088
        %v5386 = vpop.f32.mrf.mxu0
        %v5387 = vadd.f32 0.0, %v5386
        %v5388 = vpop.f32.mrf.mxu0
        %v5389 = vpop.f32.mrf.mxu0
        %v5390 = vadd.f32 0.0, %v5389
        %v5391 = vpop.f32.mrf.mxu0
        %5392 = vmatprep.mubr.bf16.mxu0 0
        %5393 = vmatmul.mubr.bf16.gmra.mxu0 %v5089
        %v5394 = vpop.f32.mrf.mxu0
        %v5395 = vadd.f32 0.0, %v5394
        %v5396 = vpop.f32.mrf.mxu0
        %v5397 = vpop.f32.mrf.mxu0
        %v5398 = vadd.f32 0.0, %v5397
        %v5399 = vpop.f32.mrf.mxu0
        %5400 = vmatprep.mubr.bf16.mxu0 0
        %5401 = vmatmul.mubr.bf16.gmra.mxu0 %v5090
        %v5402 = vpop.f32.mrf.mxu0
        %v5403 = vadd.f32 0.0, %v5402
        %v5404 = vpop.f32.mrf.mxu0
        %v5405 = vpop.f32.mrf.mxu0
        %v5406 = vadd.f32 0.0, %v5405
        %v5407 = vpop.f32.mrf.mxu0
        %5408 = vmatprep.mubr.bf16.mxu0 0
        %5409 = vmatmul.mubr.bf16.gmra.mxu0 %v5091
        %v5410 = vpop.f32.mrf.mxu0
        %v5411 = vadd.f32 0.0, %v5410
        %v5412 = vpop.f32.mrf.mxu0
        %v5413 = vpop.f32.mrf.mxu0
        %v5414 = vadd.f32 0.0, %v5413
        %v5415 = vpop.f32.mrf.mxu0
        %5416 = vmatprep.mubr.bf16.mxu0 0
        %5417 = vmatmul.mubr.bf16.gmra.mxu0 %v5092
        %v5418 = vpop.f32.mrf.mxu0
        %v5419 = vadd.f32 0.0, %v5418
        %v5420 = vpop.f32.mrf.mxu0
        %v5421 = vpop.f32.mrf.mxu0
        %v5422 = vadd.f32 0.0, %v5421
        %v5423 = vpop.f32.mrf.mxu0
        %5424 = vmatprep.mubr.bf16.mxu0 0
        %5425 = vmatmul.mubr.bf16.gmra.mxu0 %v5093
        %v5426 = vpop.f32.mrf.mxu0
        %v5427 = vadd.f32 0.0, %v5426
        %v5428 = vpop.f32.mrf.mxu0
        %v5429 = vpop.f32.mrf.mxu0
        %v5430 = vadd.f32 0.0, %v5429
        %v5431 = vpop.f32.mrf.mxu0
        %5432 = vmatprep.mubr.bf16.mxu0 0
        %5433 = vmatmul.mubr.bf16.gmra.mxu0 %v5094
        %v5434 = vpop.f32.mrf.mxu0
        %v5435 = vadd.f32 0.0, %v5434
        %v5436 = vpop.f32.mrf.mxu0
        %v5437 = vpop.f32.mrf.mxu0
        %v5438 = vadd.f32 0.0, %v5437
        %v5439 = vpop.f32.mrf.mxu0
        %5440 = vmatprep.mubr.bf16.mxu0 0
        %5441 = vmatmul.mubr.bf16.gmra.mxu0 %v5095
        %v5442 = vpop.f32.mrf.mxu0
        %v5443 = vadd.f32 0.0, %v5442
        %v5444 = vpop.f32.mrf.mxu0
        %v5445 = vpop.f32.mrf.mxu0
        %v5446 = vadd.f32 0.0, %v5445
        %v5447 = vpop.f32.mrf.mxu0
        %5448 = vmatprep.mubr.bf16.mxu0 0
        %5449 = vmatmul.mubr.bf16.gmra.mxu0 %v5096
        %v5450 = vpop.f32.mrf.mxu0
        %v5451 = vadd.f32 0.0, %v5450
        %v5452 = vpop.f32.mrf.mxu0
        %v5453 = vpop.f32.mrf.mxu0
        %v5454 = vadd.f32 0.0, %v5453
        %v5455 = vpop.f32.mrf.mxu0
        %5456 = vmatprep.mubr.bf16.mxu0 0
        %5457 = vmatmul.mubr.bf16.gmra.mxu0 %v5097
        %v5458 = vpop.f32.mrf.mxu0
        %v5459 = vadd.f32 0.0, %v5458
        %v5460 = vpop.f32.mrf.mxu0
        %v5461 = vpop.f32.mrf.mxu0
        %v5462 = vadd.f32 0.0, %v5461
        %v5463 = vpop.f32.mrf.mxu0
        %5464 = vmatprep.mubr.bf16.mxu0 0
        %5465 = vmatmul.mubr.bf16.gmra.mxu0 %v5098
        %v5466 = vpop.f32.mrf.mxu0
        %v5467 = vadd.f32 0.0, %v5466
        %v5468 = vpop.f32.mrf.mxu0
        %v5469 = vpop.f32.mrf.mxu0
        %v5470 = vadd.f32 0.0, %v5469
        %v5471 = vpop.f32.mrf.mxu0
        %5472 = vmatprep.mubr.bf16.mxu0 0
        %5473 = vmatmul.mubr.bf16.gmra.mxu0 %v5099
        %v5474 = vpop.f32.mrf.mxu0
        %v5475 = vadd.f32 0.0, %v5474
        %v5476 = vpop.f32.mrf.mxu0
        %v5477 = vpop.f32.mrf.mxu0
        %v5478 = vadd.f32 0.0, %v5477
        %v5479 = vpop.f32.mrf.mxu0
        %5480 = vdwg.mxu0
        %v5483 = vunpack.c.l.s4 1966171168
        %v5484 = vunpack.c.0.s8 %v5483
        %v5485 = vlaneseq
        %v5486 = vshrl.u32 %v5485, 7
        %v5487 = vsub.s32 %v5484, %v5486
        %v5488 = vrot.slane %v5251, %v5487
        %v5489 = vcombine.high %v5488, %v5488
        %v5491 = vunpack.c.l.s4 1966171168
        %v5492 = vunpack.c.0.s8 %v5491
        %v5493 = vlaneseq
        %v5494 = vshrl.u32 %v5493, 7
        %v5495 = vsub.s32 %v5492, %v5494
        %v5496 = vrot.slane %v5488, %v5495
        %v5498 = vunpack.c.l.s4 1966171168
        %v5499 = vunpack.c.0.s8 %v5498
        %v5500 = vlaneseq
        %v5501 = vshrl.u32 %v5500, 7
        %v5502 = vsub.s32 %v5499, %v5501
        %v5503 = vrot.slane %v5489, %v5502
        %v5504 = vlaneseq
        %v5505 = vshrl.u32 %v5504, 7
        %v5506 = vsub.s32 0, %v5505
        %v5507 = vrot.slane %v5496, %v5506
        %v5508 = vlaneseq
        %v5509 = vshrl.u32 %v5508, 7
        %v5510 = vsub.s32 0, %v5509
        %v5511 = vrot.slane %v5503, %v5510
        %v5514 = vadd.f32 %v5355, %v5507
        %v5515 = vadd.f32 %v5358, %v5507
        %v5516 = vadd.f32 %v5363, %v5507
        %v5517 = vadd.f32 %v5366, %v5507
        %v5518 = vadd.f32 %v5371, %v5507
        %v5519 = vadd.f32 %v5374, %v5507
        %v5520 = vadd.f32 %v5379, %v5507
        %v5521 = vadd.f32 %v5382, %v5507
        %v5522 = vadd.f32 %v5387, %v5507
        %v5523 = vadd.f32 %v5390, %v5507
        %v5524 = vadd.f32 %v5395, %v5507
        %v5525 = vadd.f32 %v5398, %v5507
        %v5526 = vadd.f32 %v5403, %v5507
        %v5527 = vadd.f32 %v5406, %v5507
        %v5528 = vadd.f32 %v5411, %v5507
        %v5529 = vadd.f32 %v5414, %v5507
        %v5530 = vadd.f32 %v5419, %v5511
        %v5531 = vadd.f32 %v5422, %v5511
        %v5532 = vadd.f32 %v5427, %v5511
        %v5533 = vadd.f32 %v5430, %v5511
        %v5534 = vadd.f32 %v5435, %v5511
        %v5535 = vadd.f32 %v5438, %v5511
        %v5536 = vadd.f32 %v5443, %v5511
        %v5537 = vadd.f32 %v5446, %v5511
        %v5538 = vadd.f32 %v5451, %v5511
        %v5539 = vadd.f32 %v5454, %v5511
        %v5540 = vadd.f32 %v5459, %v5511
        %v5541 = vadd.f32 %v5462, %v5511
        %v5542 = vadd.f32 %v5467, %v5511
        %v5543 = vadd.f32 %v5470, %v5511
        %v5544 = vadd.f32 %v5475, %v5511
        %v5545 = vadd.f32 %v5478, %v5511
        %v5546 = vmax.f32 %v5514, 0.0
        %v5547 = vmax.f32 %v5515, 0.0
        %v5548 = vmax.f32 %v5516, 0.0
        %v5549 = vmax.f32 %v5517, 0.0
        %v5550 = vmax.f32 %v5518, 0.0
        %v5551 = vmax.f32 %v5519, 0.0
        %v5552 = vmax.f32 %v5520, 0.0
        %v5553 = vmax.f32 %v5521, 0.0
        %v5554 = vmax.f32 %v5522, 0.0
        %v5555 = vmax.f32 %v5523, 0.0
        %v5556 = vmax.f32 %v5524, 0.0
        %v5557 = vmax.f32 %v5525, 0.0
        %v5558 = vmax.f32 %v5526, 0.0
        %v5559 = vmax.f32 %v5527, 0.0
        %v5560 = vmax.f32 %v5528, 0.0
        %v5561 = vmax.f32 %v5529, 0.0
        %v5562 = vmax.f32 %v5530, 0.0
        %v5563 = vmax.f32 %v5531, 0.0
        %v5564 = vmax.f32 %v5532, 0.0
        %v5565 = vmax.f32 %v5533, 0.0
        %v5566 = vmax.f32 %v5534, 0.0
        %v5567 = vmax.f32 %v5535, 0.0
        %v5568 = vmax.f32 %v5536, 0.0
        %v5569 = vmax.f32 %v5537, 0.0
        %v5570 = vmax.f32 %v5538, 0.0
        %v5571 = vmax.f32 %v5539, 0.0
        %v5572 = vmax.f32 %v5540, 0.0
        %v5573 = vmax.f32 %v5541, 0.0
        %v5574 = vmax.f32 %v5542, 0.0
        %v5575 = vmax.f32 %v5543, 0.0
        %v5576 = vmax.f32 %v5544, 0.0
        %v5577 = vmax.f32 %v5545, 0.0
        %v5578 = vpack.c.bf16 %v5547, %v5546
        %v5579 = vpack.c.bf16 %v5549, %v5548
        %v5580 = vpack.c.bf16 %v5551, %v5550
        %v5581 = vpack.c.bf16 %v5553, %v5552
        %v5582 = vpack.c.bf16 %v5555, %v5554
        %v5583 = vpack.c.bf16 %v5557, %v5556
        %v5584 = vpack.c.bf16 %v5559, %v5558
        %v5585 = vpack.c.bf16 %v5561, %v5560
        %v5586 = vpack.c.bf16 %v5563, %v5562
        %v5587 = vpack.c.bf16 %v5565, %v5564
        %v5588 = vpack.c.bf16 %v5567, %v5566
        %v5589 = vpack.c.bf16 %v5569, %v5568
        %v5590 = vpack.c.bf16 %v5571, %v5570
        %v5591 = vpack.c.bf16 %v5573, %v5572
        %v5592 = vpack.c.bf16 %v5575, %v5574
        %v5593 = vpack.c.bf16 %v5577, %v5576
        %s5594 = scalar_lea.vmem [#allocation8], 256
        %v5595 = vld [vmem:[%s5594] sm:$0xf]
        %v5596 = vld [vmem:[%s5594 + $0x4] sm:$0xf]
        %v5597 = vld [vmem:[%s5594 + $0x8] sm:$0xf]
        %v5598 = vld [vmem:[%s5594 + $0xc] sm:$0xf]
        %v5599 = vld [vmem:[%s5594 + $0x10] sm:$0xf]
        %v5600 = vld [vmem:[%s5594 + $0x14] sm:$0xf]
        %v5601 = vld [vmem:[%s5594 + $0x18] sm:$0xf]
        %v5602 = vld [vmem:[%s5594 + $0x1c] sm:$0xf]
        %v5603 = vld [vmem:[%s5594 + $0x20] sm:$0xf]
        %v5604 = vld [vmem:[%s5594 + $0x24] sm:$0xf]
        %v5605 = vld [vmem:[%s5594 + $0x28] sm:$0xf]
        %v5606 = vld [vmem:[%s5594 + $0x2c] sm:$0xf]
        %v5607 = vld [vmem:[%s5594 + $0x30] sm:$0xf]
        %v5608 = vld [vmem:[%s5594 + $0x34] sm:$0xf]
        %v5609 = vld [vmem:[%s5594 + $0x38] sm:$0xf]
        %v5610 = vld [vmem:[%s5594 + $0x3c] sm:$0xf]
        %s5611 = scalar_lea.vmem %s4, 4
        %v5612 = vld [vmem:[%s5611] sm:$0x1]
        %v5614 = vlaneseq
        %v5615 = vshrl.u32 %v5614, 7
        %v5616 = vsub.s32 0, %v5615
        %v5617 = vrot.slane %v5612, %v5616
        %v5635 = vunpack.c.l.b16 %v5595
        %v5636 = vunpack.c.l.b16 %v5596
        %v5637 = vunpack.c.l.b16 %v5597
        %v5638 = vunpack.c.l.b16 %v5598
        %v5639 = vunpack.c.l.b16 %v5599
        %v5640 = vunpack.c.l.b16 %v5600
        %v5641 = vunpack.c.l.b16 %v5601
        %v5642 = vunpack.c.l.b16 %v5602
        %v5643 = vunpack.c.l.b16 %v5603
        %v5644 = vunpack.c.l.b16 %v5604
        %v5645 = vunpack.c.l.b16 %v5605
        %v5646 = vunpack.c.l.b16 %v5606
        %v5647 = vunpack.c.l.b16 %v5607
        %v5648 = vunpack.c.l.b16 %v5608
        %v5649 = vunpack.c.l.b16 %v5609
        %v5650 = vunpack.c.l.b16 %v5610
        %v5651 = vpack.c.b16 %v5636, %v5635
        %v5652 = vpack.c.b16 %v5638, %v5637
        %v5653 = vpack.c.b16 %v5640, %v5639
        %v5654 = vpack.c.b16 %v5642, %v5641
        %v5655 = vpack.c.b16 %v5644, %v5643
        %v5656 = vpack.c.b16 %v5646, %v5645
        %v5657 = vpack.c.b16 %v5648, %v5647
        %v5658 = vpack.c.b16 %v5650, %v5649
        %5667 = vmatprep.subr.bf16.mxu0 0
        %5668 = vmatpush1.bf16.msra.mxu0 %v5658
        %5669 = vmatprep.subr.bf16.mxu0 0
        %5670 = vmatpush1.bf16.msra.mxu0 %v5657
        %5671 = vmatprep.subr.bf16.mxu0 0
        %5672 = vmatpush1.bf16.msra.mxu0 %v5656
        %5673 = vmatprep.subr.bf16.mxu0 0
        %5674 = vmatpush1.bf16.msra.mxu0 %v5655
        %5675 = vmatprep.subr.bf16.mxu0 0
        %5676 = vmatpush1.bf16.msra.mxu0 %v5654
        %5677 = vmatprep.subr.bf16.mxu0 0
        %5678 = vmatpush1.bf16.msra.mxu0 %v5653
        %5679 = vmatprep.subr.bf16.mxu0 0
        %5680 = vmatpush1.bf16.msra.mxu0 %v5652
        %5681 = vmatprep.subr.bf16.mxu0 0
        %5682 = vmatpush1.bf16.msra.mxu0 %v5651
        %5683 = vmatprep.subr.bf16.mxu0 0
        %5684 = vmatpush2.bf16.msra.mxu0 0
        %5685 = vmatprep.subr.bf16.mxu0 0
        %5686 = vmatpush2.bf16.msra.mxu0 0
        %5687 = vmatprep.subr.bf16.mxu0 0
        %5688 = vmatpush2.bf16.msra.mxu0 0
        %5689 = vmatprep.subr.bf16.mxu0 0
        %5690 = vmatpush2.bf16.msra.mxu0 0
        %5691 = vmatprep.subr.bf16.mxu0 0
        %5692 = vmatpush2.bf16.msra.mxu0 0
        %5693 = vmatprep.subr.bf16.mxu0 0
        %5694 = vmatpush2.bf16.msra.mxu0 0
        %5695 = vmatprep.subr.bf16.mxu0 0
        %5696 = vmatpush2.bf16.msra.mxu0 0
        %5697 = vmatprep.subr.bf16.mxu0 0
        %5698 = vmatpush2.bf16.msra.mxu0 0
        %5699 = vmatprep.mubr.bf16.mxu0 0
        %5700 = vmatmul.mubr.bf16.gmra.mxu0 %v5578
        %v5701 = vpop.f32.mrf.mxu0
        %v5702 = vadd.f32 %v5617, %v5701
        %v5703 = vpop.f32.mrf.mxu0
        %v5704 = vpop.f32.mrf.mxu0
        %v5705 = vadd.f32 %v5617, %v5704
        %v5706 = vpop.f32.mrf.mxu0
        %5707 = vmatprep.mubr.bf16.mxu0 0
        %5708 = vmatmul.mubr.bf16.gmra.mxu0 %v5579
        %v5709 = vpop.f32.mrf.mxu0
        %v5710 = vadd.f32 %v5617, %v5709
        %v5711 = vpop.f32.mrf.mxu0
        %v5712 = vpop.f32.mrf.mxu0
        %v5713 = vadd.f32 %v5617, %v5712
        %v5714 = vpop.f32.mrf.mxu0
        %5715 = vmatprep.mubr.bf16.mxu0 0
        %5716 = vmatmul.mubr.bf16.gmra.mxu0 %v5580
        %v5717 = vpop.f32.mrf.mxu0
        %v5718 = vadd.f32 %v5617, %v5717
        %v5719 = vpop.f32.mrf.mxu0
        %v5720 = vpop.f32.mrf.mxu0
        %v5721 = vadd.f32 %v5617, %v5720
        %v5722 = vpop.f32.mrf.mxu0
        %5723 = vmatprep.mubr.bf16.mxu0 0
        %5724 = vmatmul.mubr.bf16.gmra.mxu0 %v5581
        %v5725 = vpop.f32.mrf.mxu0
        %v5726 = vadd.f32 %v5617, %v5725
        %v5727 = vpop.f32.mrf.mxu0
        %v5728 = vpop.f32.mrf.mxu0
        %v5729 = vadd.f32 %v5617, %v5728
        %v5730 = vpop.f32.mrf.mxu0
        %5731 = vmatprep.mubr.bf16.mxu0 0
        %5732 = vmatmul.mubr.bf16.gmra.mxu0 %v5582
        %v5733 = vpop.f32.mrf.mxu0
        %v5734 = vadd.f32 %v5617, %v5733
        %v5735 = vpop.f32.mrf.mxu0
        %v5736 = vpop.f32.mrf.mxu0
        %v5737 = vadd.f32 %v5617, %v5736
        %v5738 = vpop.f32.mrf.mxu0
        %5739 = vmatprep.mubr.bf16.mxu0 0
        %5740 = vmatmul.mubr.bf16.gmra.mxu0 %v5583
        %v5741 = vpop.f32.mrf.mxu0
        %v5742 = vadd.f32 %v5617, %v5741
        %v5743 = vpop.f32.mrf.mxu0
        %v5744 = vpop.f32.mrf.mxu0
        %v5745 = vadd.f32 %v5617, %v5744
        %v5746 = vpop.f32.mrf.mxu0
        %5747 = vmatprep.mubr.bf16.mxu0 0
        %5748 = vmatmul.mubr.bf16.gmra.mxu0 %v5584
        %v5749 = vpop.f32.mrf.mxu0
        %v5750 = vadd.f32 %v5617, %v5749
        %v5751 = vpop.f32.mrf.mxu0
        %v5752 = vpop.f32.mrf.mxu0
        %v5753 = vadd.f32 %v5617, %v5752
        %v5754 = vpop.f32.mrf.mxu0
        %5755 = vmatprep.mubr.bf16.mxu0 0
        %5756 = vmatmul.mubr.bf16.gmra.mxu0 %v5585
        %v5757 = vpop.f32.mrf.mxu0
        %v5758 = vadd.f32 %v5617, %v5757
        %v5759 = vpop.f32.mrf.mxu0
        %v5760 = vpop.f32.mrf.mxu0
        %v5761 = vadd.f32 %v5617, %v5760
        %v5762 = vpop.f32.mrf.mxu0
        %5763 = vmatprep.mubr.bf16.mxu0 0
        %5764 = vmatmul.mubr.bf16.gmra.mxu0 %v5586
        %v5765 = vpop.f32.mrf.mxu0
        %v5766 = vadd.f32 %v5617, %v5765
        %v5767 = vpop.f32.mrf.mxu0
        %v5768 = vpop.f32.mrf.mxu0
        %v5769 = vadd.f32 %v5617, %v5768
        %v5770 = vpop.f32.mrf.mxu0
        %5771 = vmatprep.mubr.bf16.mxu0 0
        %5772 = vmatmul.mubr.bf16.gmra.mxu0 %v5587
        %v5773 = vpop.f32.mrf.mxu0
        %v5774 = vadd.f32 %v5617, %v5773
        %v5775 = vpop.f32.mrf.mxu0
        %v5776 = vpop.f32.mrf.mxu0
        %v5777 = vadd.f32 %v5617, %v5776
        %v5778 = vpop.f32.mrf.mxu0
        %5779 = vmatprep.mubr.bf16.mxu0 0
        %5780 = vmatmul.mubr.bf16.gmra.mxu0 %v5588
        %v5781 = vpop.f32.mrf.mxu0
        %v5782 = vadd.f32 %v5617, %v5781
        %v5783 = vpop.f32.mrf.mxu0
        %v5784 = vpop.f32.mrf.mxu0
        %v5785 = vadd.f32 %v5617, %v5784
        %v5786 = vpop.f32.mrf.mxu0
        %5787 = vmatprep.mubr.bf16.mxu0 0
        %5788 = vmatmul.mubr.bf16.gmra.mxu0 %v5589
        %v5789 = vpop.f32.mrf.mxu0
        %v5790 = vadd.f32 %v5617, %v5789
        %v5791 = vpop.f32.mrf.mxu0
        %v5792 = vpop.f32.mrf.mxu0
        %v5793 = vadd.f32 %v5617, %v5792
        %v5794 = vpop.f32.mrf.mxu0
        %5795 = vmatprep.mubr.bf16.mxu0 0
        %5796 = vmatmul.mubr.bf16.gmra.mxu0 %v5590
        %v5797 = vpop.f32.mrf.mxu0
        %v5798 = vadd.f32 %v5617, %v5797
        %v5799 = vpop.f32.mrf.mxu0
        %v5800 = vpop.f32.mrf.mxu0
        %v5801 = vadd.f32 %v5617, %v5800
        %v5802 = vpop.f32.mrf.mxu0
        %5803 = vmatprep.mubr.bf16.mxu0 0
        %5804 = vmatmul.mubr.bf16.gmra.mxu0 %v5591
        %v5805 = vpop.f32.mrf.mxu0
        %v5806 = vadd.f32 %v5617, %v5805
        %v5807 = vpop.f32.mrf.mxu0
        %v5808 = vpop.f32.mrf.mxu0
        %v5809 = vadd.f32 %v5617, %v5808
        %v5810 = vpop.f32.mrf.mxu0
        %5811 = vmatprep.mubr.bf16.mxu0 0
        %5812 = vmatmul.mubr.bf16.gmra.mxu0 %v5592
        %v5813 = vpop.f32.mrf.mxu0
        %v5814 = vadd.f32 %v5617, %v5813
        %v5815 = vpop.f32.mrf.mxu0
        %v5816 = vpop.f32.mrf.mxu0
        %v5817 = vadd.f32 %v5617, %v5816
        %v5818 = vpop.f32.mrf.mxu0
        %5819 = vmatprep.mubr.bf16.mxu0 0
        %5820 = vmatmul.mubr.bf16.gmra.mxu0 %v5593
        %v5821 = vpop.f32.mrf.mxu0
        %v5822 = vadd.f32 %v5617, %v5821
        %v5823 = vpop.f32.mrf.mxu0
        %v5824 = vpop.f32.mrf.mxu0
        %v5825 = vadd.f32 %v5617, %v5824
        %v5826 = vpop.f32.mrf.mxu0
        %5827 = vdwg.mxu0
        %s5828 = scalar_lea.vmem [#allocation10], 512
        %v5829 = vld [vmem:[%s5828 + $0x40] sm:$0xf]
        %v5830 = vld [vmem:[%s5828 + $0x44] sm:$0xf]
        %v5831 = vld [vmem:[%s5828 + $0x48] sm:$0xf]
        %v5832 = vld [vmem:[%s5828 + $0x4c] sm:$0xf]
        %v5833 = vld [vmem:[%s5828 + $0x50] sm:$0xf]
        %v5834 = vld [vmem:[%s5828 + $0x54] sm:$0xf]
        %v5835 = vld [vmem:[%s5828 + $0x58] sm:$0xf]
        %v5836 = vld [vmem:[%s5828 + $0x5c] sm:$0xf]
        %v5837 = vld [vmem:[%s5828 + $0x60] sm:$0xf]
        %v5838 = vld [vmem:[%s5828 + $0x64] sm:$0xf]
        %v5839 = vld [vmem:[%s5828 + $0x68] sm:$0xf]
        %v5840 = vld [vmem:[%s5828 + $0x6c] sm:$0xf]
        %v5841 = vld [vmem:[%s5828 + $0x70] sm:$0xf]
        %v5842 = vld [vmem:[%s5828 + $0x74] sm:$0xf]
        %v5843 = vld [vmem:[%s5828 + $0x78] sm:$0xf]
        %v5844 = vld [vmem:[%s5828 + $0x7c] sm:$0xf]
        %v5847 = vunpack.c.l.b16 %v5116
        %v5848 = vunpack.c.l.b16 %v5133
        %v5849 = vsel %vm1678, %v5848, %v5847
        %v5850 = vpack.c.b16 %v5849, %v5849
        %v5868 = vunpack.c.l.b16 %v5829
        %v5869 = vunpack.c.l.b16 %v5830
        %v5870 = vunpack.c.l.b16 %v5831
        %v5871 = vunpack.c.l.b16 %v5832
        %v5872 = vunpack.c.l.b16 %v5833
        %v5873 = vunpack.c.l.b16 %v5834
        %v5874 = vunpack.c.l.b16 %v5835
        %v5875 = vunpack.c.l.b16 %v5836
        %v5876 = vunpack.c.l.b16 %v5837
        %v5877 = vunpack.c.l.b16 %v5838
        %v5878 = vunpack.c.l.b16 %v5839
        %v5879 = vunpack.c.l.b16 %v5840
        %v5880 = vunpack.c.l.b16 %v5841
        %v5881 = vunpack.c.l.b16 %v5842
        %v5882 = vunpack.c.l.b16 %v5843
        %v5883 = vunpack.c.l.b16 %v5844
        %v5884 = vpack.c.b16 %v5869, %v5868
        %v5885 = vpack.c.b16 %v5871, %v5870
        %v5886 = vpack.c.b16 %v5873, %v5872
        %v5887 = vpack.c.b16 %v5875, %v5874
        %v5888 = vpack.c.b16 %v5877, %v5876
        %v5889 = vpack.c.b16 %v5879, %v5878
        %v5890 = vpack.c.b16 %v5881, %v5880
        %v5891 = vpack.c.b16 %v5883, %v5882
        %5900 = vmatprep.subr.bf16.mxu0 0
        %5901 = vmatpush1.bf16.msra.mxu0 %v5891
        %5902 = vmatprep.subr.bf16.mxu0 0
        %5903 = vmatpush1.bf16.msra.mxu0 %v5890
        %5904 = vmatprep.subr.bf16.mxu0 0
        %5905 = vmatpush1.bf16.msra.mxu0 %v5889
        %5906 = vmatprep.subr.bf16.mxu0 0
        %5907 = vmatpush1.bf16.msra.mxu0 %v5888
        %5908 = vmatprep.subr.bf16.mxu0 0
        %5909 = vmatpush1.bf16.msra.mxu0 %v5887
        %5910 = vmatprep.subr.bf16.mxu0 0
        %5911 = vmatpush1.bf16.msra.mxu0 %v5886
        %5912 = vmatprep.subr.bf16.mxu0 0
        %5913 = vmatpush1.bf16.msra.mxu0 %v5885
        %5914 = vmatprep.subr.bf16.mxu0 0
        %5915 = vmatpush1.bf16.msra.mxu0 %v5884
        %5916 = vmatprep.subr.bf16.mxu0 0
        %5917 = vmatpush2.bf16.msra.mxu0 0
        %5918 = vmatprep.subr.bf16.mxu0 0
        %5919 = vmatpush2.bf16.msra.mxu0 0
        %5920 = vmatprep.subr.bf16.mxu0 0
        %5921 = vmatpush2.bf16.msra.mxu0 0
        %5922 = vmatprep.subr.bf16.mxu0 0
        %5923 = vmatpush2.bf16.msra.mxu0 0
        %5924 = vmatprep.subr.bf16.mxu0 0
        %5925 = vmatpush2.bf16.msra.mxu0 0
        %5926 = vmatprep.subr.bf16.mxu0 0
        %5927 = vmatpush2.bf16.msra.mxu0 0
        %5928 = vmatprep.subr.bf16.mxu0 0
        %5929 = vmatpush2.bf16.msra.mxu0 0
        %5930 = vmatprep.subr.bf16.mxu0 0
        %5931 = vmatpush2.bf16.msra.mxu0 0
        %5932 = vmatprep.mubr.bf16.mxu0 0
        %5933 = vmatmul.mubr.bf16.gmra.mxu0 %v5850
        %v5934 = vpop.f32.mrf.mxu0
        %v5935 = vadd.f32 0.0, %v5934
        %v5936 = vpop.f32.mrf.mxu0
        %v5937 = vpop.f32.mrf.mxu0
        %v5938 = vpop.f32.mrf.mxu0
        %5939 = vdwg.mxu0
        %v5940 = vld [vmem:[%s5828] sm:$0xf]
        %v5941 = vld [vmem:[%s5828 + $0x4] sm:$0xf]
        %v5942 = vld [vmem:[%s5828 + $0x8] sm:$0xf]
        %v5943 = vld [vmem:[%s5828 + $0xc] sm:$0xf]
        %v5944 = vld [vmem:[%s5828 + $0x10] sm:$0xf]
        %v5945 = vld [vmem:[%s5828 + $0x14] sm:$0xf]
        %v5946 = vld [vmem:[%s5828 + $0x18] sm:$0xf]
        %v5947 = vld [vmem:[%s5828 + $0x1c] sm:$0xf]
        %v5948 = vld [vmem:[%s5828 + $0x20] sm:$0xf]
        %v5949 = vld [vmem:[%s5828 + $0x24] sm:$0xf]
        %v5950 = vld [vmem:[%s5828 + $0x28] sm:$0xf]
        %v5951 = vld [vmem:[%s5828 + $0x2c] sm:$0xf]
        %v5952 = vld [vmem:[%s5828 + $0x30] sm:$0xf]
        %v5953 = vld [vmem:[%s5828 + $0x34] sm:$0xf]
        %v5954 = vld [vmem:[%s5828 + $0x38] sm:$0xf]
        %v5955 = vld [vmem:[%s5828 + $0x3c] sm:$0xf]
        %v5972 = vunpack.c.l.b16 %v5940
        %v5973 = vunpack.c.l.b16 %v5941
        %v5974 = vunpack.c.l.b16 %v5942
        %v5975 = vunpack.c.l.b16 %v5943
        %v5976 = vunpack.c.l.b16 %v5944
        %v5977 = vunpack.c.l.b16 %v5945
        %v5978 = vunpack.c.l.b16 %v5946
        %v5979 = vunpack.c.l.b16 %v5947
        %v5980 = vunpack.c.l.b16 %v5948
        %v5981 = vunpack.c.l.b16 %v5949
        %v5982 = vunpack.c.l.b16 %v5950
        %v5983 = vunpack.c.l.b16 %v5951
        %v5984 = vunpack.c.l.b16 %v5952
        %v5985 = vunpack.c.l.b16 %v5953
        %v5986 = vunpack.c.l.b16 %v5954
        %v5987 = vunpack.c.l.b16 %v5955
        %v5988 = vpack.c.b16 %v5973, %v5972
        %v5989 = vpack.c.b16 %v5975, %v5974
        %v5990 = vpack.c.b16 %v5977, %v5976
        %v5991 = vpack.c.b16 %v5979, %v5978
        %v5992 = vpack.c.b16 %v5981, %v5980
        %v5993 = vpack.c.b16 %v5983, %v5982
        %v5994 = vpack.c.b16 %v5985, %v5984
        %v5995 = vpack.c.b16 %v5987, %v5986
        %6004 = vmatprep.subr.bf16.mxu0 0
        %6005 = vmatpush1.bf16.msra.mxu0 %v5995
        %6006 = vmatprep.subr.bf16.mxu0 0
        %6007 = vmatpush1.bf16.msra.mxu0 %v5994
        %6008 = vmatprep.subr.bf16.mxu0 0
        %6009 = vmatpush1.bf16.msra.mxu0 %v5993
        %6010 = vmatprep.subr.bf16.mxu0 0
        %6011 = vmatpush1.bf16.msra.mxu0 %v5992
        %6012 = vmatprep.subr.bf16.mxu0 0
        %6013 = vmatpush1.bf16.msra.mxu0 %v5991
        %6014 = vmatprep.subr.bf16.mxu0 0
        %6015 = vmatpush1.bf16.msra.mxu0 %v5990
        %6016 = vmatprep.subr.bf16.mxu0 0
        %6017 = vmatpush1.bf16.msra.mxu0 %v5989
        %6018 = vmatprep.subr.bf16.mxu0 0
        %6019 = vmatpush1.bf16.msra.mxu0 %v5988
        %6020 = vmatprep.subr.bf16.mxu0 0
        %6021 = vmatpush2.bf16.msra.mxu0 0
        %6022 = vmatprep.subr.bf16.mxu0 0
        %6023 = vmatpush2.bf16.msra.mxu0 0
        %6024 = vmatprep.subr.bf16.mxu0 0
        %6025 = vmatpush2.bf16.msra.mxu0 0
        %6026 = vmatprep.subr.bf16.mxu0 0
        %6027 = vmatpush2.bf16.msra.mxu0 0
        %6028 = vmatprep.subr.bf16.mxu0 0
        %6029 = vmatpush2.bf16.msra.mxu0 0
        %6030 = vmatprep.subr.bf16.mxu0 0
        %6031 = vmatpush2.bf16.msra.mxu0 0
        %6032 = vmatprep.subr.bf16.mxu0 0
        %6033 = vmatpush2.bf16.msra.mxu0 0
        %6034 = vmatprep.subr.bf16.mxu0 0
        %6035 = vmatpush2.bf16.msra.mxu0 0
        %6036 = vmatprep.mubr.bf16.mxu0 0
        %6037 = vmatmul.mubr.bf16.gmra.mxu0 %v5068
        %v6038 = vpop.f32.mrf.mxu0
        %v6039 = vadd.f32 %v5702, %v6038
        %v6040 = vpop.f32.mrf.mxu0
        %v6041 = vpop.f32.mrf.mxu0
        %v6042 = vadd.f32 %v5705, %v6041
        %v6043 = vpop.f32.mrf.mxu0
        %6044 = vmatprep.mubr.bf16.mxu0 0
        %6045 = vmatmul.mubr.bf16.gmra.mxu0 %v5069
        %v6046 = vpop.f32.mrf.mxu0
        %v6047 = vadd.f32 %v5710, %v6046
        %v6048 = vpop.f32.mrf.mxu0
        %v6049 = vpop.f32.mrf.mxu0
        %v6050 = vadd.f32 %v5713, %v6049
        %v6051 = vpop.f32.mrf.mxu0
        %6052 = vmatprep.mubr.bf16.mxu0 0
        %6053 = vmatmul.mubr.bf16.gmra.mxu0 %v5070
        %v6054 = vpop.f32.mrf.mxu0
        %v6055 = vadd.f32 %v5718, %v6054
        %v6056 = vpop.f32.mrf.mxu0
        %v6057 = vpop.f32.mrf.mxu0
        %v6058 = vadd.f32 %v5721, %v6057
        %v6059 = vpop.f32.mrf.mxu0
        %6060 = vmatprep.mubr.bf16.mxu0 0
        %6061 = vmatmul.mubr.bf16.gmra.mxu0 %v5071
        %v6062 = vpop.f32.mrf.mxu0
        %v6063 = vadd.f32 %v5726, %v6062
        %v6064 = vpop.f32.mrf.mxu0
        %v6065 = vpop.f32.mrf.mxu0
        %v6066 = vadd.f32 %v5729, %v6065
        %v6067 = vpop.f32.mrf.mxu0
        %6068 = vmatprep.mubr.bf16.mxu0 0
        %6069 = vmatmul.mubr.bf16.gmra.mxu0 %v5072
        %v6070 = vpop.f32.mrf.mxu0
        %v6071 = vadd.f32 %v5734, %v6070
        %v6072 = vpop.f32.mrf.mxu0
        %v6073 = vpop.f32.mrf.mxu0
        %v6074 = vadd.f32 %v5737, %v6073
        %v6075 = vpop.f32.mrf.mxu0
        %6076 = vmatprep.mubr.bf16.mxu0 0
        %6077 = vmatmul.mubr.bf16.gmra.mxu0 %v5073
        %v6078 = vpop.f32.mrf.mxu0
        %v6079 = vadd.f32 %v5742, %v6078
        %v6080 = vpop.f32.mrf.mxu0
        %v6081 = vpop.f32.mrf.mxu0
        %v6082 = vadd.f32 %v5745, %v6081
        %v6083 = vpop.f32.mrf.mxu0
        %6084 = vmatprep.mubr.bf16.mxu0 0
        %6085 = vmatmul.mubr.bf16.gmra.mxu0 %v5074
        %v6086 = vpop.f32.mrf.mxu0
        %v6087 = vadd.f32 %v5750, %v6086
        %v6088 = vpop.f32.mrf.mxu0
        %v6089 = vpop.f32.mrf.mxu0
        %v6090 = vadd.f32 %v5753, %v6089
        %v6091 = vpop.f32.mrf.mxu0
        %6092 = vmatprep.mubr.bf16.mxu0 0
        %6093 = vmatmul.mubr.bf16.gmra.mxu0 %v5075
        %v6094 = vpop.f32.mrf.mxu0
        %v6095 = vadd.f32 %v5758, %v6094
        %v6096 = vpop.f32.mrf.mxu0
        %v6097 = vpop.f32.mrf.mxu0
        %v6098 = vadd.f32 %v5761, %v6097
        %v6099 = vpop.f32.mrf.mxu0
        %6100 = vmatprep.mubr.bf16.mxu0 0
        %6101 = vmatmul.mubr.bf16.gmra.mxu0 %v5076
        %v6102 = vpop.f32.mrf.mxu0
        %v6103 = vadd.f32 %v5766, %v6102
        %v6104 = vpop.f32.mrf.mxu0
        %v6105 = vpop.f32.mrf.mxu0
        %v6106 = vadd.f32 %v5769, %v6105
        %v6107 = vpop.f32.mrf.mxu0
        %6108 = vmatprep.mubr.bf16.mxu0 0
        %6109 = vmatmul.mubr.bf16.gmra.mxu0 %v5077
        %v6110 = vpop.f32.mrf.mxu0
        %v6111 = vadd.f32 %v5774, %v6110
        %v6112 = vpop.f32.mrf.mxu0
        %v6113 = vpop.f32.mrf.mxu0
        %v6114 = vadd.f32 %v5777, %v6113
        %v6115 = vpop.f32.mrf.mxu0
        %6116 = vmatprep.mubr.bf16.mxu0 0
        %6117 = vmatmul.mubr.bf16.gmra.mxu0 %v5078
        %v6118 = vpop.f32.mrf.mxu0
        %v6119 = vadd.f32 %v5782, %v6118
        %v6120 = vpop.f32.mrf.mxu0
        %v6121 = vpop.f32.mrf.mxu0
        %v6122 = vadd.f32 %v5785, %v6121
        %v6123 = vpop.f32.mrf.mxu0
        %6124 = vmatprep.mubr.bf16.mxu0 0
        %6125 = vmatmul.mubr.bf16.gmra.mxu0 %v5079
        %v6126 = vpop.f32.mrf.mxu0
        %v6127 = vadd.f32 %v5790, %v6126
        %v6128 = vpop.f32.mrf.mxu0
        %v6129 = vpop.f32.mrf.mxu0
        %v6130 = vadd.f32 %v5793, %v6129
        %v6131 = vpop.f32.mrf.mxu0
        %6132 = vmatprep.mubr.bf16.mxu0 0
        %6133 = vmatmul.mubr.bf16.gmra.mxu0 %v5080
        %v6134 = vpop.f32.mrf.mxu0
        %v6135 = vadd.f32 %v5798, %v6134
        %v6136 = vpop.f32.mrf.mxu0
        %v6137 = vpop.f32.mrf.mxu0
        %v6138 = vadd.f32 %v5801, %v6137
        %v6139 = vpop.f32.mrf.mxu0
        %6140 = vmatprep.mubr.bf16.mxu0 0
        %6141 = vmatmul.mubr.bf16.gmra.mxu0 %v5081
        %v6142 = vpop.f32.mrf.mxu0
        %v6143 = vadd.f32 %v5806, %v6142
        %v6144 = vpop.f32.mrf.mxu0
        %v6145 = vpop.f32.mrf.mxu0
        %v6146 = vadd.f32 %v5809, %v6145
        %v6147 = vpop.f32.mrf.mxu0
        %6148 = vmatprep.mubr.bf16.mxu0 0
        %6149 = vmatmul.mubr.bf16.gmra.mxu0 %v5082
        %v6150 = vpop.f32.mrf.mxu0
        %v6151 = vadd.f32 %v5814, %v6150
        %v6152 = vpop.f32.mrf.mxu0
        %v6153 = vpop.f32.mrf.mxu0
        %v6154 = vadd.f32 %v5817, %v6153
        %v6155 = vpop.f32.mrf.mxu0
        %6156 = vmatprep.mubr.bf16.mxu0 0
        %6157 = vmatmul.mubr.bf16.gmra.mxu0 %v5083
        %v6158 = vpop.f32.mrf.mxu0
        %v6159 = vadd.f32 %v5822, %v6158
        %v6160 = vpop.f32.mrf.mxu0
        %v6161 = vpop.f32.mrf.mxu0
        %v6162 = vadd.f32 %v5825, %v6161
        %v6163 = vpop.f32.mrf.mxu0
        %6164 = vdwg.mxu0
        %v6167 = vunpack.c.l.s4 1966171168
        %v6168 = vunpack.c.0.s8 %v6167
        %v6169 = vlaneseq
        %v6170 = vshrl.u32 %v6169, 7
        %v6171 = vsub.s32 %v6168, %v6170
        %v6172 = vrot.slane %v5935, %v6171
        %v6173 = vcombine.high %v6172, %v6172
        %v6175 = vunpack.c.l.s4 1966171168
        %v6176 = vunpack.c.0.s8 %v6175
        %v6177 = vlaneseq
        %v6178 = vshrl.u32 %v6177, 7
        %v6179 = vsub.s32 %v6176, %v6178
        %v6180 = vrot.slane %v6172, %v6179
        %v6182 = vunpack.c.l.s4 1966171168
        %v6183 = vunpack.c.0.s8 %v6182
        %v6184 = vlaneseq
        %v6185 = vshrl.u32 %v6184, 7
        %v6186 = vsub.s32 %v6183, %v6185
        %v6187 = vrot.slane %v6173, %v6186
        %v6188 = vlaneseq
        %v6189 = vshrl.u32 %v6188, 7
        %v6190 = vsub.s32 0, %v6189
        %v6191 = vrot.slane %v6180, %v6190
        %v6192 = vlaneseq
        %v6193 = vshrl.u32 %v6192, 7
        %v6194 = vsub.s32 0, %v6193
        %v6195 = vrot.slane %v6187, %v6194
        %v6198 = vadd.f32 %v6039, %v6191
        %v6199 = vadd.f32 %v6042, %v6191
        %v6200 = vadd.f32 %v6047, %v6191
        %v6201 = vadd.f32 %v6050, %v6191
        %v6202 = vadd.f32 %v6055, %v6191
        %v6203 = vadd.f32 %v6058, %v6191
        %v6204 = vadd.f32 %v6063, %v6191
        %v6205 = vadd.f32 %v6066, %v6191
        %v6206 = vadd.f32 %v6071, %v6191
        %v6207 = vadd.f32 %v6074, %v6191
        %v6208 = vadd.f32 %v6079, %v6191
        %v6209 = vadd.f32 %v6082, %v6191
        %v6210 = vadd.f32 %v6087, %v6191
        %v6211 = vadd.f32 %v6090, %v6191
        %v6212 = vadd.f32 %v6095, %v6191
        %v6213 = vadd.f32 %v6098, %v6191
        %v6214 = vadd.f32 %v6103, %v6195
        %v6215 = vadd.f32 %v6106, %v6195
        %v6216 = vadd.f32 %v6111, %v6195
        %v6217 = vadd.f32 %v6114, %v6195
        %v6218 = vadd.f32 %v6119, %v6195
        %v6219 = vadd.f32 %v6122, %v6195
        %v6220 = vadd.f32 %v6127, %v6195
        %v6221 = vadd.f32 %v6130, %v6195
        %v6222 = vadd.f32 %v6135, %v6195
        %v6223 = vadd.f32 %v6138, %v6195
        %v6224 = vadd.f32 %v6143, %v6195
        %v6225 = vadd.f32 %v6146, %v6195
        %v6226 = vadd.f32 %v6151, %v6195
        %v6227 = vadd.f32 %v6154, %v6195
        %v6228 = vadd.f32 %v6159, %v6195
        %v6229 = vadd.f32 %v6162, %v6195
        %6230 = vst [vmem:[%s328] sm:$0xff] %v6198
        %6231 = vst [vmem:[%s328 + $0x8] sm:$0xff] %v6199
        %6232 = vst [vmem:[%s328 + $0x10] sm:$0xff] %v6200
        %6233 = vst [vmem:[%s328 + $0x18] sm:$0xff] %v6201
        %6234 = vst [vmem:[%s328 + $0x20] sm:$0xff] %v6202
        %6235 = vst [vmem:[%s328 + $0x28] sm:$0xff] %v6203
        %6236 = vst [vmem:[%s328 + $0x30] sm:$0xff] %v6204
        %6237 = vst [vmem:[%s328 + $0x38] sm:$0xff] %v6205
        %6238 = vst [vmem:[%s328 + $0x40] sm:$0xff] %v6206
        %6239 = vst [vmem:[%s328 + $0x48] sm:$0xff] %v6207
        %6240 = vst [vmem:[%s328 + $0x50] sm:$0xff] %v6208
        %6241 = vst [vmem:[%s328 + $0x58] sm:$0xff] %v6209
        %6242 = vst [vmem:[%s328 + $0x60] sm:$0xff] %v6210
        %6243 = vst [vmem:[%s328 + $0x68] sm:$0xff] %v6211
        %6244 = vst [vmem:[%s328 + $0x70] sm:$0xff] %v6212
        %6245 = vst [vmem:[%s328 + $0x78] sm:$0xff] %v6213
        %6246 = vst [vmem:[%s328 + $0x80] sm:$0xff] %v6214
        %6247 = vst [vmem:[%s328 + $0x88] sm:$0xff] %v6215
        %6248 = vst [vmem:[%s328 + $0x90] sm:$0xff] %v6216
        %6249 = vst [vmem:[%s328 + $0x98] sm:$0xff] %v6217
        %6250 = vst [vmem:[%s328 + $0xa0] sm:$0xff] %v6218
        %6251 = vst [vmem:[%s328 + $0xa8] sm:$0xff] %v6219
        %6252 = vst [vmem:[%s328 + $0xb0] sm:$0xff] %v6220
        %6253 = vst [vmem:[%s328 + $0xb8] sm:$0xff] %v6221
        %6254 = vst [vmem:[%s328 + $0xc0] sm:$0xff] %v6222
        %6255 = vst [vmem:[%s328 + $0xc8] sm:$0xff] %v6223
        %6256 = vst [vmem:[%s328 + $0xd0] sm:$0xff] %v6224
        %6257 = vst [vmem:[%s328 + $0xd8] sm:$0xff] %v6225
        %6258 = vst [vmem:[%s328 + $0xe0] sm:$0xff] %v6226
        %6259 = vst [vmem:[%s328 + $0xe8] sm:$0xff] %v6227
        %6260 = vst [vmem:[%s328 + $0xf0] sm:$0xff] %v6228
        %6261 = vst [vmem:[%s328 + $0xf8] sm:$0xff] %v6229
        %s6262 = sand.u32 %s164, 1
        %s6263 = scalar_lea.sflag [#allocation4], %s6262
        %s6264 = sand.u32 %s164, 1
        %s6265 = smul.addr %s6264, 256
        %s6266 = scalar_lea.vmem [#allocation11], %s6265
        // Predicated region
        $region65: #{tpu_custom_call.1} parent=43 // pred_check
          %p6267 = pneg %p174
        $region66: #{tpu_custom_call.1} parent=43 // pred_check_branch
          %6269 = sbr.rel (%p6267) target = $region68
        $region67: #{tpu_custom_call.1} parent=43 // pred_region
          %s6270 = smul.u32 2, %s25
          %s6272 = ssub.s32 4096, 4096
          %6273 = vsyncadd %s6263, %s6272
          %s6274 = smul.addr %s6270, 16
          %s6275 = smul.addr %s6274, 128
          %s6276 = scalar_lea.hbm %s6, %s6275
          %s6277 = sshll.u32 %s6266, 4
          %s6278 = int_to_ptr.vmem [resolvable:$true] %s6277
          %6283 = dma.vmem_to_hbm [thread:$0]  %s6278, 4096, %s6276, %s6263, 128, 128, 8
        $region68: #{tpu_custom_call.1} parent=43 // pred_fallthru
          _
      $region44: #{tpu_custom_call.1} parent=5 // pred_fallthru
        _
      %p6284 = scmp.le.s32.totalorder 2, %s20
      // Predicated region
      $region69: #{tpu_custom_call.1} parent=5 // pred_check
        %p6285 = pneg %p6284
      $region70: #{tpu_custom_call.1} parent=5 // pred_check_branch
        %6287 = sbr.rel (%p6285) target = $region72
      $region71: #{tpu_custom_call.1} parent=5 // pred_region
        %s6288 = ssub.s32 %s20, 2
        // Predicated region
        $region73: #{tpu_custom_call.1} parent=71 // pred_check
          %p6289 = pneg %p180
        $region74: #{tpu_custom_call.1} parent=71 // pred_check_branch
          %6291 = sbr.rel (%p6289) target = $region76
        $region75: #{tpu_custom_call.1} parent=71 // pred_region
          %s6292 = sand.u32 %s165, 1
          %s6293 = scalar_lea.sflag [#allocation4], %s6292
          %s6294 = sand.u32 %s165, 1
          %s6295 = smul.addr %s6294, 256
          %s6296 = scalar_lea.vmem [#allocation11], %s6295
          %6297 = dma.done %s6293, 4096
        $region76: #{tpu_custom_call.1} parent=71 // pred_fallthru
          _
      $region72: #{tpu_custom_call.1} parent=5 // pred_fallthru
        _
    $region6: #{tpu_custom_call.1} parent=1 // loop_footer
      %s24 = sadd.s32 1, %s20
    $region7: #{tpu_custom_call.1} parent=1 // loop_footer_branch
      %19 = sbr.rel target = $region3
    $region8: #{tpu_custom_call.1} parent=1 // loop_exit
      _
    %6298 = vsyncpa [#allocation3], 1
    %s6299 = scalar_lea.sflag [#allocation3], 1
    %6300 = vsyncpa %s6299, 1
    %6301 = vsyncpa [#allocation6], 1
    %6302 = vsyncpa [#allocation9], 1
    %6303 = vsyncpa [#allocation4], 1
    %s6304 = scalar_lea.sflag [#allocation4], 1
    %6305 = vsyncpa %s6304, 1

</llo_original>
